<compile_context>
chip_gen: v6e
topology: v6e:2x2x1
jax: 0.10.0
libtpu: 0.0.40
codegen_flags: <defaults>
</compile_context>

<pallas_src>
import jax
import jax.numpy as jnp
from jax import lax
from jax.experimental import pallas as pl
from jax.experimental.pallas import tpu as pltpu

# ----------------------------- problem sizes -----------------------------
B = 2                         # batch
N = 8                         # tokens per batch
DIM = 32                      # embedding dim
HEADS = 2
HEAD_DIM = DIM // HEADS       # torch: head_dim = dim // heads
NUM_SRC = 3                   # k/v sources c1, c2, c3 ; queries come from c4
SCALE = HEAD_DIM ** (-0.5)


# ------------------------------ Pallas kernel ----------------------------
def _attn_global2_kernel(c1_ref, c2_ref, c3_ref, c4_ref,
                         wq_ref, wk_ref, wv_ref, wo_ref, bout_ref,
                         o_ref):
    """Fused 3-branch multi-head cross attention.

    c*_ref   : (B*N, D)  token matrices with batch folded into rows.
    wq/wk/wv : (NUM_SRC*HEADS, D, HEAD_DIM) per-(source, head) projection slabs,
               softmax scale already folded into wq.
    wo_ref   : (NUM_SRC*HEADS, HEAD_DIM, D) slabs of Wout so that
               concat(out1,out2,out3) @ Wout == sum over slabs (no concatenate).
    bout_ref : (1, D) output-projection bias.
    o_ref    : (B*N, D).
    """
    c4 = c4_ref[...]
    srcs = (c1_ref[...], c2_ref[...], c3_ref[...])

    # Static per-batch accumulators (B is tiny and compile-time constant).
    acc = [jnp.zeros((N, DIM), jnp.float32) for _ in range(B)]

    for i in range(NUM_SRC):
        csrc = srcs[i]
        for h in range(HEADS):
            s = i * HEADS + h
            # Projections over all B*N rows at once (MXU); scale folded into wq.
            q = jnp.dot(c4, wq_ref[s], preferred_element_type=jnp.float32)
            k = jnp.dot(csrc, wk_ref[s], preferred_element_type=jnp.float32)
            v = jnp.dot(csrc, wv_ref[s], preferred_element_type=jnp.float32)
            wo = wo_ref[s]
            for b in range(B):
                rows = slice(b * N, (b + 1) * N)       # sublane-aligned slice
                qb, kb, vb = q[rows], k[rows], v[rows]
                # q @ k^T without transposing k: contract last dims of both.
                dots = lax.dot_general(
                    qb, kb, (((1,), (1,)), ((), ())),
                    preferred_element_type=jnp.float32)          # (N, N)
                p = jnp.exp(dots)                                 # stabilizer dropped
                p = p * pl.reciprocal(
                    jnp.sum(p, axis=-1, keepdims=True), approx=True)
                ob = jnp.dot(p, vb, preferred_element_type=jnp.float32)  # (N, HD)
                # Output projection slab accumulation replaces concat + big matmul.
                acc[b] = acc[b] + jnp.dot(ob, wo,
                                          preferred_element_type=jnp.float32)

    bout = bout_ref[...]
    for b in range(B):
        o_ref[pl.ds(b * N, N), :] = (acc[b] + bout).astype(o_ref.dtype)


# ------------------------------ wrapper -----------------------------------
def _pack_params(p):
    """Wrapper-side weight preparation (free at trace time):
       split every projection per (source, head), fold the softmax scale into Q,
       and split Wout into the matching (HEAD_DIM, D) row slabs."""
    wq_src = (p["wq1"], p["wq2"], p["wq3"])
    wk_src = (p["wk1"], p["wk2"], p["wk3"])
    wv_src = (p["wv1"], p["wv2"], p["wv3"])
    wq_slabs, wk_slabs, wv_slabs, wo_slabs = [], [], [], []
    for i in range(NUM_SRC):
        for h in range(HEADS):
            cols = slice(h * HEAD_DIM, (h + 1) * HEAD_DIM)
            wq_slabs.append(wq_src[i][:, cols] * SCALE)     # fold softmax scale
            wk_slabs.append(wk_src[i][:, cols])
            wv_slabs.append(wv_src[i][:, cols])
            rows = slice(i * DIM + h * HEAD_DIM, i * DIM + (h + 1) * HEAD_DIM)
            wo_slabs.append(p["wout"][rows, :])
    return (jnp.stack(wq_slabs), jnp.stack(wk_slabs),
            jnp.stack(wv_slabs), jnp.stack(wo_slabs))


@jax.jit
def attention_global2_pallas(c1, c2, c3, c4, params):
    b, n, d = c4.shape
    wq_s, wk_s, wv_s, wo_s = _pack_params(params)

    flat = lambda t: t.reshape(b * n, d)   # fold batch into rows (outside kernel)
    vmem = pl.BlockSpec(memory_space=pltpu.MemorySpace.VMEM)

    # Single invocation: no batch grid, everything resident in VMEM (few KiB).
    out_flat = pl.pallas_call(
        _attn_global2_kernel,
        out_shape=jax.ShapeDtypeStruct((b * n, d), c4.dtype),
        in_specs=[vmem] * 9,
        out_specs=vmem,
    )(flat(c1), flat(c2), flat(c3), flat(c4),
      wq_s, wk_s, wv_s, wo_s, params["bout"])
    return out_flat.reshape(b, n, d)


# --------------------------- pure-JAX reference ----------------------------
def attention_global2_ref(c1, c2, c3, c4, p):
    def split(t):   # b n (h d) -> b h n d
        bb, nn, dd = t.shape
        return t.reshape(bb, nn, HEADS, dd // HEADS).transpose(0, 2, 1, 3)

    def merge(t):   # b h n d -> b n (h d)
        bb, hh, nn, dd = t.shape
        return t.transpose(0, 2, 1, 3).reshape(bb, nn, hh * dd)

    def branch(wq, src, wk, wv):
        q, k, v = split(c4 @ wq), split(src @ wk), split(src @ wv)
        dots = jnp.einsum("bhnd,bhmd->bhnm", q, k) * SCALE
        a = jax.nn.softmax(dots, axis=-1)
        return merge(jnp.einsum("bhnm,bhmd->bhnd", a, v))

    out = jnp.concatenate([branch(p["wq1"], c1, p["wk1"], p["wv1"]),
                           branch(p["wq2"], c2, p["wk2"], p["wv2"]),
                           branch(p["wq3"], c3, p["wk3"], p["wv3"])], axis=-1)
    return out @ p["wout"] + p["bout"]


# --------------------------------- main ------------------------------------
if __name__ == "__main__":
    key = jax.random.PRNGKey(0)
    ks = jax.random.split(key, 16)

    def rnd(k, shape, s=0.05):
        return (s * jax.random.normal(k, shape)).astype(jnp.float32)

    c1 = rnd(ks[0], (B, N, DIM), 1.0)
    c2 = rnd(ks[1], (B, N, DIM), 1.0)
    c3 = rnd(ks[2], (B, N, DIM), 1.0)
    c4 = rnd(ks[3], (B, N, DIM), 1.0)

    params = {
        # Linear weights stored as (in_features, out_features): y = x @ W (+ b),
        # equivalent to torch's x @ W.T.
        "wq1": rnd(ks[4], (DIM, DIM)), "wq2": rnd(ks[5], (DIM, DIM)),
        "wq3": rnd(ks[6], (DIM, DIM)),
        "wk1": rnd(ks[7], (DIM, DIM)), "wk2": rnd(ks[8], (DIM, DIM)),
        "wk3": rnd(ks[9], (DIM, DIM)),
        "wv1": rnd(ks[10], (DIM, DIM)), "wv2": rnd(ks[11], (DIM, DIM)),
        "wv3": rnd(ks[12], (DIM, DIM)),
        "wout": rnd(ks[13], (NUM_SRC * DIM, DIM)),
        "bout": rnd(ks[14], (1, DIM)),
    }
    # TODO(synk): nn.Dropout(p=0.0) in to_out is identity at inference, so no RNG
    # masking is emitted in the kernel.

    out = attention_global2_pallas(c1, c2, c3, c4, params)
    out = jax.block_until_ready(out)

    ref = attention_global2_ref(c1, c2, c3, c4, params)
    assert out.shape == (B, N, DIM)
    # 1e-3 tolerance: kernel uses the EUP approximate reciprocal for the softmax
    # denominator and omits the (mathematically redundant) row-max subtraction.
    assert jnp.allclose(out, ref, atol=1e-3, rtol=1e-3), (
        float(jnp.max(jnp.abs(out - ref))))

    print("KERNEL_OK")
</pallas_src>

<mosaic_0001>
module attributes {stable_mosaic.version = 11 : i64} {
  func.func @_attn_global2_kernel(%arg0: memref<16x32xf32, #tpu.memory_space<vmem>>, %arg1: memref<16x32xf32, #tpu.memory_space<vmem>>, %arg2: memref<16x32xf32, #tpu.memory_space<vmem>>, %arg3: memref<16x32xf32, #tpu.memory_space<vmem>>, %arg4: memref<6x32x16xf32, #tpu.memory_space<vmem>>, %arg5: memref<6x32x16xf32, #tpu.memory_space<vmem>>, %arg6: memref<6x32x16xf32, #tpu.memory_space<vmem>>, %arg7: memref<6x16x32xf32, #tpu.memory_space<vmem>>, %arg8: memref<1x32xf32, #tpu.memory_space<vmem>>, %arg9: memref<16x32xf32, #tpu.memory_space<vmem>>) attributes {dimension_semantics = [], scalar_prefetch = 0 : i64, scratch_operands = 0 : i64, tpu.core_type = #tpu.core_type<tc>} {
    %c0 = arith.constant 0 : index
    %c0_0 = arith.constant 0 : index
    %0 = vector.load %arg3[%c0, %c0_0] : memref<16x32xf32, #tpu.memory_space<vmem>>, vector<16x32xf32>
    %c0_1 = arith.constant 0 : index
    %c0_2 = arith.constant 0 : index
    %1 = vector.load %arg0[%c0_1, %c0_2] : memref<16x32xf32, #tpu.memory_space<vmem>>, vector<16x32xf32>
    %c0_3 = arith.constant 0 : index
    %c0_4 = arith.constant 0 : index
    %2 = vector.load %arg1[%c0_3, %c0_4] : memref<16x32xf32, #tpu.memory_space<vmem>>, vector<16x32xf32>
    %c0_5 = arith.constant 0 : index
    %c0_6 = arith.constant 0 : index
    %3 = vector.load %arg2[%c0_5, %c0_6] : memref<16x32xf32, #tpu.memory_space<vmem>>, vector<16x32xf32>
    %cst = arith.constant 0.000000e+00 : f32
    %4 = vector.broadcast %cst : f32 to vector<8x32xf32>
    %cst_7 = arith.constant 0.000000e+00 : f32
    %5 = vector.broadcast %cst_7 : f32 to vector<8x32xf32>
    %c0_8 = arith.constant 0 : index
    %c0_9 = arith.constant 0 : index
    %c0_10 = arith.constant 0 : index
    %6 = vector.load %arg4[%c0_8, %c0_9, %c0_10] : memref<6x32x16xf32, #tpu.memory_space<vmem>>, vector<1x32x16xf32>
    %7 = vector.shape_cast %6 : vector<1x32x16xf32> to vector<32x16xf32>
    %cst_11 = arith.constant dense<0.000000e+00> : vector<16x16xf32>
    %8 = tpu.matmul %0, %7, %cst_11 {dimension_numbers = #tpu.dot_dimension_numbers<[1], [0], [0], [1], [0, 0, 1, 1], [], []>} : vector<16x32xf32>, vector<32x16xf32>, vector<16x16xf32> -> vector<16x16xf32>
    %c0_12 = arith.constant 0 : index
    %c0_13 = arith.constant 0 : index
    %c0_14 = arith.constant 0 : index
    %9 = vector.load %arg5[%c0_12, %c0_13, %c0_14] : memref<6x32x16xf32, #tpu.memory_space<vmem>>, vector<1x32x16xf32>
    %10 = vector.shape_cast %9 : vector<1x32x16xf32> to vector<32x16xf32>
    %cst_15 = arith.constant dense<0.000000e+00> : vector<16x16xf32>
    %11 = tpu.matmul %1, %10, %cst_15 {dimension_numbers = #tpu.dot_dimension_numbers<[1], [0], [0], [1], [0, 0, 1, 1], [], []>} : vector<16x32xf32>, vector<32x16xf32>, vector<16x16xf32> -> vector<16x16xf32>
    %c0_16 = arith.constant 0 : index
    %c0_17 = arith.constant 0 : index
    %c0_18 = arith.constant 0 : index
    %12 = vector.load %arg6[%c0_16, %c0_17, %c0_18] : memref<6x32x16xf32, #tpu.memory_space<vmem>>, vector<1x32x16xf32>
    %13 = vector.shape_cast %12 : vector<1x32x16xf32> to vector<32x16xf32>
    %cst_19 = arith.constant dense<0.000000e+00> : vector<16x16xf32>
    %14 = tpu.matmul %1, %13, %cst_19 {dimension_numbers = #tpu.dot_dimension_numbers<[1], [0], [0], [1], [0, 0, 1, 1], [], []>} : vector<16x32xf32>, vector<32x16xf32>, vector<16x16xf32> -> vector<16x16xf32>
    %c0_20 = arith.constant 0 : index
    %c0_21 = arith.constant 0 : index
    %c0_22 = arith.constant 0 : index
    %15 = vector.load %arg7[%c0_20, %c0_21, %c0_22] : memref<6x16x32xf32, #tpu.memory_space<vmem>>, vector<1x16x32xf32>
    %16 = vector.shape_cast %15 : vector<1x16x32xf32> to vector<16x32xf32>
    %17 = vector.extract_strided_slice %8 {offsets = [0, 0], sizes = [8, 16], strides = [1, 1]} : vector<16x16xf32> to vector<8x16xf32>
    %18 = vector.extract_strided_slice %11 {offsets = [0, 0], sizes = [8, 16], strides = [1, 1]} : vector<16x16xf32> to vector<8x16xf32>
    %19 = vector.extract_strided_slice %14 {offsets = [0, 0], sizes = [8, 16], strides = [1, 1]} : vector<16x16xf32> to vector<8x16xf32>
    %cst_23 = arith.constant dense<0.000000e+00> : vector<8x8xf32>
    %20 = tpu.matmul %17, %18, %cst_23 {dimension_numbers = #tpu.dot_dimension_numbers<[1], [1], [0], [0], [0, 0, 1, 0], [], []>} : vector<8x16xf32>, vector<8x16xf32>, vector<8x8xf32> -> vector<8x8xf32>
    %21 = math.exp %20 : vector<8x8xf32>
    %cst_24 = arith.constant dense<0.000000e+00> : vector<8xf32>
    %22 = vector.multi_reduction <add>, %21, %cst_24 [1] : vector<8x8xf32> to vector<8xf32>
    %23 = vector.shape_cast %22 : vector<8xf32> to vector<8x1xf32>
    %24 = tpu.reciprocal %23 {approx = true} : vector<8x1xf32> -> vector<8x1xf32>
    %25 = vector.broadcast %24 : vector<8x1xf32> to vector<8x8xf32>
    %26 = arith.mulf %21, %25 : vector<8x8xf32>
    %cst_25 = arith.constant dense<0.000000e+00> : vector<8x16xf32>
    %27 = tpu.matmul %26, %19, %cst_25 {dimension_numbers = #tpu.dot_dimension_numbers<[1], [0], [0], [1], [0, 0, 1, 1], [], []>} : vector<8x8xf32>, vector<8x16xf32>, vector<8x16xf32> -> vector<8x16xf32>
    %cst_26 = arith.constant dense<0.000000e+00> : vector<8x32xf32>
    %28 = tpu.matmul %27, %16, %cst_26 {dimension_numbers = #tpu.dot_dimension_numbers<[1], [0], [0], [1], [0, 0, 1, 1], [], []>} : vector<8x16xf32>, vector<16x32xf32>, vector<8x32xf32> -> vector<8x32xf32>
    %29 = arith.addf %4, %28 : vector<8x32xf32>
    %30 = vector.extract_strided_slice %8 {offsets = [8, 0], sizes = [8, 16], strides = [1, 1]} : vector<16x16xf32> to vector<8x16xf32>
    %31 = vector.extract_strided_slice %11 {offsets = [8, 0], sizes = [8, 16], strides = [1, 1]} : vector<16x16xf32> to vector<8x16xf32>
    %32 = vector.extract_strided_slice %14 {offsets = [8, 0], sizes = [8, 16], strides = [1, 1]} : vector<16x16xf32> to vector<8x16xf32>
    %cst_27 = arith.constant dense<0.000000e+00> : vector<8x8xf32>
    %33 = tpu.matmul %30, %31, %cst_27 {dimension_numbers = #tpu.dot_dimension_numbers<[1], [1], [0], [0], [0, 0, 1, 0], [], []>} : vector<8x16xf32>, vector<8x16xf32>, vector<8x8xf32> -> vector<8x8xf32>
    %34 = math.exp %33 : vector<8x8xf32>
    %cst_28 = arith.constant dense<0.000000e+00> : vector<8xf32>
    %35 = vector.multi_reduction <add>, %34, %cst_28 [1] : vector<8x8xf32> to vector<8xf32>
    %36 = vector.shape_cast %35 : vector<8xf32> to vector<8x1xf32>
    %37 = tpu.reciprocal %36 {approx = true} : vector<8x1xf32> -> vector<8x1xf32>
    %38 = vector.broadcast %37 : vector<8x1xf32> to vector<8x8xf32>
    %39 = arith.mulf %34, %38 : vector<8x8xf32>
    %cst_29 = arith.constant dense<0.000000e+00> : vector<8x16xf32>
    %40 = tpu.matmul %39, %32, %cst_29 {dimension_numbers = #tpu.dot_dimension_numbers<[1], [0], [0], [1], [0, 0, 1, 1], [], []>} : vector<8x8xf32>, vector<8x16xf32>, vector<8x16xf32> -> vector<8x16xf32>
    %cst_30 = arith.constant dense<0.000000e+00> : vector<8x32xf32>
    %41 = tpu.matmul %40, %16, %cst_30 {dimension_numbers = #tpu.dot_dimension_numbers<[1], [0], [0], [1], [0, 0, 1, 1], [], []>} : vector<8x16xf32>, vector<16x32xf32>, vector<8x32xf32> -> vector<8x32xf32>
    %42 = arith.addf %5, %41 : vector<8x32xf32>
    %c1 = arith.constant 1 : index
    %c0_31 = arith.constant 0 : index
    %c0_32 = arith.constant 0 : index
    %43 = vector.load %arg4[%c1, %c0_31, %c0_32] : memref<6x32x16xf32, #tpu.memory_space<vmem>>, vector<1x32x16xf32>
    %44 = vector.shape_cast %43 : vector<1x32x16xf32> to vector<32x16xf32>
    %cst_33 = arith.constant dense<0.000000e+00> : vector<16x16xf32>
    %45 = tpu.matmul %0, %44, %cst_33 {dimension_numbers = #tpu.dot_dimension_numbers<[1], [0], [0], [1], [0, 0, 1, 1], [], []>} : vector<16x32xf32>, vector<32x16xf32>, vector<16x16xf32> -> vector<16x16xf32>
    %c1_34 = arith.constant 1 : index
    %c0_35 = arith.constant 0 : index
    %c0_36 = arith.constant 0 : index
    %46 = vector.load %arg5[%c1_34, %c0_35, %c0_36] : memref<6x32x16xf32, #tpu.memory_space<vmem>>, vector<1x32x16xf32>
    %47 = vector.shape_cast %46 : vector<1x32x16xf32> to vector<32x16xf32>
    %cst_37 = arith.constant dense<0.000000e+00> : vector<16x16xf32>
    %48 = tpu.matmul %1, %47, %cst_37 {dimension_numbers = #tpu.dot_dimension_numbers<[1], [0], [0], [1], [0, 0, 1, 1], [], []>} : vector<16x32xf32>, vector<32x16xf32>, vector<16x16xf32> -> vector<16x16xf32>
    %c1_38 = arith.constant 1 : index
    %c0_39 = arith.constant 0 : index
    %c0_40 = arith.constant 0 : index
    %49 = vector.load %arg6[%c1_38, %c0_39, %c0_40] : memref<6x32x16xf32, #tpu.memory_space<vmem>>, vector<1x32x16xf32>
    %50 = vector.shape_cast %49 : vector<1x32x16xf32> to vector<32x16xf32>
    %cst_41 = arith.constant dense<0.000000e+00> : vector<16x16xf32>
    %51 = tpu.matmul %1, %50, %cst_41 {dimension_numbers = #tpu.dot_dimension_numbers<[1], [0], [0], [1], [0, 0, 1, 1], [], []>} : vector<16x32xf32>, vector<32x16xf32>, vector<16x16xf32> -> vector<16x16xf32>
    %c1_42 = arith.constant 1 : index
    %c0_43 = arith.constant 0 : index
    %c0_44 = arith.constant 0 : index
    %52 = vector.load %arg7[%c1_42, %c0_43, %c0_44] : memref<6x16x32xf32, #tpu.memory_space<vmem>>, vector<1x16x32xf32>
    %53 = vector.shape_cast %52 : vector<1x16x32xf32> to vector<16x32xf32>
    %54 = vector.extract_strided_slice %45 {offsets = [0, 0], sizes = [8, 16], strides = [1, 1]} : vector<16x16xf32> to vector<8x16xf32>
    %55 = vector.extract_strided_slice %48 {offsets = [0, 0], sizes = [8, 16], strides = [1, 1]} : vector<16x16xf32> to vector<8x16xf32>
    %56 = vector.extract_strided_slice %51 {offsets = [0, 0], sizes = [8, 16], strides = [1, 1]} : vector<16x16xf32> to vector<8x16xf32>
    %cst_45 = arith.constant dense<0.000000e+00> : vector<8x8xf32>
    %57 = tpu.matmul %54, %55, %cst_45 {dimension_numbers = #tpu.dot_dimension_numbers<[1], [1], [0], [0], [0, 0, 1, 0], [], []>} : vector<8x16xf32>, vector<8x16xf32>, vector<8x8xf32> -> vector<8x8xf32>
    %58 = math.exp %57 : vector<8x8xf32>
    %cst_46 = arith.constant dense<0.000000e+00> : vector<8xf32>
    %59 = vector.multi_reduction <add>, %58, %cst_46 [1] : vector<8x8xf32> to vector<8xf32>
    %60 = vector.shape_cast %59 : vector<8xf32> to vector<8x1xf32>
    %61 = tpu.reciprocal %60 {approx = true} : vector<8x1xf32> -> vector<8x1xf32>
    %62 = vector.broadcast %61 : vector<8x1xf32> to vector<8x8xf32>
    %63 = arith.mulf %58, %62 : vector<8x8xf32>
    %cst_47 = arith.constant dense<0.000000e+00> : vector<8x16xf32>
    %64 = tpu.matmul %63, %56, %cst_47 {dimension_numbers = #tpu.dot_dimension_numbers<[1], [0], [0], [1], [0, 0, 1, 1], [], []>} : vector<8x8xf32>, vector<8x16xf32>, vector<8x16xf32> -> vector<8x16xf32>
    %cst_48 = arith.constant dense<0.000000e+00> : vector<8x32xf32>
    %65 = tpu.matmul %64, %53, %cst_48 {dimension_numbers = #tpu.dot_dimension_numbers<[1], [0], [0], [1], [0, 0, 1, 1], [], []>} : vector<8x16xf32>, vector<16x32xf32>, vector<8x32xf32> -> vector<8x32xf32>
    %66 = arith.addf %29, %65 : vector<8x32xf32>
    %67 = vector.extract_strided_slice %45 {offsets = [8, 0], sizes = [8, 16], strides = [1, 1]} : vector<16x16xf32> to vector<8x16xf32>
    %68 = vector.extract_strided_slice %48 {offsets = [8, 0], sizes = [8, 16], strides = [1, 1]} : vector<16x16xf32> to vector<8x16xf32>
    %69 = vector.extract_strided_slice %51 {offsets = [8, 0], sizes = [8, 16], strides = [1, 1]} : vector<16x16xf32> to vector<8x16xf32>
    %cst_49 = arith.constant dense<0.000000e+00> : vector<8x8xf32>
    %70 = tpu.matmul %67, %68, %cst_49 {dimension_numbers = #tpu.dot_dimension_numbers<[1], [1], [0], [0], [0, 0, 1, 0], [], []>} : vector<8x16xf32>, vector<8x16xf32>, vector<8x8xf32> -> vector<8x8xf32>
    %71 = math.exp %70 : vector<8x8xf32>
    %cst_50 = arith.constant dense<0.000000e+00> : vector<8xf32>
    %72 = vector.multi_reduction <add>, %71, %cst_50 [1] : vector<8x8xf32> to vector<8xf32>
    %73 = vector.shape_cast %72 : vector<8xf32> to vector<8x1xf32>
    %74 = tpu.reciprocal %73 {approx = true} : vector<8x1xf32> -> vector<8x1xf32>
    %75 = vector.broadcast %74 : vector<8x1xf32> to vector<8x8xf32>
    %76 = arith.mulf %71, %75 : vector<8x8xf32>
    %cst_51 = arith.constant dense<0.000000e+00> : vector<8x16xf32>
    %77 = tpu.matmul %76, %69, %cst_51 {dimension_numbers = #tpu.dot_dimension_numbers<[1], [0], [0], [1], [0, 0, 1, 1], [], []>} : vector<8x8xf32>, vector<8x16xf32>, vector<8x16xf32> -> vector<8x16xf32>
    %cst_52 = arith.constant dense<0.000000e+00> : vector<8x32xf32>
    %78 = tpu.matmul %77, %53, %cst_52 {dimension_numbers = #tpu.dot_dimension_numbers<[1], [0], [0], [1], [0, 0, 1, 1], [], []>} : vector<8x16xf32>, vector<16x32xf32>, vector<8x32xf32> -> vector<8x32xf32>
    %79 = arith.addf %42, %78 : vector<8x32xf32>
    %c2 = arith.constant 2 : index
    %c0_53 = arith.constant 0 : index
    %c0_54 = arith.constant 0 : index
    %80 = vector.load %arg4[%c2, %c0_53, %c0_54] : memref<6x32x16xf32, #tpu.memory_space<vmem>>, vector<1x32x16xf32>
    %81 = vector.shape_cast %80 : vector<1x32x16xf32> to vector<32x16xf32>
    %cst_55 = arith.constant dense<0.000000e+00> : vector<16x16xf32>
    %82 = tpu.matmul %0, %81, %cst_55 {dimension_numbers = #tpu.dot_dimension_numbers<[1], [0], [0], [1], [0, 0, 1, 1], [], []>} : vector<16x32xf32>, vector<32x16xf32>, vector<16x16xf32> -> vector<16x16xf32>
    %c2_56 = arith.constant 2 : index
    %c0_57 = arith.constant 0 : index
    %c0_58 = arith.constant 0 : index
    %83 = vector.load %arg5[%c2_56, %c0_57, %c0_58] : memref<6x32x16xf32, #tpu.memory_space<vmem>>, vector<1x32x16xf32>
    %84 = vector.shape_cast %83 : vector<1x32x16xf32> to vector<32x16xf32>
    %cst_59 = arith.constant dense<0.000000e+00> : vector<16x16xf32>
    %85 = tpu.matmul %2, %84, %cst_59 {dimension_numbers = #tpu.dot_dimension_numbers<[1], [0], [0], [1], [0, 0, 1, 1], [], []>} : vector<16x32xf32>, vector<32x16xf32>, vector<16x16xf32> -> vector<16x16xf32>
    %c2_60 = arith.constant 2 : index
    %c0_61 = arith.constant 0 : index
    %c0_62 = arith.constant 0 : index
    %86 = vector.load %arg6[%c2_60, %c0_61, %c0_62] : memref<6x32x16xf32, #tpu.memory_space<vmem>>, vector<1x32x16xf32>
    %87 = vector.shape_cast %86 : vector<1x32x16xf32> to vector<32x16xf32>
    %cst_63 = arith.constant dense<0.000000e+00> : vector<16x16xf32>
    %88 = tpu.matmul %2, %87, %cst_63 {dimension_numbers = #tpu.dot_dimension_numbers<[1], [0], [0], [1], [0, 0, 1, 1], [], []>} : vector<16x32xf32>, vector<32x16xf32>, vector<16x16xf32> -> vector<16x16xf32>
    %c2_64 = arith.constant 2 : index
    %c0_65 = arith.constant 0 : index
    %c0_66 = arith.constant 0 : index
    %89 = vector.load %arg7[%c2_64, %c0_65, %c0_66] : memref<6x16x32xf32, #tpu.memory_space<vmem>>, vector<1x16x32xf32>
    %90 = vector.shape_cast %89 : vector<1x16x32xf32> to vector<16x32xf32>
    %91 = vector.extract_strided_slice %82 {offsets = [0, 0], sizes = [8, 16], strides = [1, 1]} : vector<16x16xf32> to vector<8x16xf32>
    %92 = vector.extract_strided_slice %85 {offsets = [0, 0], sizes = [8, 16], strides = [1, 1]} : vector<16x16xf32> to vector<8x16xf32>
    %93 = vector.extract_strided_slice %88 {offsets = [0, 0], sizes = [8, 16], strides = [1, 1]} : vector<16x16xf32> to vector<8x16xf32>
    %cst_67 = arith.constant dense<0.000000e+00> : vector<8x8xf32>
    %94 = tpu.matmul %91, %92, %cst_67 {dimension_numbers = #tpu.dot_dimension_numbers<[1], [1], [0], [0], [0, 0, 1, 0], [], []>} : vector<8x16xf32>, vector<8x16xf32>, vector<8x8xf32> -> vector<8x8xf32>
    %95 = math.exp %94 : vector<8x8xf32>
    %cst_68 = arith.constant dense<0.000000e+00> : vector<8xf32>
    %96 = vector.multi_reduction <add>, %95, %cst_68 [1] : vector<8x8xf32> to vector<8xf32>
    %97 = vector.shape_cast %96 : vector<8xf32> to vector<8x1xf32>
    %98 = tpu.reciprocal %97 {approx = true} : vector<8x1xf32> -> vector<8x1xf32>
    %99 = vector.broadcast %98 : vector<8x1xf32> to vector<8x8xf32>
    %100 = arith.mulf %95, %99 : vector<8x8xf32>
    %cst_69 = arith.constant dense<0.000000e+00> : vector<8x16xf32>
    %101 = tpu.matmul %100, %93, %cst_69 {dimension_numbers = #tpu.dot_dimension_numbers<[1], [0], [0], [1], [0, 0, 1, 1], [], []>} : vector<8x8xf32>, vector<8x16xf32>, vector<8x16xf32> -> vector<8x16xf32>
    %cst_70 = arith.constant dense<0.000000e+00> : vector<8x32xf32>
    %102 = tpu.matmul %101, %90, %cst_70 {dimension_numbers = #tpu.dot_dimension_numbers<[1], [0], [0], [1], [0, 0, 1, 1], [], []>} : vector<8x16xf32>, vector<16x32xf32>, vector<8x32xf32> -> vector<8x32xf32>
    %103 = arith.addf %66, %102 : vector<8x32xf32>
    %104 = vector.extract_strided_slice %82 {offsets = [8, 0], sizes = [8, 16], strides = [1, 1]} : vector<16x16xf32> to vector<8x16xf32>
    %105 = vector.extract_strided_slice %85 {offsets = [8, 0], sizes = [8, 16], strides = [1, 1]} : vector<16x16xf32> to vector<8x16xf32>
    %106 = vector.extract_strided_slice %88 {offsets = [8, 0], sizes = [8, 16], strides = [1, 1]} : vector<16x16xf32> to vector<8x16xf32>
    %cst_71 = arith.constant dense<0.000000e+00> : vector<8x8xf32>
    %107 = tpu.matmul %104, %105, %cst_71 {dimension_numbers = #tpu.dot_dimension_numbers<[1], [1], [0], [0], [0, 0, 1, 0], [], []>} : vector<8x16xf32>, vector<8x16xf32>, vector<8x8xf32> -> vector<8x8xf32>
    %108 = math.exp %107 : vector<8x8xf32>
    %cst_72 = arith.constant dense<0.000000e+00> : vector<8xf32>
    %109 = vector.multi_reduction <add>, %108, %cst_72 [1] : vector<8x8xf32> to vector<8xf32>
    %110 = vector.shape_cast %109 : vector<8xf32> to vector<8x1xf32>
    %111 = tpu.reciprocal %110 {approx = true} : vector<8x1xf32> -> vector<8x1xf32>
    %112 = vector.broadcast %111 : vector<8x1xf32> to vector<8x8xf32>
    %113 = arith.mulf %108, %112 : vector<8x8xf32>
    %cst_73 = arith.constant dense<0.000000e+00> : vector<8x16xf32>
    %114 = tpu.matmul %113, %106, %cst_73 {dimension_numbers = #tpu.dot_dimension_numbers<[1], [0], [0], [1], [0, 0, 1, 1], [], []>} : vector<8x8xf32>, vector<8x16xf32>, vector<8x16xf32> -> vector<8x16xf32>
    %cst_74 = arith.constant dense<0.000000e+00> : vector<8x32xf32>
    %115 = tpu.matmul %114, %90, %cst_74 {dimension_numbers = #tpu.dot_dimension_numbers<[1], [0], [0], [1], [0, 0, 1, 1], [], []>} : vector<8x16xf32>, vector<16x32xf32>, vector<8x32xf32> -> vector<8x32xf32>
    %116 = arith.addf %79, %115 : vector<8x32xf32>
    %c3 = arith.constant 3 : index
    %c0_75 = arith.constant 0 : index
    %c0_76 = arith.constant 0 : index
    %117 = vector.load %arg4[%c3, %c0_75, %c0_76] : memref<6x32x16xf32, #tpu.memory_space<vmem>>, vector<1x32x16xf32>
    %118 = vector.shape_cast %117 : vector<1x32x16xf32> to vector<32x16xf32>
    %cst_77 = arith.constant dense<0.000000e+00> : vector<16x16xf32>
    %119 = tpu.matmul %0, %118, %cst_77 {dimension_numbers = #tpu.dot_dimension_numbers<[1], [0], [0], [1], [0, 0, 1, 1], [], []>} : vector<16x32xf32>, vector<32x16xf32>, vector<16x16xf32> -> vector<16x16xf32>
    %c3_78 = arith.constant 3 : index
    %c0_79 = arith.constant 0 : index
    %c0_80 = arith.constant 0 : index
    %120 = vector.load %arg5[%c3_78, %c0_79, %c0_80] : memref<6x32x16xf32, #tpu.memory_space<vmem>>, vector<1x32x16xf32>
    %121 = vector.shape_cast %120 : vector<1x32x16xf32> to vector<32x16xf32>
    %cst_81 = arith.constant dense<0.000000e+00> : vector<16x16xf32>
    %122 = tpu.matmul %2, %121, %cst_81 {dimension_numbers = #tpu.dot_dimension_numbers<[1], [0], [0], [1], [0, 0, 1, 1], [], []>} : vector<16x32xf32>, vector<32x16xf32>, vector<16x16xf32> -> vector<16x16xf32>
    %c3_82 = arith.constant 3 : index
    %c0_83 = arith.constant 0 : index
    %c0_84 = arith.constant 0 : index
    %123 = vector.load %arg6[%c3_82, %c0_83, %c0_84] : memref<6x32x16xf32, #tpu.memory_space<vmem>>, vector<1x32x16xf32>
    %124 = vector.shape_cast %123 : vector<1x32x16xf32> to vector<32x16xf32>
    %cst_85 = arith.constant dense<0.000000e+00> : vector<16x16xf32>
    %125 = tpu.matmul %2, %124, %cst_85 {dimension_numbers = #tpu.dot_dimension_numbers<[1], [0], [0], [1], [0, 0, 1, 1], [], []>} : vector<16x32xf32>, vector<32x16xf32>, vector<16x16xf32> -> vector<16x16xf32>
    %c3_86 = arith.constant 3 : index
    %c0_87 = arith.constant 0 : index
    %c0_88 = arith.constant 0 : index
    %126 = vector.load %arg7[%c3_86, %c0_87, %c0_88] : memref<6x16x32xf32, #tpu.memory_space<vmem>>, vector<1x16x32xf32>
    %127 = vector.shape_cast %126 : vector<1x16x32xf32> to vector<16x32xf32>
    %128 = vector.extract_strided_slice %119 {offsets = [0, 0], sizes = [8, 16], strides = [1, 1]} : vector<16x16xf32> to vector<8x16xf32>
    %129 = vector.extract_strided_slice %122 {offsets = [0, 0], sizes = [8, 16], strides = [1, 1]} : vector<16x16xf32> to vector<8x16xf32>
    %130 = vector.extract_strided_slice %125 {offsets = [0, 0], sizes = [8, 16], strides = [1, 1]} : vector<16x16xf32> to vector<8x16xf32>
    %cst_89 = arith.constant dense<0.000000e+00> : vector<8x8xf32>
    %131 = tpu.matmul %128, %129, %cst_89 {dimension_numbers = #tpu.dot_dimension_numbers<[1], [1], [0], [0], [0, 0, 1, 0], [], []>} : vector<8x16xf32>, vector<8x16xf32>, vector<8x8xf32> -> vector<8x8xf32>
    %132 = math.exp %131 : vector<8x8xf32>
    %cst_90 = arith.constant dense<0.000000e+00> : vector<8xf32>
    %133 = vector.multi_reduction <add>, %132, %cst_90 [1] : vector<8x8xf32> to vector<8xf32>
    %134 = vector.shape_cast %133 : vector<8xf32> to vector<8x1xf32>
    %135 = tpu.reciprocal %134 {approx = true} : vector<8x1xf32> -> vector<8x1xf32>
    %136 = vector.broadcast %135 : vector<8x1xf32> to vector<8x8xf32>
    %137 = arith.mulf %132, %136 : vector<8x8xf32>
    %cst_91 = arith.constant dense<0.000000e+00> : vector<8x16xf32>
    %138 = tpu.matmul %137, %130, %cst_91 {dimension_numbers = #tpu.dot_dimension_numbers<[1], [0], [0], [1], [0, 0, 1, 1], [], []>} : vector<8x8xf32>, vector<8x16xf32>, vector<8x16xf32> -> vector<8x16xf32>
    %cst_92 = arith.constant dense<0.000000e+00> : vector<8x32xf32>
    %139 = tpu.matmul %138, %127, %cst_92 {dimension_numbers = #tpu.dot_dimension_numbers<[1], [0], [0], [1], [0, 0, 1, 1], [], []>} : vector<8x16xf32>, vector<16x32xf32>, vector<8x32xf32> -> vector<8x32xf32>
    %140 = arith.addf %103, %139 : vector<8x32xf32>
    %141 = vector.extract_strided_slice %119 {offsets = [8, 0], sizes = [8, 16], strides = [1, 1]} : vector<16x16xf32> to vector<8x16xf32>
    %142 = vector.extract_strided_slice %122 {offsets = [8, 0], sizes = [8, 16], strides = [1, 1]} : vector<16x16xf32> to vector<8x16xf32>
    %143 = vector.extract_strided_slice %125 {offsets = [8, 0], sizes = [8, 16], strides = [1, 1]} : vector<16x16xf32> to vector<8x16xf32>
    %cst_93 = arith.constant dense<0.000000e+00> : vector<8x8xf32>
    %144 = tpu.matmul %141, %142, %cst_93 {dimension_numbers = #tpu.dot_dimension_numbers<[1], [1], [0], [0], [0, 0, 1, 0], [], []>} : vector<8x16xf32>, vector<8x16xf32>, vector<8x8xf32> -> vector<8x8xf32>
    %145 = math.exp %144 : vector<8x8xf32>
    %cst_94 = arith.constant dense<0.000000e+00> : vector<8xf32>
    %146 = vector.multi_reduction <add>, %145, %cst_94 [1] : vector<8x8xf32> to vector<8xf32>
    %147 = vector.shape_cast %146 : vector<8xf32> to vector<8x1xf32>
    %148 = tpu.reciprocal %147 {approx = true} : vector<8x1xf32> -> vector<8x1xf32>
    %149 = vector.broadcast %148 : vector<8x1xf32> to vector<8x8xf32>
    %150 = arith.mulf %145, %149 : vector<8x8xf32>
    %cst_95 = arith.constant dense<0.000000e+00> : vector<8x16xf32>
    %151 = tpu.matmul %150, %143, %cst_95 {dimension_numbers = #tpu.dot_dimension_numbers<[1], [0], [0], [1], [0, 0, 1, 1], [], []>} : vector<8x8xf32>, vector<8x16xf32>, vector<8x16xf32> -> vector<8x16xf32>
    %cst_96 = arith.constant dense<0.000000e+00> : vector<8x32xf32>
    %152 = tpu.matmul %151, %127, %cst_96 {dimension_numbers = #tpu.dot_dimension_numbers<[1], [0], [0], [1], [0, 0, 1, 1], [], []>} : vector<8x16xf32>, vector<16x32xf32>, vector<8x32xf32> -> vector<8x32xf32>
    %153 = arith.addf %116, %152 : vector<8x32xf32>
    %c4 = arith.constant 4 : index
    %c0_97 = arith.constant 0 : index
    %c0_98 = arith.constant 0 : index
    %154 = vector.load %arg4[%c4, %c0_97, %c0_98] : memref<6x32x16xf32, #tpu.memory_space<vmem>>, vector<1x32x16xf32>
    %155 = vector.shape_cast %154 : vector<1x32x16xf32> to vector<32x16xf32>
    %cst_99 = arith.constant dense<0.000000e+00> : vector<16x16xf32>
    %156 = tpu.matmul %0, %155, %cst_99 {dimension_numbers = #tpu.dot_dimension_numbers<[1], [0], [0], [1], [0, 0, 1, 1], [], []>} : vector<16x32xf32>, vector<32x16xf32>, vector<16x16xf32> -> vector<16x16xf32>
    %c4_100 = arith.constant 4 : index
    %c0_101 = arith.constant 0 : index
    %c0_102 = arith.constant 0 : index
    %157 = vector.load %arg5[%c4_100, %c0_101, %c0_102] : memref<6x32x16xf32, #tpu.memory_space<vmem>>, vector<1x32x16xf32>
    %158 = vector.shape_cast %157 : vector<1x32x16xf32> to vector<32x16xf32>
    %cst_103 = arith.constant dense<0.000000e+00> : vector<16x16xf32>
    %159 = tpu.matmul %3, %158, %cst_103 {dimension_numbers = #tpu.dot_dimension_numbers<[1], [0], [0], [1], [0, 0, 1, 1], [], []>} : vector<16x32xf32>, vector<32x16xf32>, vector<16x16xf32> -> vector<16x16xf32>
    %c4_104 = arith.constant 4 : index
    %c0_105 = arith.constant 0 : index
    %c0_106 = arith.constant 0 : index
    %160 = vector.load %arg6[%c4_104, %c0_105, %c0_106] : memref<6x32x16xf32, #tpu.memory_space<vmem>>, vector<1x32x16xf32>
    %161 = vector.shape_cast %160 : vector<1x32x16xf32> to vector<32x16xf32>
    %cst_107 = arith.constant dense<0.000000e+00> : vector<16x16xf32>
    %162 = tpu.matmul %3, %161, %cst_107 {dimension_numbers = #tpu.dot_dimension_numbers<[1], [0], [0], [1], [0, 0, 1, 1], [], []>} : vector<16x32xf32>, vector<32x16xf32>, vector<16x16xf32> -> vector<16x16xf32>
    %c4_108 = arith.constant 4 : index
    %c0_109 = arith.constant 0 : index
    %c0_110 = arith.constant 0 : index
    %163 = vector.load %arg7[%c4_108, %c0_109, %c0_110] : memref<6x16x32xf32, #tpu.memory_space<vmem>>, vector<1x16x32xf32>
    %164 = vector.shape_cast %163 : vector<1x16x32xf32> to vector<16x32xf32>
    %165 = vector.extract_strided_slice %156 {offsets = [0, 0], sizes = [8, 16], strides = [1, 1]} : vector<16x16xf32> to vector<8x16xf32>
    %166 = vector.extract_strided_slice %159 {offsets = [0, 0], sizes = [8, 16], strides = [1, 1]} : vector<16x16xf32> to vector<8x16xf32>
    %167 = vector.extract_strided_slice %162 {offsets = [0, 0], sizes = [8, 16], strides = [1, 1]} : vector<16x16xf32> to vector<8x16xf32>
    %cst_111 = arith.constant dense<0.000000e+00> : vector<8x8xf32>
    %168 = tpu.matmul %165, %166, %cst_111 {dimension_numbers = #tpu.dot_dimension_numbers<[1], [1], [0], [0], [0, 0, 1, 0], [], []>} : vector<8x16xf32>, vector<8x16xf32>, vector<8x8xf32> -> vector<8x8xf32>
    %169 = math.exp %168 : vector<8x8xf32>
    %cst_112 = arith.constant dense<0.000000e+00> : vector<8xf32>
    %170 = vector.multi_reduction <add>, %169, %cst_112 [1] : vector<8x8xf32> to vector<8xf32>
    %171 = vector.shape_cast %170 : vector<8xf32> to vector<8x1xf32>
    %172 = tpu.reciprocal %171 {approx = true} : vector<8x1xf32> -> vector<8x1xf32>
    %173 = vector.broadcast %172 : vector<8x1xf32> to vector<8x8xf32>
    %174 = arith.mulf %169, %173 : vector<8x8xf32>
    %cst_113 = arith.constant dense<0.000000e+00> : vector<8x16xf32>
    %175 = tpu.matmul %174, %167, %cst_113 {dimension_numbers = #tpu.dot_dimension_numbers<[1], [0], [0], [1], [0, 0, 1, 1], [], []>} : vector<8x8xf32>, vector<8x16xf32>, vector<8x16xf32> -> vector<8x16xf32>
    %cst_114 = arith.constant dense<0.000000e+00> : vector<8x32xf32>
    %176 = tpu.matmul %175, %164, %cst_114 {dimension_numbers = #tpu.dot_dimension_numbers<[1], [0], [0], [1], [0, 0, 1, 1], [], []>} : vector<8x16xf32>, vector<16x32xf32>, vector<8x32xf32> -> vector<8x32xf32>
    %177 = arith.addf %140, %176 : vector<8x32xf32>
    %178 = vector.extract_strided_slice %156 {offsets = [8, 0], sizes = [8, 16], strides = [1, 1]} : vector<16x16xf32> to vector<8x16xf32>
    %179 = vector.extract_strided_slice %159 {offsets = [8, 0], sizes = [8, 16], strides = [1, 1]} : vector<16x16xf32> to vector<8x16xf32>
    %180 = vector.extract_strided_slice %162 {offsets = [8, 0], sizes = [8, 16], strides = [1, 1]} : vector<16x16xf32> to vector<8x16xf32>
    %cst_115 = arith.constant dense<0.000000e+00> : vector<8x8xf32>
    %181 = tpu.matmul %178, %179, %cst_115 {dimension_numbers = #tpu.dot_dimension_numbers<[1], [1], [0], [0], [0, 0, 1, 0], [], []>} : vector<8x16xf32>, vector<8x16xf32>, vector<8x8xf32> -> vector<8x8xf32>
    %182 = math.exp %181 : vector<8x8xf32>
    %cst_116 = arith.constant dense<0.000000e+00> : vector<8xf32>
    %183 = vector.multi_reduction <add>, %182, %cst_116 [1] : vector<8x8xf32> to vector<8xf32>
    %184 = vector.shape_cast %183 : vector<8xf32> to vector<8x1xf32>
    %185 = tpu.reciprocal %184 {approx = true} : vector<8x1xf32> -> vector<8x1xf32>
    %186 = vector.broadcast %185 : vector<8x1xf32> to vector<8x8xf32>
    %187 = arith.mulf %182, %186 : vector<8x8xf32>
    %cst_117 = arith.constant dense<0.000000e+00> : vector<8x16xf32>
    %188 = tpu.matmul %187, %180, %cst_117 {dimension_numbers = #tpu.dot_dimension_numbers<[1], [0], [0], [1], [0, 0, 1, 1], [], []>} : vector<8x8xf32>, vector<8x16xf32>, vector<8x16xf32> -> vector<8x16xf32>
    %cst_118 = arith.constant dense<0.000000e+00> : vector<8x32xf32>
    %189 = tpu.matmul %188, %164, %cst_118 {dimension_numbers = #tpu.dot_dimension_numbers<[1], [0], [0], [1], [0, 0, 1, 1], [], []>} : vector<8x16xf32>, vector<16x32xf32>, vector<8x32xf32> -> vector<8x32xf32>
    %190 = arith.addf %153, %189 : vector<8x32xf32>
    %c5 = arith.constant 5 : index
    %c0_119 = arith.constant 0 : index
    %c0_120 = arith.constant 0 : index
    %191 = vector.load %arg4[%c5, %c0_119, %c0_120] : memref<6x32x16xf32, #tpu.memory_space<vmem>>, vector<1x32x16xf32>
    %192 = vector.shape_cast %191 : vector<1x32x16xf32> to vector<32x16xf32>
    %cst_121 = arith.constant dense<0.000000e+00> : vector<16x16xf32>
    %193 = tpu.matmul %0, %192, %cst_121 {dimension_numbers = #tpu.dot_dimension_numbers<[1], [0], [0], [1], [0, 0, 1, 1], [], []>} : vector<16x32xf32>, vector<32x16xf32>, vector<16x16xf32> -> vector<16x16xf32>
    %c5_122 = arith.constant 5 : index
    %c0_123 = arith.constant 0 : index
    %c0_124 = arith.constant 0 : index
    %194 = vector.load %arg5[%c5_122, %c0_123, %c0_124] : memref<6x32x16xf32, #tpu.memory_space<vmem>>, vector<1x32x16xf32>
    %195 = vector.shape_cast %194 : vector<1x32x16xf32> to vector<32x16xf32>
    %cst_125 = arith.constant dense<0.000000e+00> : vector<16x16xf32>
    %196 = tpu.matmul %3, %195, %cst_125 {dimension_numbers = #tpu.dot_dimension_numbers<[1], [0], [0], [1], [0, 0, 1, 1], [], []>} : vector<16x32xf32>, vector<32x16xf32>, vector<16x16xf32> -> vector<16x16xf32>
    %c5_126 = arith.constant 5 : index
    %c0_127 = arith.constant 0 : index
    %c0_128 = arith.constant 0 : index
    %197 = vector.load %arg6[%c5_126, %c0_127, %c0_128] : memref<6x32x16xf32, #tpu.memory_space<vmem>>, vector<1x32x16xf32>
    %198 = vector.shape_cast %197 : vector<1x32x16xf32> to vector<32x16xf32>
    %cst_129 = arith.constant dense<0.000000e+00> : vector<16x16xf32>
    %199 = tpu.matmul %3, %198, %cst_129 {dimension_numbers = #tpu.dot_dimension_numbers<[1], [0], [0], [1], [0, 0, 1, 1], [], []>} : vector<16x32xf32>, vector<32x16xf32>, vector<16x16xf32> -> vector<16x16xf32>
    %c5_130 = arith.constant 5 : index
    %c0_131 = arith.constant 0 : index
    %c0_132 = arith.constant 0 : index
    %200 = vector.load %arg7[%c5_130, %c0_131, %c0_132] : memref<6x16x32xf32, #tpu.memory_space<vmem>>, vector<1x16x32xf32>
    %201 = vector.shape_cast %200 : vector<1x16x32xf32> to vector<16x32xf32>
    %202 = vector.extract_strided_slice %193 {offsets = [0, 0], sizes = [8, 16], strides = [1, 1]} : vector<16x16xf32> to vector<8x16xf32>
    %203 = vector.extract_strided_slice %196 {offsets = [0, 0], sizes = [8, 16], strides = [1, 1]} : vector<16x16xf32> to vector<8x16xf32>
    %204 = vector.extract_strided_slice %199 {offsets = [0, 0], sizes = [8, 16], strides = [1, 1]} : vector<16x16xf32> to vector<8x16xf32>
    %cst_133 = arith.constant dense<0.000000e+00> : vector<8x8xf32>
    %205 = tpu.matmul %202, %203, %cst_133 {dimension_numbers = #tpu.dot_dimension_numbers<[1], [1], [0], [0], [0, 0, 1, 0], [], []>} : vector<8x16xf32>, vector<8x16xf32>, vector<8x8xf32> -> vector<8x8xf32>
    %206 = math.exp %205 : vector<8x8xf32>
    %cst_134 = arith.constant dense<0.000000e+00> : vector<8xf32>
    %207 = vector.multi_reduction <add>, %206, %cst_134 [1] : vector<8x8xf32> to vector<8xf32>
    %208 = vector.shape_cast %207 : vector<8xf32> to vector<8x1xf32>
    %209 = tpu.reciprocal %208 {approx = true} : vector<8x1xf32> -> vector<8x1xf32>
    %210 = vector.broadcast %209 : vector<8x1xf32> to vector<8x8xf32>
    %211 = arith.mulf %206, %210 : vector<8x8xf32>
    %cst_135 = arith.constant dense<0.000000e+00> : vector<8x16xf32>
    %212 = tpu.matmul %211, %204, %cst_135 {dimension_numbers = #tpu.dot_dimension_numbers<[1], [0], [0], [1], [0, 0, 1, 1], [], []>} : vector<8x8xf32>, vector<8x16xf32>, vector<8x16xf32> -> vector<8x16xf32>
    %cst_136 = arith.constant dense<0.000000e+00> : vector<8x32xf32>
    %213 = tpu.matmul %212, %201, %cst_136 {dimension_numbers = #tpu.dot_dimension_numbers<[1], [0], [0], [1], [0, 0, 1, 1], [], []>} : vector<8x16xf32>, vector<16x32xf32>, vector<8x32xf32> -> vector<8x32xf32>
    %214 = arith.addf %177, %213 : vector<8x32xf32>
    %215 = vector.extract_strided_slice %193 {offsets = [8, 0], sizes = [8, 16], strides = [1, 1]} : vector<16x16xf32> to vector<8x16xf32>
    %216 = vector.extract_strided_slice %196 {offsets = [8, 0], sizes = [8, 16], strides = [1, 1]} : vector<16x16xf32> to vector<8x16xf32>
    %217 = vector.extract_strided_slice %199 {offsets = [8, 0], sizes = [8, 16], strides = [1, 1]} : vector<16x16xf32> to vector<8x16xf32>
    %cst_137 = arith.constant dense<0.000000e+00> : vector<8x8xf32>
    %218 = tpu.matmul %215, %216, %cst_137 {dimension_numbers = #tpu.dot_dimension_numbers<[1], [1], [0], [0], [0, 0, 1, 0], [], []>} : vector<8x16xf32>, vector<8x16xf32>, vector<8x8xf32> -> vector<8x8xf32>
    %219 = math.exp %218 : vector<8x8xf32>
    %cst_138 = arith.constant dense<0.000000e+00> : vector<8xf32>
    %220 = vector.multi_reduction <add>, %219, %cst_138 [1] : vector<8x8xf32> to vector<8xf32>
    %221 = vector.shape_cast %220 : vector<8xf32> to vector<8x1xf32>
    %222 = tpu.reciprocal %221 {approx = true} : vector<8x1xf32> -> vector<8x1xf32>
    %223 = vector.broadcast %222 : vector<8x1xf32> to vector<8x8xf32>
    %224 = arith.mulf %219, %223 : vector<8x8xf32>
    %cst_139 = arith.constant dense<0.000000e+00> : vector<8x16xf32>
    %225 = tpu.matmul %224, %217, %cst_139 {dimension_numbers = #tpu.dot_dimension_numbers<[1], [0], [0], [1], [0, 0, 1, 1], [], []>} : vector<8x8xf32>, vector<8x16xf32>, vector<8x16xf32> -> vector<8x16xf32>
    %cst_140 = arith.constant dense<0.000000e+00> : vector<8x32xf32>
    %226 = tpu.matmul %225, %201, %cst_140 {dimension_numbers = #tpu.dot_dimension_numbers<[1], [0], [0], [1], [0, 0, 1, 1], [], []>} : vector<8x16xf32>, vector<16x32xf32>, vector<8x32xf32> -> vector<8x32xf32>
    %227 = arith.addf %190, %226 : vector<8x32xf32>
    %c0_141 = arith.constant 0 : index
    %c0_142 = arith.constant 0 : index
    %228 = vector.load %arg8[%c0_141, %c0_142] : memref<1x32xf32, #tpu.memory_space<vmem>>, vector<1x32xf32>
    %229 = vector.broadcast %228 : vector<1x32xf32> to vector<8x32xf32>
    %230 = arith.addf %214, %229 : vector<8x32xf32>
    %c0_143 = arith.constant 0 : index
    %c0_144 = arith.constant 0 : index
    %231 = vector.load %arg9[%c0_143, %c0_144] : memref<16x32xf32, #tpu.memory_space<vmem>>, vector<8x32xf32>
    tpu.vector_store %arg9[%c0_143, %c0_144], %230 {strides = array<i32>} : memref<16x32xf32, #tpu.memory_space<vmem>>, vector<8x32xf32>,
    %232 = vector.broadcast %228 : vector<1x32xf32> to vector<8x32xf32>
    %233 = arith.addf %227, %232 : vector<8x32xf32>
    %c8 = arith.constant 8 : index
    %c0_145 = arith.constant 0 : index
    %234 = vector.load %arg9[%c8, %c0_145] : memref<16x32xf32, #tpu.memory_space<vmem>>, vector<8x32xf32>
    tpu.vector_store %arg9[%c8, %c0_145], %233 {strides = array<i32>} : memref<16x32xf32, #tpu.memory_space<vmem>>, vector<8x32xf32>,
    return
  }
}

</mosaic_0001>

<llo_original>
// kernel: attention_global2_pallas.1
$region0: #{attention_global2_pallas.1}
  #allocation0 [shape = 'u32[]', space=smem, size = 0x4, offset = 0x4, fixed_abs, tag = 'smem constant byte address 0x4 - core index']
  #allocation1 [shape = 'u32[144,128]{1,0:T(1,128)}', space=vmem, size = 0x12000, scoped, tag = 'internal scratch']
  %s0 = inlined_call_operand.vmem [shape: f32[16,32], index: 0, kind: input, shape index: {}]
  %s1 = inlined_call_operand.vmem [shape: f32[16,32], index: 1, kind: input, shape index: {}]
  %s2 = inlined_call_operand.vmem [shape: f32[16,32], index: 2, kind: input, shape index: {}]
  %s3 = inlined_call_operand.vmem [shape: f32[16,32], index: 3, kind: input, shape index: {}]
  %s4 = inlined_call_operand.vmem [shape: f32[6,32,16], index: 4, kind: input, shape index: {}]
  %s5 = inlined_call_operand.vmem [shape: f32[6,32,16], index: 5, kind: input, shape index: {}]
  %s6 = inlined_call_operand.vmem [shape: f32[6,32,16], index: 6, kind: input, shape index: {}]
  %s7 = inlined_call_operand.vmem [shape: f32[6,16,32], index: 7, kind: input, shape index: {}]
  %s8 = inlined_call_operand.vmem [shape: f32[1,32], index: 8, kind: input, shape index: {}]
  %s9 = inlined_call_operand.hbm [shape: f32[16,32], index: 9, kind: output, shape index: {}]
  %s10 = sld [smem:[#allocation0]]
  $region46: #{attention_global2_pallas.1} parent=0
    _
  %s12 = ssub.s32 1, %s10
  %s13 = scalar_select 0, %s12, %s10
  $region1: #{attention_global2_pallas.1} parent=0
    #allocation2 [shape = 'u8[8192]{0}', space=vmem, size = 0x2000, scoped, tag = 'output window, operand 0, single buffered']
    #allocation3 [shape = 's32[1]{0}', space=sflag, size = 0x4, scoped, tag = 'scoped memory for attention_global2_pallas.1']
    %14 = vsyncpa [#allocation3], 0
    // Predicated region
    $region2: #{attention_global2_pallas.1} parent=1 // pred_check
      _
    $region3: #{attention_global2_pallas.1} parent=1 // pred_check_branch
      %16 = sbr.rel (0) target = $region5
    $region4: #{attention_global2_pallas.1} parent=1 // pred_region
      _
    $region5: #{attention_global2_pallas.1} parent=1 // pred_fallthru
      _
    // Predicated region
    $region6: #{attention_global2_pallas.1} parent=1 // pred_check
      _
    $region7: #{attention_global2_pallas.1} parent=1 // pred_check_branch
      %18 = sbr.rel (0) target = $region9
    $region8: #{attention_global2_pallas.1} parent=1 // pred_region
      _
    $region9: #{attention_global2_pallas.1} parent=1 // pred_fallthru
      _
    // Predicated region
    $region10: #{attention_global2_pallas.1} parent=1 // pred_check
      _
    $region11: #{attention_global2_pallas.1} parent=1 // pred_check_branch
      %20 = sbr.rel (0) target = $region13
    $region12: #{attention_global2_pallas.1} parent=1 // pred_region
      _
    $region13: #{attention_global2_pallas.1} parent=1 // pred_fallthru
      _
    // Predicated region
    $region14: #{attention_global2_pallas.1} parent=1 // pred_check
      _
    $region15: #{attention_global2_pallas.1} parent=1 // pred_check_branch
      %22 = sbr.rel (0) target = $region17
    $region16: #{attention_global2_pallas.1} parent=1 // pred_region
      _
    $region17: #{attention_global2_pallas.1} parent=1 // pred_fallthru
      _
    // Predicated region
    $region18: #{attention_global2_pallas.1} parent=1 // pred_check
      _
    $region19: #{attention_global2_pallas.1} parent=1 // pred_check_branch
      %24 = sbr.rel (0) target = $region21
    $region20: #{attention_global2_pallas.1} parent=1 // pred_region
      _
    $region21: #{attention_global2_pallas.1} parent=1 // pred_fallthru
      _
    // Predicated region
    $region22: #{attention_global2_pallas.1} parent=1 // pred_check
      _
    $region23: #{attention_global2_pallas.1} parent=1 // pred_check_branch
      %26 = sbr.rel (0) target = $region25
    $region24: #{attention_global2_pallas.1} parent=1 // pred_region
      _
    $region25: #{attention_global2_pallas.1} parent=1 // pred_fallthru
      _
    // Predicated region
    $region26: #{attention_global2_pallas.1} parent=1 // pred_check
      _
    $region27: #{attention_global2_pallas.1} parent=1 // pred_check_branch
      %28 = sbr.rel (0) target = $region29
    $region28: #{attention_global2_pallas.1} parent=1 // pred_region
      _
    $region29: #{attention_global2_pallas.1} parent=1 // pred_fallthru
      _
    // Predicated region
    $region30: #{attention_global2_pallas.1} parent=1 // pred_check
      _
    $region31: #{attention_global2_pallas.1} parent=1 // pred_check_branch
      %30 = sbr.rel (0) target = $region33
    $region32: #{attention_global2_pallas.1} parent=1 // pred_region
      _
    $region33: #{attention_global2_pallas.1} parent=1 // pred_fallthru
      _
    // Predicated region
    $region34: #{attention_global2_pallas.1} parent=1 // pred_check
      _
    $region35: #{attention_global2_pallas.1} parent=1 // pred_check_branch
      %32 = sbr.rel (0) target = $region37
    $region36: #{attention_global2_pallas.1} parent=1 // pred_region
      _
    $region37: #{attention_global2_pallas.1} parent=1 // pred_fallthru
      _
    %v33 = vld [vmem:[%s3] sm:$0xff]
    %v34 = vld [vmem:[%s3 + $0x8] sm:$0xff]
    %v35 = vld [vmem:[%s0] sm:$0xff]
    %v36 = vld [vmem:[%s0 + $0x8] sm:$0xff]
    %v37 = vld [vmem:[%s1] sm:$0xff]
    %v38 = vld [vmem:[%s1 + $0x8] sm:$0xff]
    %v39 = vld [vmem:[%s2] sm:$0xff]
    %v40 = vld [vmem:[%s2 + $0x8] sm:$0xff]
    %v41 = vld [vmem:[%s4] sm:$0xff]
    %v42 = vld [vmem:[%s4 + $0x8] sm:$0xff]
    %v43 = vld [vmem:[%s4 + $0x10] sm:$0xff]
    %v44 = vld [vmem:[%s4 + $0x18] sm:$0xff]
    %vm45 = vcmask 261120
    %v47 = vsel %vm45, %v33, 0
    %v50 = vsel %vm45, %v34, 0
    %52 = vmatprep.subr.mxu0 0.0
    %53 = vmatpush1.msra.mxu0 0.0
    %54 = vmatprep.subr.mxu0 0.0
    %55 = vmatpush1.msra.mxu0 0.0
    %56 = vmatprep.subr.mxu0 0.0
    %57 = vmatpush1.msra.mxu0 0.0
    %58 = vmatprep.subr.mxu0 0.0
    %59 = vmatpush1.msra.mxu0 0.0
    %60 = vmatprep.subr.mxu0 0.0
    %61 = vmatpush1.msra.mxu0 0.0
    %62 = vmatprep.subr.mxu0 0.0
    %63 = vmatpush1.msra.mxu0 0.0
    %64 = vmatprep.subr.mxu0 0.0
    %65 = vmatpush1.msra.mxu0 0.0
    %66 = vmatprep.subr.mxu0 0.0
    %67 = vmatpush1.msra.mxu0 0.0
    %68 = vmatprep.subr.mxu0 0.0
    %69 = vmatpush1.msra.mxu0 0.0
    %70 = vmatprep.subr.mxu0 0.0
    %71 = vmatpush1.msra.mxu0 0.0
    %72 = vmatprep.subr.mxu0 0.0
    %73 = vmatpush1.msra.mxu0 0.0
    %74 = vmatprep.subr.mxu0 0.0
    %75 = vmatpush1.msra.mxu0 0.0
    %76 = vmatprep.subr.mxu0 0.0
    %77 = vmatpush1.msra.mxu0 %v44
    %78 = vmatprep.subr.mxu0 0.0
    %79 = vmatpush1.msra.mxu0 %v43
    %80 = vmatprep.subr.mxu0 0.0
    %81 = vmatpush1.msra.mxu0 %v42
    %82 = vmatprep.subr.mxu0 0.0
    %83 = vmatpush1.msra.mxu0 %v41
    %84 = vmatprep.subr.mxu0 0.0
    %85 = vmatpush2.msra.mxu0 0.0
    %86 = vmatprep.subr.mxu0 0.0
    %87 = vmatpush2.msra.mxu0 0.0
    %88 = vmatprep.subr.mxu0 0.0
    %89 = vmatpush2.msra.mxu0 0.0
    %90 = vmatprep.subr.mxu0 0.0
    %91 = vmatpush2.msra.mxu0 0.0
    %92 = vmatprep.subr.mxu0 0.0
    %93 = vmatpush2.msra.mxu0 0.0
    %94 = vmatprep.subr.mxu0 0.0
    %95 = vmatpush2.msra.mxu0 0.0
    %96 = vmatprep.subr.mxu0 0.0
    %97 = vmatpush2.msra.mxu0 0.0
    %98 = vmatprep.subr.mxu0 0.0
    %99 = vmatpush2.msra.mxu0 0.0
    %100 = vmatprep.subr.mxu0 0.0
    %101 = vmatpush2.msra.mxu0 0.0
    %102 = vmatprep.subr.mxu0 0.0
    %103 = vmatpush2.msra.mxu0 0.0
    %104 = vmatprep.subr.mxu0 0.0
    %105 = vmatpush2.msra.mxu0 0.0
    %106 = vmatprep.subr.mxu0 0.0
    %107 = vmatpush2.msra.mxu0 0.0
    %108 = vmatprep.subr.mxu0 0.0
    %109 = vmatpush2.msra.mxu0 0.0
    %110 = vmatprep.subr.mxu0 0.0
    %111 = vmatpush2.msra.mxu0 0.0
    %112 = vmatprep.subr.mxu0 0.0
    %113 = vmatpush2.msra.mxu0 0.0
    %114 = vmatprep.subr.mxu0 0.0
    %115 = vmatpush2.msra.mxu0 0.0
    %116 = vmatprep.mubr.f32.mxu0 0.0
    %117 = vmatmul.mubr.f32.gmra.mxu0 %v47
    %v118 = vpop.f32.mrf.mxu0
    %v119 = vadd.f32 0.0, %v118
    %v120 = vpop.f32.mrf.mxu0
    %121 = vmatprep.mubr.f32.mxu0 0.0
    %122 = vmatmul.mubr.f32.gmra.mxu0 %v50
    %v123 = vpop.f32.mrf.mxu0
    %v124 = vadd.f32 0.0, %v123
    %v125 = vpop.f32.mrf.mxu0
    %126 = vdwg.mxu0
    %v127 = vld [vmem:[%s5] sm:$0xff]
    %v128 = vld [vmem:[%s5 + $0x8] sm:$0xff]
    %v129 = vld [vmem:[%s5 + $0x10] sm:$0xff]
    %v130 = vld [vmem:[%s5 + $0x18] sm:$0xff]
    %v132 = vsel %vm45, %v35, 0
    %v135 = vsel %vm45, %v36, 0
    %137 = vmatprep.subr.mxu0 0.0
    %138 = vmatpush1.msra.mxu0 0.0
    %139 = vmatprep.subr.mxu0 0.0
    %140 = vmatpush1.msra.mxu0 0.0
    %141 = vmatprep.subr.mxu0 0.0
    %142 = vmatpush1.msra.mxu0 0.0
    %143 = vmatprep.subr.mxu0 0.0
    %144 = vmatpush1.msra.mxu0 0.0
    %145 = vmatprep.subr.mxu0 0.0
    %146 = vmatpush1.msra.mxu0 0.0
    %147 = vmatprep.subr.mxu0 0.0
    %148 = vmatpush1.msra.mxu0 0.0
    %149 = vmatprep.subr.mxu0 0.0
    %150 = vmatpush1.msra.mxu0 0.0
    %151 = vmatprep.subr.mxu0 0.0
    %152 = vmatpush1.msra.mxu0 0.0
    %153 = vmatprep.subr.mxu0 0.0
    %154 = vmatpush1.msra.mxu0 0.0
    %155 = vmatprep.subr.mxu0 0.0
    %156 = vmatpush1.msra.mxu0 0.0
    %157 = vmatprep.subr.mxu0 0.0
    %158 = vmatpush1.msra.mxu0 0.0
    %159 = vmatprep.subr.mxu0 0.0
    %160 = vmatpush1.msra.mxu0 0.0
    %161 = vmatprep.subr.mxu0 0.0
    %162 = vmatpush1.msra.mxu0 %v130
    %163 = vmatprep.subr.mxu0 0.0
    %164 = vmatpush1.msra.mxu0 %v129
    %165 = vmatprep.subr.mxu0 0.0
    %166 = vmatpush1.msra.mxu0 %v128
    %167 = vmatprep.subr.mxu0 0.0
    %168 = vmatpush1.msra.mxu0 %v127
    %169 = vmatprep.subr.mxu0 0.0
    %170 = vmatpush2.msra.mxu0 0.0
    %171 = vmatprep.subr.mxu0 0.0
    %172 = vmatpush2.msra.mxu0 0.0
    %173 = vmatprep.subr.mxu0 0.0
    %174 = vmatpush2.msra.mxu0 0.0
    %175 = vmatprep.subr.mxu0 0.0
    %176 = vmatpush2.msra.mxu0 0.0
    %177 = vmatprep.subr.mxu0 0.0
    %178 = vmatpush2.msra.mxu0 0.0
    %179 = vmatprep.subr.mxu0 0.0
    %180 = vmatpush2.msra.mxu0 0.0
    %181 = vmatprep.subr.mxu0 0.0
    %182 = vmatpush2.msra.mxu0 0.0
    %183 = vmatprep.subr.mxu0 0.0
    %184 = vmatpush2.msra.mxu0 0.0
    %185 = vmatprep.subr.mxu0 0.0
    %186 = vmatpush2.msra.mxu0 0.0
    %187 = vmatprep.subr.mxu0 0.0
    %188 = vmatpush2.msra.mxu0 0.0
    %189 = vmatprep.subr.mxu0 0.0
    %190 = vmatpush2.msra.mxu0 0.0
    %191 = vmatprep.subr.mxu0 0.0
    %192 = vmatpush2.msra.mxu0 0.0
    %193 = vmatprep.subr.mxu0 0.0
    %194 = vmatpush2.msra.mxu0 0.0
    %195 = vmatprep.subr.mxu0 0.0
    %196 = vmatpush2.msra.mxu0 0.0
    %197 = vmatprep.subr.mxu0 0.0
    %198 = vmatpush2.msra.mxu0 0.0
    %199 = vmatprep.subr.mxu0 0.0
    %200 = vmatpush2.msra.mxu0 0.0
    %201 = vmatprep.mubr.f32.mxu0 0.0
    %202 = vmatmul.mubr.f32.gmra.mxu0 %v132
    %v203 = vpop.f32.mrf.mxu0
    %v204 = vadd.f32 0.0, %v203
    %v205 = vpop.f32.mrf.mxu0
    %206 = vmatprep.mubr.f32.mxu0 0.0
    %207 = vmatmul.mubr.f32.gmra.mxu0 %v135
    %v208 = vpop.f32.mrf.mxu0
    %v209 = vadd.f32 0.0, %v208
    %v210 = vpop.f32.mrf.mxu0
    %211 = vdwg.mxu0
    %v212 = vld [vmem:[%s6] sm:$0xff]
    %v213 = vld [vmem:[%s6 + $0x8] sm:$0xff]
    %v214 = vld [vmem:[%s6 + $0x10] sm:$0xff]
    %v215 = vld [vmem:[%s6 + $0x18] sm:$0xff]
    %216 = vmatprep.subr.mxu0 0.0
    %217 = vmatpush1.msra.mxu0 0.0
    %218 = vmatprep.subr.mxu0 0.0
    %219 = vmatpush1.msra.mxu0 0.0
    %220 = vmatprep.subr.mxu0 0.0
    %221 = vmatpush1.msra.mxu0 0.0
    %222 = vmatprep.subr.mxu0 0.0
    %223 = vmatpush1.msra.mxu0 0.0
    %224 = vmatprep.subr.mxu0 0.0
    %225 = vmatpush1.msra.mxu0 0.0
    %226 = vmatprep.subr.mxu0 0.0
    %227 = vmatpush1.msra.mxu0 0.0
    %228 = vmatprep.subr.mxu0 0.0
    %229 = vmatpush1.msra.mxu0 0.0
    %230 = vmatprep.subr.mxu0 0.0
    %231 = vmatpush1.msra.mxu0 0.0
    %232 = vmatprep.subr.mxu0 0.0
    %233 = vmatpush1.msra.mxu0 0.0
    %234 = vmatprep.subr.mxu0 0.0
    %235 = vmatpush1.msra.mxu0 0.0
    %236 = vmatprep.subr.mxu0 0.0
    %237 = vmatpush1.msra.mxu0 0.0
    %238 = vmatprep.subr.mxu0 0.0
    %239 = vmatpush1.msra.mxu0 0.0
    %240 = vmatprep.subr.mxu0 0.0
    %241 = vmatpush1.msra.mxu0 %v215
    %242 = vmatprep.subr.mxu0 0.0
    %243 = vmatpush1.msra.mxu0 %v214
    %244 = vmatprep.subr.mxu0 0.0
    %245 = vmatpush1.msra.mxu0 %v213
    %246 = vmatprep.subr.mxu0 0.0
    %247 = vmatpush1.msra.mxu0 %v212
    %248 = vmatprep.subr.mxu0 0.0
    %249 = vmatpush2.msra.mxu0 0.0
    %250 = vmatprep.subr.mxu0 0.0
    %251 = vmatpush2.msra.mxu0 0.0
    %252 = vmatprep.subr.mxu0 0.0
    %253 = vmatpush2.msra.mxu0 0.0
    %254 = vmatprep.subr.mxu0 0.0
    %255 = vmatpush2.msra.mxu0 0.0
    %256 = vmatprep.subr.mxu0 0.0
    %257 = vmatpush2.msra.mxu0 0.0
    %258 = vmatprep.subr.mxu0 0.0
    %259 = vmatpush2.msra.mxu0 0.0
    %260 = vmatprep.subr.mxu0 0.0
    %261 = vmatpush2.msra.mxu0 0.0
    %262 = vmatprep.subr.mxu0 0.0
    %263 = vmatpush2.msra.mxu0 0.0
    %264 = vmatprep.subr.mxu0 0.0
    %265 = vmatpush2.msra.mxu0 0.0
    %266 = vmatprep.subr.mxu0 0.0
    %267 = vmatpush2.msra.mxu0 0.0
    %268 = vmatprep.subr.mxu0 0.0
    %269 = vmatpush2.msra.mxu0 0.0
    %270 = vmatprep.subr.mxu0 0.0
    %271 = vmatpush2.msra.mxu0 0.0
    %272 = vmatprep.subr.mxu0 0.0
    %273 = vmatpush2.msra.mxu0 0.0
    %274 = vmatprep.subr.mxu0 0.0
    %275 = vmatpush2.msra.mxu0 0.0
    %276 = vmatprep.subr.mxu0 0.0
    %277 = vmatpush2.msra.mxu0 0.0
    %278 = vmatprep.subr.mxu0 0.0
    %279 = vmatpush2.msra.mxu0 0.0
    %280 = vmatprep.mubr.f32.mxu0 0.0
    %281 = vmatmul.mubr.f32.gmra.mxu0 %v132
    %v282 = vpop.f32.mrf.mxu0
    %v283 = vadd.f32 0.0, %v282
    %v284 = vpop.f32.mrf.mxu0
    %285 = vmatprep.mubr.f32.mxu0 0.0
    %286 = vmatmul.mubr.f32.gmra.mxu0 %v135
    %v287 = vpop.f32.mrf.mxu0
    %v288 = vadd.f32 0.0, %v287
    %v289 = vpop.f32.mrf.mxu0
    %290 = vdwg.mxu0
    %v291 = vld [vmem:[%s7] sm:$0xff]
    %v292 = vld [vmem:[%s7 + $0x8] sm:$0xff]
    %vm293 = vcmask 130048
    %v295 = vsel %vm293, %v119, 0
    %v298 = vsel %vm293, %v204, 0
    %300 = vmatprep.subr.mxu0 0.0
    %301 = vmatpush1.xpose.msra.mxu0 0.0
    %302 = vmatprep.subr.mxu0 0.0
    %303 = vmatpush1.xpose.msra.mxu0 0.0
    %304 = vmatprep.subr.mxu0 0.0
    %305 = vmatpush1.xpose.msra.mxu0 0.0
    %306 = vmatprep.subr.mxu0 0.0
    %307 = vmatpush1.xpose.msra.mxu0 0.0
    %308 = vmatprep.subr.mxu0 0.0
    %309 = vmatpush1.xpose.msra.mxu0 0.0
    %310 = vmatprep.subr.mxu0 0.0
    %311 = vmatpush1.xpose.msra.mxu0 0.0
    %312 = vmatprep.subr.mxu0 0.0
    %313 = vmatpush1.xpose.msra.mxu0 0.0
    %314 = vmatprep.subr.mxu0 0.0
    %315 = vmatpush1.xpose.msra.mxu0 0.0
    %316 = vmatprep.subr.mxu0 0.0
    %317 = vmatpush1.xpose.msra.mxu0 0.0
    %318 = vmatprep.subr.mxu0 0.0
    %319 = vmatpush1.xpose.msra.mxu0 0.0
    %320 = vmatprep.subr.mxu0 0.0
    %321 = vmatpush1.xpose.msra.mxu0 0.0
    %322 = vmatprep.subr.mxu0 0.0
    %323 = vmatpush1.xpose.msra.mxu0 0.0
    %324 = vmatprep.subr.mxu0 0.0
    %325 = vmatpush1.xpose.msra.mxu0 0.0
    %326 = vmatprep.subr.mxu0 0.0
    %327 = vmatpush1.xpose.msra.mxu0 0.0
    %328 = vmatprep.subr.mxu0 0.0
    %329 = vmatpush1.xpose.msra.mxu0 0.0
    %330 = vmatprep.subr.mxu0 0.0
    %331 = vmatpush1.xpose.msra.mxu0 %v298
    %332 = vmatprep.subr.mxu0 0.0
    %333 = vmatpush2.xpose.msra.mxu0 0.0
    %334 = vmatprep.subr.mxu0 0.0
    %335 = vmatpush2.xpose.msra.mxu0 0.0
    %336 = vmatprep.subr.mxu0 0.0
    %337 = vmatpush2.xpose.msra.mxu0 0.0
    %338 = vmatprep.subr.mxu0 0.0
    %339 = vmatpush2.xpose.msra.mxu0 0.0
    %340 = vmatprep.subr.mxu0 0.0
    %341 = vmatpush2.xpose.msra.mxu0 0.0
    %342 = vmatprep.subr.mxu0 0.0
    %343 = vmatpush2.xpose.msra.mxu0 0.0
    %344 = vmatprep.subr.mxu0 0.0
    %345 = vmatpush2.xpose.msra.mxu0 0.0
    %346 = vmatprep.subr.mxu0 0.0
    %347 = vmatpush2.xpose.msra.mxu0 0.0
    %348 = vmatprep.subr.mxu0 0.0
    %349 = vmatpush2.xpose.msra.mxu0 0.0
    %350 = vmatprep.subr.mxu0 0.0
    %351 = vmatpush2.xpose.msra.mxu0 0.0
    %352 = vmatprep.subr.mxu0 0.0
    %353 = vmatpush2.xpose.msra.mxu0 0.0
    %354 = vmatprep.subr.mxu0 0.0
    %355 = vmatpush2.xpose.msra.mxu0 0.0
    %356 = vmatprep.subr.mxu0 0.0
    %357 = vmatpush2.xpose.msra.mxu0 0.0
    %358 = vmatprep.subr.mxu0 0.0
    %359 = vmatpush2.xpose.msra.mxu0 0.0
    %360 = vmatprep.subr.mxu0 0.0
    %361 = vmatpush2.xpose.msra.mxu0 0.0
    %362 = vmatprep.subr.mxu0 0.0
    %363 = vmatpush2.xpose.msra.mxu0 0.0
    %364 = vmatprep.mubr.f32.mxu0 0.0
    %365 = vmatmul.mubr.f32.gmra.mxu0 %v295
    %v366 = vpop.f32.mrf.mxu0
    %v367 = vadd.f32 0.0, %v366
    %v368 = vpop.f32.mrf.mxu0
    %369 = vdwg.mxu0
    %v370 = vmul.f32 %v367, 1.442695
    %v371 = vpow.pop %v370
    %vm372 = vcmask 64512
    %v373 = vsel %vm372, %v371, 0.0
    %374 = vadd.xlane.f32.xlu0 %v373
    %v375 = vpop.xlane.xlu0 %374
    %v376 = vrcp.pop %v375
    %v377 = vmul.f32 %v371, %v376
    %v379 = vsel %vm372, %v377, 0
    %381 = vmatprep.subr.mxu0 0.0
    %382 = vmatpush1.msra.mxu0 0.0
    %383 = vmatprep.subr.mxu0 0.0
    %384 = vmatpush1.msra.mxu0 0.0
    %385 = vmatprep.subr.mxu0 0.0
    %386 = vmatpush1.msra.mxu0 0.0
    %387 = vmatprep.subr.mxu0 0.0
    %388 = vmatpush1.msra.mxu0 0.0
    %389 = vmatprep.subr.mxu0 0.0
    %390 = vmatpush1.msra.mxu0 0.0
    %391 = vmatprep.subr.mxu0 0.0
    %392 = vmatpush1.msra.mxu0 0.0
    %393 = vmatprep.subr.mxu0 0.0
    %394 = vmatpush1.msra.mxu0 0.0
    %395 = vmatprep.subr.mxu0 0.0
    %396 = vmatpush1.msra.mxu0 0.0
    %397 = vmatprep.subr.mxu0 0.0
    %398 = vmatpush1.msra.mxu0 0.0
    %399 = vmatprep.subr.mxu0 0.0
    %400 = vmatpush1.msra.mxu0 0.0
    %401 = vmatprep.subr.mxu0 0.0
    %402 = vmatpush1.msra.mxu0 0.0
    %403 = vmatprep.subr.mxu0 0.0
    %404 = vmatpush1.msra.mxu0 0.0
    %405 = vmatprep.subr.mxu0 0.0
    %406 = vmatpush1.msra.mxu0 0.0
    %407 = vmatprep.subr.mxu0 0.0
    %408 = vmatpush1.msra.mxu0 0.0
    %409 = vmatprep.subr.mxu0 0.0
    %410 = vmatpush1.msra.mxu0 0.0
    %411 = vmatprep.subr.mxu0 0.0
    %412 = vmatpush1.msra.mxu0 %v283
    %413 = vmatprep.subr.mxu0 0.0
    %414 = vmatpush2.msra.mxu0 0.0
    %415 = vmatprep.subr.mxu0 0.0
    %416 = vmatpush2.msra.mxu0 0.0
    %417 = vmatprep.subr.mxu0 0.0
    %418 = vmatpush2.msra.mxu0 0.0
    %419 = vmatprep.subr.mxu0 0.0
    %420 = vmatpush2.msra.mxu0 0.0
    %421 = vmatprep.subr.mxu0 0.0
    %422 = vmatpush2.msra.mxu0 0.0
    %423 = vmatprep.subr.mxu0 0.0
    %424 = vmatpush2.msra.mxu0 0.0
    %425 = vmatprep.subr.mxu0 0.0
    %426 = vmatpush2.msra.mxu0 0.0
    %427 = vmatprep.subr.mxu0 0.0
    %428 = vmatpush2.msra.mxu0 0.0
    %429 = vmatprep.subr.mxu0 0.0
    %430 = vmatpush2.msra.mxu0 0.0
    %431 = vmatprep.subr.mxu0 0.0
    %432 = vmatpush2.msra.mxu0 0.0
    %433 = vmatprep.subr.mxu0 0.0
    %434 = vmatpush2.msra.mxu0 0.0
    %435 = vmatprep.subr.mxu0 0.0
    %436 = vmatpush2.msra.mxu0 0.0
    %437 = vmatprep.subr.mxu0 0.0
    %438 = vmatpush2.msra.mxu0 0.0
    %439 = vmatprep.subr.mxu0 0.0
    %440 = vmatpush2.msra.mxu0 0.0
    %441 = vmatprep.subr.mxu0 0.0
    %442 = vmatpush2.msra.mxu0 0.0
    %443 = vmatprep.subr.mxu0 0.0
    %444 = vmatpush2.msra.mxu0 0.0
    %445 = vmatprep.mubr.f32.mxu0 0.0
    %446 = vmatmul.mubr.f32.gmra.mxu0 %v379
    %v447 = vpop.f32.mrf.mxu0
    %v448 = vadd.f32 0.0, %v447
    %v449 = vpop.f32.mrf.mxu0
    %450 = vdwg.mxu0
    %v452 = vsel %vm293, %v124, 0
    %v455 = vsel %vm293, %v209, 0
    %457 = vmatprep.subr.mxu0 0.0
    %458 = vmatpush1.xpose.msra.mxu0 0.0
    %459 = vmatprep.subr.mxu0 0.0
    %460 = vmatpush1.xpose.msra.mxu0 0.0
    %461 = vmatprep.subr.mxu0 0.0
    %462 = vmatpush1.xpose.msra.mxu0 0.0
    %463 = vmatprep.subr.mxu0 0.0
    %464 = vmatpush1.xpose.msra.mxu0 0.0
    %465 = vmatprep.subr.mxu0 0.0
    %466 = vmatpush1.xpose.msra.mxu0 0.0
    %467 = vmatprep.subr.mxu0 0.0
    %468 = vmatpush1.xpose.msra.mxu0 0.0
    %469 = vmatprep.subr.mxu0 0.0
    %470 = vmatpush1.xpose.msra.mxu0 0.0
    %471 = vmatprep.subr.mxu0 0.0
    %472 = vmatpush1.xpose.msra.mxu0 0.0
    %473 = vmatprep.subr.mxu0 0.0
    %474 = vmatpush1.xpose.msra.mxu0 0.0
    %475 = vmatprep.subr.mxu0 0.0
    %476 = vmatpush1.xpose.msra.mxu0 0.0
    %477 = vmatprep.subr.mxu0 0.0
    %478 = vmatpush1.xpose.msra.mxu0 0.0
    %479 = vmatprep.subr.mxu0 0.0
    %480 = vmatpush1.xpose.msra.mxu0 0.0
    %481 = vmatprep.subr.mxu0 0.0
    %482 = vmatpush1.xpose.msra.mxu0 0.0
    %483 = vmatprep.subr.mxu0 0.0
    %484 = vmatpush1.xpose.msra.mxu0 0.0
    %485 = vmatprep.subr.mxu0 0.0
    %486 = vmatpush1.xpose.msra.mxu0 0.0
    %487 = vmatprep.subr.mxu0 0.0
    %488 = vmatpush1.xpose.msra.mxu0 %v455
    %489 = vmatprep.subr.mxu0 0.0
    %490 = vmatpush2.xpose.msra.mxu0 0.0
    %491 = vmatprep.subr.mxu0 0.0
    %492 = vmatpush2.xpose.msra.mxu0 0.0
    %493 = vmatprep.subr.mxu0 0.0
    %494 = vmatpush2.xpose.msra.mxu0 0.0
    %495 = vmatprep.subr.mxu0 0.0
    %496 = vmatpush2.xpose.msra.mxu0 0.0
    %497 = vmatprep.subr.mxu0 0.0
    %498 = vmatpush2.xpose.msra.mxu0 0.0
    %499 = vmatprep.subr.mxu0 0.0
    %500 = vmatpush2.xpose.msra.mxu0 0.0
    %501 = vmatprep.subr.mxu0 0.0
    %502 = vmatpush2.xpose.msra.mxu0 0.0
    %503 = vmatprep.subr.mxu0 0.0
    %504 = vmatpush2.xpose.msra.mxu0 0.0
    %505 = vmatprep.subr.mxu0 0.0
    %506 = vmatpush2.xpose.msra.mxu0 0.0
    %507 = vmatprep.subr.mxu0 0.0
    %508 = vmatpush2.xpose.msra.mxu0 0.0
    %509 = vmatprep.subr.mxu0 0.0
    %510 = vmatpush2.xpose.msra.mxu0 0.0
    %511 = vmatprep.subr.mxu0 0.0
    %512 = vmatpush2.xpose.msra.mxu0 0.0
    %513 = vmatprep.subr.mxu0 0.0
    %514 = vmatpush2.xpose.msra.mxu0 0.0
    %515 = vmatprep.subr.mxu0 0.0
    %516 = vmatpush2.xpose.msra.mxu0 0.0
    %517 = vmatprep.subr.mxu0 0.0
    %518 = vmatpush2.xpose.msra.mxu0 0.0
    %519 = vmatprep.subr.mxu0 0.0
    %520 = vmatpush2.xpose.msra.mxu0 0.0
    %521 = vmatprep.mubr.f32.mxu0 0.0
    %522 = vmatmul.mubr.f32.gmra.mxu0 %v452
    %v523 = vpop.f32.mrf.mxu0
    %v524 = vadd.f32 0.0, %v523
    %v525 = vpop.f32.mrf.mxu0
    %526 = vdwg.mxu0
    %v527 = vmul.f32 %v524, 1.442695
    %v528 = vpow.pop %v527
    %v529 = vsel %vm372, %v528, 0.0
    %530 = vadd.xlane.f32.xlu0 %v529
    %v531 = vpop.xlane.xlu0 %530
    %v532 = vrcp.pop %v531
    %v533 = vmul.f32 %v528, %v532
    %v535 = vsel %vm372, %v533, 0
    %537 = vmatprep.subr.mxu0 0.0
    %538 = vmatpush1.msra.mxu0 0.0
    %539 = vmatprep.subr.mxu0 0.0
    %540 = vmatpush1.msra.mxu0 0.0
    %541 = vmatprep.subr.mxu0 0.0
    %542 = vmatpush1.msra.mxu0 0.0
    %543 = vmatprep.subr.mxu0 0.0
    %544 = vmatpush1.msra.mxu0 0.0
    %545 = vmatprep.subr.mxu0 0.0
    %546 = vmatpush1.msra.mxu0 0.0
    %547 = vmatprep.subr.mxu0 0.0
    %548 = vmatpush1.msra.mxu0 0.0
    %549 = vmatprep.subr.mxu0 0.0
    %550 = vmatpush1.msra.mxu0 0.0
    %551 = vmatprep.subr.mxu0 0.0
    %552 = vmatpush1.msra.mxu0 0.0
    %553 = vmatprep.subr.mxu0 0.0
    %554 = vmatpush1.msra.mxu0 0.0
    %555 = vmatprep.subr.mxu0 0.0
    %556 = vmatpush1.msra.mxu0 0.0
    %557 = vmatprep.subr.mxu0 0.0
    %558 = vmatpush1.msra.mxu0 0.0
    %559 = vmatprep.subr.mxu0 0.0
    %560 = vmatpush1.msra.mxu0 0.0
    %561 = vmatprep.subr.mxu0 0.0
    %562 = vmatpush1.msra.mxu0 0.0
    %563 = vmatprep.subr.mxu0 0.0
    %564 = vmatpush1.msra.mxu0 0.0
    %565 = vmatprep.subr.mxu0 0.0
    %566 = vmatpush1.msra.mxu0 0.0
    %567 = vmatprep.subr.mxu0 0.0
    %568 = vmatpush1.msra.mxu0 %v288
    %569 = vmatprep.subr.mxu0 0.0
    %570 = vmatpush2.msra.mxu0 0.0
    %571 = vmatprep.subr.mxu0 0.0
    %572 = vmatpush2.msra.mxu0 0.0
    %573 = vmatprep.subr.mxu0 0.0
    %574 = vmatpush2.msra.mxu0 0.0
    %575 = vmatprep.subr.mxu0 0.0
    %576 = vmatpush2.msra.mxu0 0.0
    %577 = vmatprep.subr.mxu0 0.0
    %578 = vmatpush2.msra.mxu0 0.0
    %579 = vmatprep.subr.mxu0 0.0
    %580 = vmatpush2.msra.mxu0 0.0
    %581 = vmatprep.subr.mxu0 0.0
    %582 = vmatpush2.msra.mxu0 0.0
    %583 = vmatprep.subr.mxu0 0.0
    %584 = vmatpush2.msra.mxu0 0.0
    %585 = vmatprep.subr.mxu0 0.0
    %586 = vmatpush2.msra.mxu0 0.0
    %587 = vmatprep.subr.mxu0 0.0
    %588 = vmatpush2.msra.mxu0 0.0
    %589 = vmatprep.subr.mxu0 0.0
    %590 = vmatpush2.msra.mxu0 0.0
    %591 = vmatprep.subr.mxu0 0.0
    %592 = vmatpush2.msra.mxu0 0.0
    %593 = vmatprep.subr.mxu0 0.0
    %594 = vmatpush2.msra.mxu0 0.0
    %595 = vmatprep.subr.mxu0 0.0
    %596 = vmatpush2.msra.mxu0 0.0
    %597 = vmatprep.subr.mxu0 0.0
    %598 = vmatpush2.msra.mxu0 0.0
    %599 = vmatprep.subr.mxu0 0.0
    %600 = vmatpush2.msra.mxu0 0.0
    %601 = vmatprep.mubr.f32.mxu0 0.0
    %602 = vmatmul.mubr.f32.gmra.mxu0 %v535
    %v603 = vpop.f32.mrf.mxu0
    %v604 = vadd.f32 0.0, %v603
    %v605 = vpop.f32.mrf.mxu0
    %606 = vdwg.mxu0
    %s607 = scalar_lea.vmem %s4, 32
    %v608 = vld [vmem:[%s607] sm:$0xff]
    %v609 = vld [vmem:[%s607 + $0x8] sm:$0xff]
    %v610 = vld [vmem:[%s607 + $0x10] sm:$0xff]
    %v611 = vld [vmem:[%s607 + $0x18] sm:$0xff]
    %612 = vmatprep.subr.mxu0 0.0
    %613 = vmatpush1.msra.mxu0 0.0
    %614 = vmatprep.subr.mxu0 0.0
    %615 = vmatpush1.msra.mxu0 0.0
    %616 = vmatprep.subr.mxu0 0.0
    %617 = vmatpush1.msra.mxu0 0.0
    %618 = vmatprep.subr.mxu0 0.0
    %619 = vmatpush1.msra.mxu0 0.0
    %620 = vmatprep.subr.mxu0 0.0
    %621 = vmatpush1.msra.mxu0 0.0
    %622 = vmatprep.subr.mxu0 0.0
    %623 = vmatpush1.msra.mxu0 0.0
    %624 = vmatprep.subr.mxu0 0.0
    %625 = vmatpush1.msra.mxu0 0.0
    %626 = vmatprep.subr.mxu0 0.0
    %627 = vmatpush1.msra.mxu0 0.0
    %628 = vmatprep.subr.mxu0 0.0
    %629 = vmatpush1.msra.mxu0 0.0
    %630 = vmatprep.subr.mxu0 0.0
    %631 = vmatpush1.msra.mxu0 0.0
    %632 = vmatprep.subr.mxu0 0.0
    %633 = vmatpush1.msra.mxu0 0.0
    %634 = vmatprep.subr.mxu0 0.0
    %635 = vmatpush1.msra.mxu0 0.0
    %636 = vmatprep.subr.mxu0 0.0
    %637 = vmatpush1.msra.mxu0 %v611
    %638 = vmatprep.subr.mxu0 0.0
    %639 = vmatpush1.msra.mxu0 %v610
    %640 = vmatprep.subr.mxu0 0.0
    %641 = vmatpush1.msra.mxu0 %v609
    %642 = vmatprep.subr.mxu0 0.0
    %643 = vmatpush1.msra.mxu0 %v608
    %644 = vmatprep.subr.mxu0 0.0
    %645 = vmatpush2.msra.mxu0 0.0
    %646 = vmatprep.subr.mxu0 0.0
    %647 = vmatpush2.msra.mxu0 0.0
    %648 = vmatprep.subr.mxu0 0.0
    %649 = vmatpush2.msra.mxu0 0.0
    %650 = vmatprep.subr.mxu0 0.0
    %651 = vmatpush2.msra.mxu0 0.0
    %652 = vmatprep.subr.mxu0 0.0
    %653 = vmatpush2.msra.mxu0 0.0
    %654 = vmatprep.subr.mxu0 0.0
    %655 = vmatpush2.msra.mxu0 0.0
    %656 = vmatprep.subr.mxu0 0.0
    %657 = vmatpush2.msra.mxu0 0.0
    %658 = vmatprep.subr.mxu0 0.0
    %659 = vmatpush2.msra.mxu0 0.0
    %660 = vmatprep.subr.mxu0 0.0
    %661 = vmatpush2.msra.mxu0 0.0
    %662 = vmatprep.subr.mxu0 0.0
    %663 = vmatpush2.msra.mxu0 0.0
    %664 = vmatprep.subr.mxu0 0.0
    %665 = vmatpush2.msra.mxu0 0.0
    %666 = vmatprep.subr.mxu0 0.0
    %667 = vmatpush2.msra.mxu0 0.0
    %668 = vmatprep.subr.mxu0 0.0
    %669 = vmatpush2.msra.mxu0 0.0
    %670 = vmatprep.subr.mxu0 0.0
    %671 = vmatpush2.msra.mxu0 0.0
    %672 = vmatprep.subr.mxu0 0.0
    %673 = vmatpush2.msra.mxu0 0.0
    %674 = vmatprep.subr.mxu0 0.0
    %675 = vmatpush2.msra.mxu0 0.0
    %676 = vmatprep.mubr.f32.mxu0 0.0
    %677 = vmatmul.mubr.f32.gmra.mxu0 %v47
    %v678 = vpop.f32.mrf.mxu0
    %v679 = vadd.f32 0.0, %v678
    %v680 = vpop.f32.mrf.mxu0
    %681 = vmatprep.mubr.f32.mxu0 0.0
    %682 = vmatmul.mubr.f32.gmra.mxu0 %v50
    %v683 = vpop.f32.mrf.mxu0
    %v684 = vadd.f32 0.0, %v683
    %v685 = vpop.f32.mrf.mxu0
    %686 = vdwg.mxu0
    %s687 = scalar_lea.vmem %s5, 32
    %v688 = vld [vmem:[%s687] sm:$0xff]
    %v689 = vld [vmem:[%s687 + $0x8] sm:$0xff]
    %v690 = vld [vmem:[%s687 + $0x10] sm:$0xff]
    %v691 = vld [vmem:[%s687 + $0x18] sm:$0xff]
    %692 = vmatprep.subr.mxu0 0.0
    %693 = vmatpush1.msra.mxu0 0.0
    %694 = vmatprep.subr.mxu0 0.0
    %695 = vmatpush1.msra.mxu0 0.0
    %696 = vmatprep.subr.mxu0 0.0
    %697 = vmatpush1.msra.mxu0 0.0
    %698 = vmatprep.subr.mxu0 0.0
    %699 = vmatpush1.msra.mxu0 0.0
    %700 = vmatprep.subr.mxu0 0.0
    %701 = vmatpush1.msra.mxu0 0.0
    %702 = vmatprep.subr.mxu0 0.0
    %703 = vmatpush1.msra.mxu0 0.0
    %704 = vmatprep.subr.mxu0 0.0
    %705 = vmatpush1.msra.mxu0 0.0
    %706 = vmatprep.subr.mxu0 0.0
    %707 = vmatpush1.msra.mxu0 0.0
    %708 = vmatprep.subr.mxu0 0.0
    %709 = vmatpush1.msra.mxu0 0.0
    %710 = vmatprep.subr.mxu0 0.0
    %711 = vmatpush1.msra.mxu0 0.0
    %712 = vmatprep.subr.mxu0 0.0
    %713 = vmatpush1.msra.mxu0 0.0
    %714 = vmatprep.subr.mxu0 0.0
    %715 = vmatpush1.msra.mxu0 0.0
    %716 = vmatprep.subr.mxu0 0.0
    %717 = vmatpush1.msra.mxu0 %v691
    %718 = vmatprep.subr.mxu0 0.0
    %719 = vmatpush1.msra.mxu0 %v690
    %720 = vmatprep.subr.mxu0 0.0
    %721 = vmatpush1.msra.mxu0 %v689
    %722 = vmatprep.subr.mxu0 0.0
    %723 = vmatpush1.msra.mxu0 %v688
    %724 = vmatprep.subr.mxu0 0.0
    %725 = vmatpush2.msra.mxu0 0.0
    %726 = vmatprep.subr.mxu0 0.0
    %727 = vmatpush2.msra.mxu0 0.0
    %728 = vmatprep.subr.mxu0 0.0
    %729 = vmatpush2.msra.mxu0 0.0
    %730 = vmatprep.subr.mxu0 0.0
    %731 = vmatpush2.msra.mxu0 0.0
    %732 = vmatprep.subr.mxu0 0.0
    %733 = vmatpush2.msra.mxu0 0.0
    %734 = vmatprep.subr.mxu0 0.0
    %735 = vmatpush2.msra.mxu0 0.0
    %736 = vmatprep.subr.mxu0 0.0
    %737 = vmatpush2.msra.mxu0 0.0
    %738 = vmatprep.subr.mxu0 0.0
    %739 = vmatpush2.msra.mxu0 0.0
    %740 = vmatprep.subr.mxu0 0.0
    %741 = vmatpush2.msra.mxu0 0.0
    %742 = vmatprep.subr.mxu0 0.0
    %743 = vmatpush2.msra.mxu0 0.0
    %744 = vmatprep.subr.mxu0 0.0
    %745 = vmatpush2.msra.mxu0 0.0
    %746 = vmatprep.subr.mxu0 0.0
    %747 = vmatpush2.msra.mxu0 0.0
    %748 = vmatprep.subr.mxu0 0.0
    %749 = vmatpush2.msra.mxu0 0.0
    %750 = vmatprep.subr.mxu0 0.0
    %751 = vmatpush2.msra.mxu0 0.0
    %752 = vmatprep.subr.mxu0 0.0
    %753 = vmatpush2.msra.mxu0 0.0
    %754 = vmatprep.subr.mxu0 0.0
    %755 = vmatpush2.msra.mxu0 0.0
    %756 = vmatprep.mubr.f32.mxu0 0.0
    %757 = vmatmul.mubr.f32.gmra.mxu0 %v132
    %v758 = vpop.f32.mrf.mxu0
    %v759 = vadd.f32 0.0, %v758
    %v760 = vpop.f32.mrf.mxu0
    %761 = vmatprep.mubr.f32.mxu0 0.0
    %762 = vmatmul.mubr.f32.gmra.mxu0 %v135
    %v763 = vpop.f32.mrf.mxu0
    %v764 = vadd.f32 0.0, %v763
    %v765 = vpop.f32.mrf.mxu0
    %766 = vdwg.mxu0
    %s767 = scalar_lea.vmem %s6, 32
    %v768 = vld [vmem:[%s767] sm:$0xff]
    %v769 = vld [vmem:[%s767 + $0x8] sm:$0xff]
    %v770 = vld [vmem:[%s767 + $0x10] sm:$0xff]
    %v771 = vld [vmem:[%s767 + $0x18] sm:$0xff]
    %772 = vmatprep.subr.mxu0 0.0
    %773 = vmatpush1.msra.mxu0 0.0
    %774 = vmatprep.subr.mxu0 0.0
    %775 = vmatpush1.msra.mxu0 0.0
    %776 = vmatprep.subr.mxu0 0.0
    %777 = vmatpush1.msra.mxu0 0.0
    %778 = vmatprep.subr.mxu0 0.0
    %779 = vmatpush1.msra.mxu0 0.0
    %780 = vmatprep.subr.mxu0 0.0
    %781 = vmatpush1.msra.mxu0 0.0
    %782 = vmatprep.subr.mxu0 0.0
    %783 = vmatpush1.msra.mxu0 0.0
    %784 = vmatprep.subr.mxu0 0.0
    %785 = vmatpush1.msra.mxu0 0.0
    %786 = vmatprep.subr.mxu0 0.0
    %787 = vmatpush1.msra.mxu0 0.0
    %788 = vmatprep.subr.mxu0 0.0
    %789 = vmatpush1.msra.mxu0 0.0
    %790 = vmatprep.subr.mxu0 0.0
    %791 = vmatpush1.msra.mxu0 0.0
    %792 = vmatprep.subr.mxu0 0.0
    %793 = vmatpush1.msra.mxu0 0.0
    %794 = vmatprep.subr.mxu0 0.0
    %795 = vmatpush1.msra.mxu0 0.0
    %796 = vmatprep.subr.mxu0 0.0
    %797 = vmatpush1.msra.mxu0 %v771
    %798 = vmatprep.subr.mxu0 0.0
    %799 = vmatpush1.msra.mxu0 %v770
    %800 = vmatprep.subr.mxu0 0.0
    %801 = vmatpush1.msra.mxu0 %v769
    %802 = vmatprep.subr.mxu0 0.0
    %803 = vmatpush1.msra.mxu0 %v768
    %804 = vmatprep.subr.mxu0 0.0
    %805 = vmatpush2.msra.mxu0 0.0
    %806 = vmatprep.subr.mxu0 0.0
    %807 = vmatpush2.msra.mxu0 0.0
    %808 = vmatprep.subr.mxu0 0.0
    %809 = vmatpush2.msra.mxu0 0.0
    %810 = vmatprep.subr.mxu0 0.0
    %811 = vmatpush2.msra.mxu0 0.0
    %812 = vmatprep.subr.mxu0 0.0
    %813 = vmatpush2.msra.mxu0 0.0
    %814 = vmatprep.subr.mxu0 0.0
    %815 = vmatpush2.msra.mxu0 0.0
    %816 = vmatprep.subr.mxu0 0.0
    %817 = vmatpush2.msra.mxu0 0.0
    %818 = vmatprep.subr.mxu0 0.0
    %819 = vmatpush2.msra.mxu0 0.0
    %820 = vmatprep.subr.mxu0 0.0
    %821 = vmatpush2.msra.mxu0 0.0
    %822 = vmatprep.subr.mxu0 0.0
    %823 = vmatpush2.msra.mxu0 0.0
    %824 = vmatprep.subr.mxu0 0.0
    %825 = vmatpush2.msra.mxu0 0.0
    %826 = vmatprep.subr.mxu0 0.0
    %827 = vmatpush2.msra.mxu0 0.0
    %828 = vmatprep.subr.mxu0 0.0
    %829 = vmatpush2.msra.mxu0 0.0
    %830 = vmatprep.subr.mxu0 0.0
    %831 = vmatpush2.msra.mxu0 0.0
    %832 = vmatprep.subr.mxu0 0.0
    %833 = vmatpush2.msra.mxu0 0.0
    %834 = vmatprep.subr.mxu0 0.0
    %835 = vmatpush2.msra.mxu0 0.0
    %836 = vmatprep.mubr.f32.mxu0 0.0
    %837 = vmatmul.mubr.f32.gmra.mxu0 %v132
    %v838 = vpop.f32.mrf.mxu0
    %v839 = vadd.f32 0.0, %v838
    %v840 = vpop.f32.mrf.mxu0
    %841 = vmatprep.mubr.f32.mxu0 0.0
    %842 = vmatmul.mubr.f32.gmra.mxu0 %v135
    %v843 = vpop.f32.mrf.mxu0
    %v844 = vadd.f32 0.0, %v843
    %v845 = vpop.f32.mrf.mxu0
    %846 = vdwg.mxu0
    %s847 = scalar_lea.vmem %s7, 16
    %v848 = vld [vmem:[%s847] sm:$0xff]
    %v849 = vld [vmem:[%s847 + $0x8] sm:$0xff]
    %v851 = vsel %vm293, %v679, 0
    %v854 = vsel %vm293, %v759, 0
    %856 = vmatprep.subr.mxu0 0.0
    %857 = vmatpush1.xpose.msra.mxu0 0.0
    %858 = vmatprep.subr.mxu0 0.0
    %859 = vmatpush1.xpose.msra.mxu0 0.0
    %860 = vmatprep.subr.mxu0 0.0
    %861 = vmatpush1.xpose.msra.mxu0 0.0
    %862 = vmatprep.subr.mxu0 0.0
    %863 = vmatpush1.xpose.msra.mxu0 0.0
    %864 = vmatprep.subr.mxu0 0.0
    %865 = vmatpush1.xpose.msra.mxu0 0.0
    %866 = vmatprep.subr.mxu0 0.0
    %867 = vmatpush1.xpose.msra.mxu0 0.0
    %868 = vmatprep.subr.mxu0 0.0
    %869 = vmatpush1.xpose.msra.mxu0 0.0
    %870 = vmatprep.subr.mxu0 0.0
    %871 = vmatpush1.xpose.msra.mxu0 0.0
    %872 = vmatprep.subr.mxu0 0.0
    %873 = vmatpush1.xpose.msra.mxu0 0.0
    %874 = vmatprep.subr.mxu0 0.0
    %875 = vmatpush1.xpose.msra.mxu0 0.0
    %876 = vmatprep.subr.mxu0 0.0
    %877 = vmatpush1.xpose.msra.mxu0 0.0
    %878 = vmatprep.subr.mxu0 0.0
    %879 = vmatpush1.xpose.msra.mxu0 0.0
    %880 = vmatprep.subr.mxu0 0.0
    %881 = vmatpush1.xpose.msra.mxu0 0.0
    %882 = vmatprep.subr.mxu0 0.0
    %883 = vmatpush1.xpose.msra.mxu0 0.0
    %884 = vmatprep.subr.mxu0 0.0
    %885 = vmatpush1.xpose.msra.mxu0 0.0
    %886 = vmatprep.subr.mxu0 0.0
    %887 = vmatpush1.xpose.msra.mxu0 %v854
    %888 = vmatprep.subr.mxu0 0.0
    %889 = vmatpush2.xpose.msra.mxu0 0.0
    %890 = vmatprep.subr.mxu0 0.0
    %891 = vmatpush2.xpose.msra.mxu0 0.0
    %892 = vmatprep.subr.mxu0 0.0
    %893 = vmatpush2.xpose.msra.mxu0 0.0
    %894 = vmatprep.subr.mxu0 0.0
    %895 = vmatpush2.xpose.msra.mxu0 0.0
    %896 = vmatprep.subr.mxu0 0.0
    %897 = vmatpush2.xpose.msra.mxu0 0.0
    %898 = vmatprep.subr.mxu0 0.0
    %899 = vmatpush2.xpose.msra.mxu0 0.0
    %900 = vmatprep.subr.mxu0 0.0
    %901 = vmatpush2.xpose.msra.mxu0 0.0
    %902 = vmatprep.subr.mxu0 0.0
    %903 = vmatpush2.xpose.msra.mxu0 0.0
    %904 = vmatprep.subr.mxu0 0.0
    %905 = vmatpush2.xpose.msra.mxu0 0.0
    %906 = vmatprep.subr.mxu0 0.0
    %907 = vmatpush2.xpose.msra.mxu0 0.0
    %908 = vmatprep.subr.mxu0 0.0
    %909 = vmatpush2.xpose.msra.mxu0 0.0
    %910 = vmatprep.subr.mxu0 0.0
    %911 = vmatpush2.xpose.msra.mxu0 0.0
    %912 = vmatprep.subr.mxu0 0.0
    %913 = vmatpush2.xpose.msra.mxu0 0.0
    %914 = vmatprep.subr.mxu0 0.0
    %915 = vmatpush2.xpose.msra.mxu0 0.0
    %916 = vmatprep.subr.mxu0 0.0
    %917 = vmatpush2.xpose.msra.mxu0 0.0
    %918 = vmatprep.subr.mxu0 0.0
    %919 = vmatpush2.xpose.msra.mxu0 0.0
    %920 = vmatprep.mubr.f32.mxu0 0.0
    %921 = vmatmul.mubr.f32.gmra.mxu0 %v851
    %v922 = vpop.f32.mrf.mxu0
    %v923 = vadd.f32 0.0, %v922
    %v924 = vpop.f32.mrf.mxu0
    %925 = vdwg.mxu0
    %v926 = vmul.f32 %v923, 1.442695
    %v927 = vpow.pop %v926
    %v928 = vsel %vm372, %v927, 0.0
    %929 = vadd.xlane.f32.xlu0 %v928
    %v930 = vpop.xlane.xlu0 %929
    %v931 = vrcp.pop %v930
    %v932 = vmul.f32 %v927, %v931
    %v934 = vsel %vm372, %v932, 0
    %936 = vmatprep.subr.mxu0 0.0
    %937 = vmatpush1.msra.mxu0 0.0
    %938 = vmatprep.subr.mxu0 0.0
    %939 = vmatpush1.msra.mxu0 0.0
    %940 = vmatprep.subr.mxu0 0.0
    %941 = vmatpush1.msra.mxu0 0.0
    %942 = vmatprep.subr.mxu0 0.0
    %943 = vmatpush1.msra.mxu0 0.0
    %944 = vmatprep.subr.mxu0 0.0
    %945 = vmatpush1.msra.mxu0 0.0
    %946 = vmatprep.subr.mxu0 0.0
    %947 = vmatpush1.msra.mxu0 0.0
    %948 = vmatprep.subr.mxu0 0.0
    %949 = vmatpush1.msra.mxu0 0.0
    %950 = vmatprep.subr.mxu0 0.0
    %951 = vmatpush1.msra.mxu0 0.0
    %952 = vmatprep.subr.mxu0 0.0
    %953 = vmatpush1.msra.mxu0 0.0
    %954 = vmatprep.subr.mxu0 0.0
    %955 = vmatpush1.msra.mxu0 0.0
    %956 = vmatprep.subr.mxu0 0.0
    %957 = vmatpush1.msra.mxu0 0.0
    %958 = vmatprep.subr.mxu0 0.0
    %959 = vmatpush1.msra.mxu0 0.0
    %960 = vmatprep.subr.mxu0 0.0
    %961 = vmatpush1.msra.mxu0 0.0
    %962 = vmatprep.subr.mxu0 0.0
    %963 = vmatpush1.msra.mxu0 0.0
    %964 = vmatprep.subr.mxu0 0.0
    %965 = vmatpush1.msra.mxu0 0.0
    %966 = vmatprep.subr.mxu0 0.0
    %967 = vmatpush1.msra.mxu0 %v839
    %968 = vmatprep.subr.mxu0 0.0
    %969 = vmatpush2.msra.mxu0 0.0
    %970 = vmatprep.subr.mxu0 0.0
    %971 = vmatpush2.msra.mxu0 0.0
    %972 = vmatprep.subr.mxu0 0.0
    %973 = vmatpush2.msra.mxu0 0.0
    %974 = vmatprep.subr.mxu0 0.0
    %975 = vmatpush2.msra.mxu0 0.0
    %976 = vmatprep.subr.mxu0 0.0
    %977 = vmatpush2.msra.mxu0 0.0
    %978 = vmatprep.subr.mxu0 0.0
    %979 = vmatpush2.msra.mxu0 0.0
    %980 = vmatprep.subr.mxu0 0.0
    %981 = vmatpush2.msra.mxu0 0.0
    %982 = vmatprep.subr.mxu0 0.0
    %983 = vmatpush2.msra.mxu0 0.0
    %984 = vmatprep.subr.mxu0 0.0
    %985 = vmatpush2.msra.mxu0 0.0
    %986 = vmatprep.subr.mxu0 0.0
    %987 = vmatpush2.msra.mxu0 0.0
    %988 = vmatprep.subr.mxu0 0.0
    %989 = vmatpush2.msra.mxu0 0.0
    %990 = vmatprep.subr.mxu0 0.0
    %991 = vmatpush2.msra.mxu0 0.0
    %992 = vmatprep.subr.mxu0 0.0
    %993 = vmatpush2.msra.mxu0 0.0
    %994 = vmatprep.subr.mxu0 0.0
    %995 = vmatpush2.msra.mxu0 0.0
    %996 = vmatprep.subr.mxu0 0.0
    %997 = vmatpush2.msra.mxu0 0.0
    %998 = vmatprep.subr.mxu0 0.0
    %999 = vmatpush2.msra.mxu0 0.0
    %1000 = vmatprep.mubr.f32.mxu0 0.0
    %1001 = vmatmul.mubr.f32.gmra.mxu0 %v934
    %v1002 = vpop.f32.mrf.mxu0
    %v1003 = vadd.f32 0.0, %v1002
    %v1004 = vpop.f32.mrf.mxu0
    %1005 = vdwg.mxu0
    %v1007 = vsel %vm293, %v1003, 0
    %1009 = vmatprep.subr.mxu0 0.0
    %1010 = vmatpush1.msra.mxu0 0.0
    %1011 = vmatprep.subr.mxu0 0.0
    %1012 = vmatpush1.msra.mxu0 0.0
    %1013 = vmatprep.subr.mxu0 0.0
    %1014 = vmatpush1.msra.mxu0 0.0
    %1015 = vmatprep.subr.mxu0 0.0
    %1016 = vmatpush1.msra.mxu0 0.0
    %1017 = vmatprep.subr.mxu0 0.0
    %1018 = vmatpush1.msra.mxu0 0.0
    %1019 = vmatprep.subr.mxu0 0.0
    %1020 = vmatpush1.msra.mxu0 0.0
    %1021 = vmatprep.subr.mxu0 0.0
    %1022 = vmatpush1.msra.mxu0 0.0
    %1023 = vmatprep.subr.mxu0 0.0
    %1024 = vmatpush1.msra.mxu0 0.0
    %1025 = vmatprep.subr.mxu0 0.0
    %1026 = vmatpush1.msra.mxu0 0.0
    %1027 = vmatprep.subr.mxu0 0.0
    %1028 = vmatpush1.msra.mxu0 0.0
    %1029 = vmatprep.subr.mxu0 0.0
    %1030 = vmatpush1.msra.mxu0 0.0
    %1031 = vmatprep.subr.mxu0 0.0
    %1032 = vmatpush1.msra.mxu0 0.0
    %1033 = vmatprep.subr.mxu0 0.0
    %1034 = vmatpush1.msra.mxu0 0.0
    %1035 = vmatprep.subr.mxu0 0.0
    %1036 = vmatpush1.msra.mxu0 0.0
    %1037 = vmatprep.subr.mxu0 0.0
    %1038 = vmatpush1.msra.mxu0 %v849
    %1039 = vmatprep.subr.mxu0 0.0
    %1040 = vmatpush1.msra.mxu0 %v848
    %1041 = vmatprep.subr.mxu0 0.0
    %1042 = vmatpush2.msra.mxu0 0.0
    %1043 = vmatprep.subr.mxu0 0.0
    %1044 = vmatpush2.msra.mxu0 0.0
    %1045 = vmatprep.subr.mxu0 0.0
    %1046 = vmatpush2.msra.mxu0 0.0
    %1047 = vmatprep.subr.mxu0 0.0
    %1048 = vmatpush2.msra.mxu0 0.0
    %1049 = vmatprep.subr.mxu0 0.0
    %1050 = vmatpush2.msra.mxu0 0.0
    %1051 = vmatprep.subr.mxu0 0.0
    %1052 = vmatpush2.msra.mxu0 0.0
    %1053 = vmatprep.subr.mxu0 0.0
    %1054 = vmatpush2.msra.mxu0 0.0
    %1055 = vmatprep.subr.mxu0 0.0
    %1056 = vmatpush2.msra.mxu0 0.0
    %1057 = vmatprep.subr.mxu0 0.0
    %1058 = vmatpush2.msra.mxu0 0.0
    %1059 = vmatprep.subr.mxu0 0.0
    %1060 = vmatpush2.msra.mxu0 0.0
    %1061 = vmatprep.subr.mxu0 0.0
    %1062 = vmatpush2.msra.mxu0 0.0
    %1063 = vmatprep.subr.mxu0 0.0
    %1064 = vmatpush2.msra.mxu0 0.0
    %1065 = vmatprep.subr.mxu0 0.0
    %1066 = vmatpush2.msra.mxu0 0.0
    %1067 = vmatprep.subr.mxu0 0.0
    %1068 = vmatpush2.msra.mxu0 0.0
    %1069 = vmatprep.subr.mxu0 0.0
    %1070 = vmatpush2.msra.mxu0 0.0
    %1071 = vmatprep.subr.mxu0 0.0
    %1072 = vmatpush2.msra.mxu0 0.0
    %1073 = vmatprep.mubr.f32.mxu0 0.0
    %1074 = vmatmul.mubr.f32.gmra.mxu0 %v1007
    %v1075 = vpop.f32.mrf.mxu0
    %v1076 = vadd.f32 0.0, %v1075
    %v1077 = vpop.f32.mrf.mxu0
    %1078 = vdwg.mxu0
    %v1080 = vsel %vm293, %v448, 0
    %1082 = vmatprep.subr.mxu0 0.0
    %1083 = vmatpush1.msra.mxu0 0.0
    %1084 = vmatprep.subr.mxu0 0.0
    %1085 = vmatpush1.msra.mxu0 0.0
    %1086 = vmatprep.subr.mxu0 0.0
    %1087 = vmatpush1.msra.mxu0 0.0
    %1088 = vmatprep.subr.mxu0 0.0
    %1089 = vmatpush1.msra.mxu0 0.0
    %1090 = vmatprep.subr.mxu0 0.0
    %1091 = vmatpush1.msra.mxu0 0.0
    %1092 = vmatprep.subr.mxu0 0.0
    %1093 = vmatpush1.msra.mxu0 0.0
    %1094 = vmatprep.subr.mxu0 0.0
    %1095 = vmatpush1.msra.mxu0 0.0
    %1096 = vmatprep.subr.mxu0 0.0
    %1097 = vmatpush1.msra.mxu0 0.0
    %1098 = vmatprep.subr.mxu0 0.0
    %1099 = vmatpush1.msra.mxu0 0.0
    %1100 = vmatprep.subr.mxu0 0.0
    %1101 = vmatpush1.msra.mxu0 0.0
    %1102 = vmatprep.subr.mxu0 0.0
    %1103 = vmatpush1.msra.mxu0 0.0
    %1104 = vmatprep.subr.mxu0 0.0
    %1105 = vmatpush1.msra.mxu0 0.0
    %1106 = vmatprep.subr.mxu0 0.0
    %1107 = vmatpush1.msra.mxu0 0.0
    %1108 = vmatprep.subr.mxu0 0.0
    %1109 = vmatpush1.msra.mxu0 0.0
    %1110 = vmatprep.subr.mxu0 0.0
    %1111 = vmatpush1.msra.mxu0 %v292
    %1112 = vmatprep.subr.mxu0 0.0
    %1113 = vmatpush1.msra.mxu0 %v291
    %1114 = vmatprep.subr.mxu0 0.0
    %1115 = vmatpush2.msra.mxu0 0.0
    %1116 = vmatprep.subr.mxu0 0.0
    %1117 = vmatpush2.msra.mxu0 0.0
    %1118 = vmatprep.subr.mxu0 0.0
    %1119 = vmatpush2.msra.mxu0 0.0
    %1120 = vmatprep.subr.mxu0 0.0
    %1121 = vmatpush2.msra.mxu0 0.0
    %1122 = vmatprep.subr.mxu0 0.0
    %1123 = vmatpush2.msra.mxu0 0.0
    %1124 = vmatprep.subr.mxu0 0.0
    %1125 = vmatpush2.msra.mxu0 0.0
    %1126 = vmatprep.subr.mxu0 0.0
    %1127 = vmatpush2.msra.mxu0 0.0
    %1128 = vmatprep.subr.mxu0 0.0
    %1129 = vmatpush2.msra.mxu0 0.0
    %1130 = vmatprep.subr.mxu0 0.0
    %1131 = vmatpush2.msra.mxu0 0.0
    %1132 = vmatprep.subr.mxu0 0.0
    %1133 = vmatpush2.msra.mxu0 0.0
    %1134 = vmatprep.subr.mxu0 0.0
    %1135 = vmatpush2.msra.mxu0 0.0
    %1136 = vmatprep.subr.mxu0 0.0
    %1137 = vmatpush2.msra.mxu0 0.0
    %1138 = vmatprep.subr.mxu0 0.0
    %1139 = vmatpush2.msra.mxu0 0.0
    %1140 = vmatprep.subr.mxu0 0.0
    %1141 = vmatpush2.msra.mxu0 0.0
    %1142 = vmatprep.subr.mxu0 0.0
    %1143 = vmatpush2.msra.mxu0 0.0
    %1144 = vmatprep.subr.mxu0 0.0
    %1145 = vmatpush2.msra.mxu0 0.0
    %1146 = vmatprep.mubr.f32.mxu0 0.0
    %1147 = vmatmul.mubr.f32.gmra.mxu0 %v1080
    %v1148 = vpop.f32.mrf.mxu0
    %v1149 = vadd.f32 %v1076, %v1148
    %v1150 = vpop.f32.mrf.mxu0
    %1151 = vdwg.mxu0
    %v1153 = vsel %vm293, %v684, 0
    %v1156 = vsel %vm293, %v764, 0
    %1158 = vmatprep.subr.mxu0 0.0
    %1159 = vmatpush1.xpose.msra.mxu0 0.0
    %1160 = vmatprep.subr.mxu0 0.0
    %1161 = vmatpush1.xpose.msra.mxu0 0.0
    %1162 = vmatprep.subr.mxu0 0.0
    %1163 = vmatpush1.xpose.msra.mxu0 0.0
    %1164 = vmatprep.subr.mxu0 0.0
    %1165 = vmatpush1.xpose.msra.mxu0 0.0
    %1166 = vmatprep.subr.mxu0 0.0
    %1167 = vmatpush1.xpose.msra.mxu0 0.0
    %1168 = vmatprep.subr.mxu0 0.0
    %1169 = vmatpush1.xpose.msra.mxu0 0.0
    %1170 = vmatprep.subr.mxu0 0.0
    %1171 = vmatpush1.xpose.msra.mxu0 0.0
    %1172 = vmatprep.subr.mxu0 0.0
    %1173 = vmatpush1.xpose.msra.mxu0 0.0
    %1174 = vmatprep.subr.mxu0 0.0
    %1175 = vmatpush1.xpose.msra.mxu0 0.0
    %1176 = vmatprep.subr.mxu0 0.0
    %1177 = vmatpush1.xpose.msra.mxu0 0.0
    %1178 = vmatprep.subr.mxu0 0.0
    %1179 = vmatpush1.xpose.msra.mxu0 0.0
    %1180 = vmatprep.subr.mxu0 0.0
    %1181 = vmatpush1.xpose.msra.mxu0 0.0
    %1182 = vmatprep.subr.mxu0 0.0
    %1183 = vmatpush1.xpose.msra.mxu0 0.0
    %1184 = vmatprep.subr.mxu0 0.0
    %1185 = vmatpush1.xpose.msra.mxu0 0.0
    %1186 = vmatprep.subr.mxu0 0.0
    %1187 = vmatpush1.xpose.msra.mxu0 0.0
    %1188 = vmatprep.subr.mxu0 0.0
    %1189 = vmatpush1.xpose.msra.mxu0 %v1156
    %1190 = vmatprep.subr.mxu0 0.0
    %1191 = vmatpush2.xpose.msra.mxu0 0.0
    %1192 = vmatprep.subr.mxu0 0.0
    %1193 = vmatpush2.xpose.msra.mxu0 0.0
    %1194 = vmatprep.subr.mxu0 0.0
    %1195 = vmatpush2.xpose.msra.mxu0 0.0
    %1196 = vmatprep.subr.mxu0 0.0
    %1197 = vmatpush2.xpose.msra.mxu0 0.0
    %1198 = vmatprep.subr.mxu0 0.0
    %1199 = vmatpush2.xpose.msra.mxu0 0.0
    %1200 = vmatprep.subr.mxu0 0.0
    %1201 = vmatpush2.xpose.msra.mxu0 0.0
    %1202 = vmatprep.subr.mxu0 0.0
    %1203 = vmatpush2.xpose.msra.mxu0 0.0
    %1204 = vmatprep.subr.mxu0 0.0
    %1205 = vmatpush2.xpose.msra.mxu0 0.0
    %1206 = vmatprep.subr.mxu0 0.0
    %1207 = vmatpush2.xpose.msra.mxu0 0.0
    %1208 = vmatprep.subr.mxu0 0.0
    %1209 = vmatpush2.xpose.msra.mxu0 0.0
    %1210 = vmatprep.subr.mxu0 0.0
    %1211 = vmatpush2.xpose.msra.mxu0 0.0
    %1212 = vmatprep.subr.mxu0 0.0
    %1213 = vmatpush2.xpose.msra.mxu0 0.0
    %1214 = vmatprep.subr.mxu0 0.0
    %1215 = vmatpush2.xpose.msra.mxu0 0.0
    %1216 = vmatprep.subr.mxu0 0.0
    %1217 = vmatpush2.xpose.msra.mxu0 0.0
    %1218 = vmatprep.subr.mxu0 0.0
    %1219 = vmatpush2.xpose.msra.mxu0 0.0
    %1220 = vmatprep.subr.mxu0 0.0
    %1221 = vmatpush2.xpose.msra.mxu0 0.0
    %1222 = vmatprep.mubr.f32.mxu0 0.0
    %1223 = vmatmul.mubr.f32.gmra.mxu0 %v1153
    %v1224 = vpop.f32.mrf.mxu0
    %v1225 = vadd.f32 0.0, %v1224
    %v1226 = vpop.f32.mrf.mxu0
    %1227 = vdwg.mxu0
    %v1228 = vmul.f32 %v1225, 1.442695
    %v1229 = vpow.pop %v1228
    %v1230 = vsel %vm372, %v1229, 0.0
    %1231 = vadd.xlane.f32.xlu0 %v1230
    %v1232 = vpop.xlane.xlu0 %1231
    %v1233 = vrcp.pop %v1232
    %v1234 = vmul.f32 %v1229, %v1233
    %v1236 = vsel %vm372, %v1234, 0
    %1238 = vmatprep.subr.mxu0 0.0
    %1239 = vmatpush1.msra.mxu0 0.0
    %1240 = vmatprep.subr.mxu0 0.0
    %1241 = vmatpush1.msra.mxu0 0.0
    %1242 = vmatprep.subr.mxu0 0.0
    %1243 = vmatpush1.msra.mxu0 0.0
    %1244 = vmatprep.subr.mxu0 0.0
    %1245 = vmatpush1.msra.mxu0 0.0
    %1246 = vmatprep.subr.mxu0 0.0
    %1247 = vmatpush1.msra.mxu0 0.0
    %1248 = vmatprep.subr.mxu0 0.0
    %1249 = vmatpush1.msra.mxu0 0.0
    %1250 = vmatprep.subr.mxu0 0.0
    %1251 = vmatpush1.msra.mxu0 0.0
    %1252 = vmatprep.subr.mxu0 0.0
    %1253 = vmatpush1.msra.mxu0 0.0
    %1254 = vmatprep.subr.mxu0 0.0
    %1255 = vmatpush1.msra.mxu0 0.0
    %1256 = vmatprep.subr.mxu0 0.0
    %1257 = vmatpush1.msra.mxu0 0.0
    %1258 = vmatprep.subr.mxu0 0.0
    %1259 = vmatpush1.msra.mxu0 0.0
    %1260 = vmatprep.subr.mxu0 0.0
    %1261 = vmatpush1.msra.mxu0 0.0
    %1262 = vmatprep.subr.mxu0 0.0
    %1263 = vmatpush1.msra.mxu0 0.0
    %1264 = vmatprep.subr.mxu0 0.0
    %1265 = vmatpush1.msra.mxu0 0.0
    %1266 = vmatprep.subr.mxu0 0.0
    %1267 = vmatpush1.msra.mxu0 0.0
    %1268 = vmatprep.subr.mxu0 0.0
    %1269 = vmatpush1.msra.mxu0 %v844
    %1270 = vmatprep.subr.mxu0 0.0
    %1271 = vmatpush2.msra.mxu0 0.0
    %1272 = vmatprep.subr.mxu0 0.0
    %1273 = vmatpush2.msra.mxu0 0.0
    %1274 = vmatprep.subr.mxu0 0.0
    %1275 = vmatpush2.msra.mxu0 0.0
    %1276 = vmatprep.subr.mxu0 0.0
    %1277 = vmatpush2.msra.mxu0 0.0
    %1278 = vmatprep.subr.mxu0 0.0
    %1279 = vmatpush2.msra.mxu0 0.0
    %1280 = vmatprep.subr.mxu0 0.0
    %1281 = vmatpush2.msra.mxu0 0.0
    %1282 = vmatprep.subr.mxu0 0.0
    %1283 = vmatpush2.msra.mxu0 0.0
    %1284 = vmatprep.subr.mxu0 0.0
    %1285 = vmatpush2.msra.mxu0 0.0
    %1286 = vmatprep.subr.mxu0 0.0
    %1287 = vmatpush2.msra.mxu0 0.0
    %1288 = vmatprep.subr.mxu0 0.0
    %1289 = vmatpush2.msra.mxu0 0.0
    %1290 = vmatprep.subr.mxu0 0.0
    %1291 = vmatpush2.msra.mxu0 0.0
    %1292 = vmatprep.subr.mxu0 0.0
    %1293 = vmatpush2.msra.mxu0 0.0
    %1294 = vmatprep.subr.mxu0 0.0
    %1295 = vmatpush2.msra.mxu0 0.0
    %1296 = vmatprep.subr.mxu0 0.0
    %1297 = vmatpush2.msra.mxu0 0.0
    %1298 = vmatprep.subr.mxu0 0.0
    %1299 = vmatpush2.msra.mxu0 0.0
    %1300 = vmatprep.subr.mxu0 0.0
    %1301 = vmatpush2.msra.mxu0 0.0
    %1302 = vmatprep.mubr.f32.mxu0 0.0
    %1303 = vmatmul.mubr.f32.gmra.mxu0 %v1236
    %v1304 = vpop.f32.mrf.mxu0
    %v1305 = vadd.f32 0.0, %v1304
    %v1306 = vpop.f32.mrf.mxu0
    %1307 = vdwg.mxu0
    %v1309 = vsel %vm293, %v1305, 0
    %1311 = vmatprep.subr.mxu0 0.0
    %1312 = vmatpush1.msra.mxu0 0.0
    %1313 = vmatprep.subr.mxu0 0.0
    %1314 = vmatpush1.msra.mxu0 0.0
    %1315 = vmatprep.subr.mxu0 0.0
    %1316 = vmatpush1.msra.mxu0 0.0
    %1317 = vmatprep.subr.mxu0 0.0
    %1318 = vmatpush1.msra.mxu0 0.0
    %1319 = vmatprep.subr.mxu0 0.0
    %1320 = vmatpush1.msra.mxu0 0.0
    %1321 = vmatprep.subr.mxu0 0.0
    %1322 = vmatpush1.msra.mxu0 0.0
    %1323 = vmatprep.subr.mxu0 0.0
    %1324 = vmatpush1.msra.mxu0 0.0
    %1325 = vmatprep.subr.mxu0 0.0
    %1326 = vmatpush1.msra.mxu0 0.0
    %1327 = vmatprep.subr.mxu0 0.0
    %1328 = vmatpush1.msra.mxu0 0.0
    %1329 = vmatprep.subr.mxu0 0.0
    %1330 = vmatpush1.msra.mxu0 0.0
    %1331 = vmatprep.subr.mxu0 0.0
    %1332 = vmatpush1.msra.mxu0 0.0
    %1333 = vmatprep.subr.mxu0 0.0
    %1334 = vmatpush1.msra.mxu0 0.0
    %1335 = vmatprep.subr.mxu0 0.0
    %1336 = vmatpush1.msra.mxu0 0.0
    %1337 = vmatprep.subr.mxu0 0.0
    %1338 = vmatpush1.msra.mxu0 0.0
    %1339 = vmatprep.subr.mxu0 0.0
    %1340 = vmatpush1.msra.mxu0 %v849
    %1341 = vmatprep.subr.mxu0 0.0
    %1342 = vmatpush1.msra.mxu0 %v848
    %1343 = vmatprep.subr.mxu0 0.0
    %1344 = vmatpush2.msra.mxu0 0.0
    %1345 = vmatprep.subr.mxu0 0.0
    %1346 = vmatpush2.msra.mxu0 0.0
    %1347 = vmatprep.subr.mxu0 0.0
    %1348 = vmatpush2.msra.mxu0 0.0
    %1349 = vmatprep.subr.mxu0 0.0
    %1350 = vmatpush2.msra.mxu0 0.0
    %1351 = vmatprep.subr.mxu0 0.0
    %1352 = vmatpush2.msra.mxu0 0.0
    %1353 = vmatprep.subr.mxu0 0.0
    %1354 = vmatpush2.msra.mxu0 0.0
    %1355 = vmatprep.subr.mxu0 0.0
    %1356 = vmatpush2.msra.mxu0 0.0
    %1357 = vmatprep.subr.mxu0 0.0
    %1358 = vmatpush2.msra.mxu0 0.0
    %1359 = vmatprep.subr.mxu0 0.0
    %1360 = vmatpush2.msra.mxu0 0.0
    %1361 = vmatprep.subr.mxu0 0.0
    %1362 = vmatpush2.msra.mxu0 0.0
    %1363 = vmatprep.subr.mxu0 0.0
    %1364 = vmatpush2.msra.mxu0 0.0
    %1365 = vmatprep.subr.mxu0 0.0
    %1366 = vmatpush2.msra.mxu0 0.0
    %1367 = vmatprep.subr.mxu0 0.0
    %1368 = vmatpush2.msra.mxu0 0.0
    %1369 = vmatprep.subr.mxu0 0.0
    %1370 = vmatpush2.msra.mxu0 0.0
    %1371 = vmatprep.subr.mxu0 0.0
    %1372 = vmatpush2.msra.mxu0 0.0
    %1373 = vmatprep.subr.mxu0 0.0
    %1374 = vmatpush2.msra.mxu0 0.0
    %1375 = vmatprep.mubr.f32.mxu0 0.0
    %1376 = vmatmul.mubr.f32.gmra.mxu0 %v1309
    %v1377 = vpop.f32.mrf.mxu0
    %v1378 = vadd.f32 0.0, %v1377
    %v1379 = vpop.f32.mrf.mxu0
    %1380 = vdwg.mxu0
    %v1382 = vsel %vm293, %v604, 0
    %1384 = vmatprep.subr.mxu0 0.0
    %1385 = vmatpush1.msra.mxu0 0.0
    %1386 = vmatprep.subr.mxu0 0.0
    %1387 = vmatpush1.msra.mxu0 0.0
    %1388 = vmatprep.subr.mxu0 0.0
    %1389 = vmatpush1.msra.mxu0 0.0
    %1390 = vmatprep.subr.mxu0 0.0
    %1391 = vmatpush1.msra.mxu0 0.0
    %1392 = vmatprep.subr.mxu0 0.0
    %1393 = vmatpush1.msra.mxu0 0.0
    %1394 = vmatprep.subr.mxu0 0.0
    %1395 = vmatpush1.msra.mxu0 0.0
    %1396 = vmatprep.subr.mxu0 0.0
    %1397 = vmatpush1.msra.mxu0 0.0
    %1398 = vmatprep.subr.mxu0 0.0
    %1399 = vmatpush1.msra.mxu0 0.0
    %1400 = vmatprep.subr.mxu0 0.0
    %1401 = vmatpush1.msra.mxu0 0.0
    %1402 = vmatprep.subr.mxu0 0.0
    %1403 = vmatpush1.msra.mxu0 0.0
    %1404 = vmatprep.subr.mxu0 0.0
    %1405 = vmatpush1.msra.mxu0 0.0
    %1406 = vmatprep.subr.mxu0 0.0
    %1407 = vmatpush1.msra.mxu0 0.0
    %1408 = vmatprep.subr.mxu0 0.0
    %1409 = vmatpush1.msra.mxu0 0.0
    %1410 = vmatprep.subr.mxu0 0.0
    %1411 = vmatpush1.msra.mxu0 0.0
    %1412 = vmatprep.subr.mxu0 0.0
    %1413 = vmatpush1.msra.mxu0 %v292
    %1414 = vmatprep.subr.mxu0 0.0
    %1415 = vmatpush1.msra.mxu0 %v291
    %1416 = vmatprep.subr.mxu0 0.0
    %1417 = vmatpush2.msra.mxu0 0.0
    %1418 = vmatprep.subr.mxu0 0.0
    %1419 = vmatpush2.msra.mxu0 0.0
    %1420 = vmatprep.subr.mxu0 0.0
    %1421 = vmatpush2.msra.mxu0 0.0
    %1422 = vmatprep.subr.mxu0 0.0
    %1423 = vmatpush2.msra.mxu0 0.0
    %1424 = vmatprep.subr.mxu0 0.0
    %1425 = vmatpush2.msra.mxu0 0.0
    %1426 = vmatprep.subr.mxu0 0.0
    %1427 = vmatpush2.msra.mxu0 0.0
    %1428 = vmatprep.subr.mxu0 0.0
    %1429 = vmatpush2.msra.mxu0 0.0
    %1430 = vmatprep.subr.mxu0 0.0
    %1431 = vmatpush2.msra.mxu0 0.0
    %1432 = vmatprep.subr.mxu0 0.0
    %1433 = vmatpush2.msra.mxu0 0.0
    %1434 = vmatprep.subr.mxu0 0.0
    %1435 = vmatpush2.msra.mxu0 0.0
    %1436 = vmatprep.subr.mxu0 0.0
    %1437 = vmatpush2.msra.mxu0 0.0
    %1438 = vmatprep.subr.mxu0 0.0
    %1439 = vmatpush2.msra.mxu0 0.0
    %1440 = vmatprep.subr.mxu0 0.0
    %1441 = vmatpush2.msra.mxu0 0.0
    %1442 = vmatprep.subr.mxu0 0.0
    %1443 = vmatpush2.msra.mxu0 0.0
    %1444 = vmatprep.subr.mxu0 0.0
    %1445 = vmatpush2.msra.mxu0 0.0
    %1446 = vmatprep.subr.mxu0 0.0
    %1447 = vmatpush2.msra.mxu0 0.0
    %1448 = vmatprep.mubr.f32.mxu0 0.0
    %1449 = vmatmul.mubr.f32.gmra.mxu0 %v1382
    %v1450 = vpop.f32.mrf.mxu0
    %v1451 = vadd.f32 %v1378, %v1450
    %v1452 = vpop.f32.mrf.mxu0
    %1453 = vdwg.mxu0
    %s1454 = scalar_lea.vmem %s4, 64
    %v1455 = vld [vmem:[%s1454] sm:$0xff]
    %v1456 = vld [vmem:[%s1454 + $0x8] sm:$0xff]
    %v1457 = vld [vmem:[%s1454 + $0x10] sm:$0xff]
    %v1458 = vld [vmem:[%s1454 + $0x18] sm:$0xff]
    %1459 = vmatprep.subr.mxu0 0.0
    %1460 = vmatpush1.msra.mxu0 0.0
    %1461 = vmatprep.subr.mxu0 0.0
    %1462 = vmatpush1.msra.mxu0 0.0
    %1463 = vmatprep.subr.mxu0 0.0
    %1464 = vmatpush1.msra.mxu0 0.0
    %1465 = vmatprep.subr.mxu0 0.0
    %1466 = vmatpush1.msra.mxu0 0.0
    %1467 = vmatprep.subr.mxu0 0.0
    %1468 = vmatpush1.msra.mxu0 0.0
    %1469 = vmatprep.subr.mxu0 0.0
    %1470 = vmatpush1.msra.mxu0 0.0
    %1471 = vmatprep.subr.mxu0 0.0
    %1472 = vmatpush1.msra.mxu0 0.0
    %1473 = vmatprep.subr.mxu0 0.0
    %1474 = vmatpush1.msra.mxu0 0.0
    %1475 = vmatprep.subr.mxu0 0.0
    %1476 = vmatpush1.msra.mxu0 0.0
    %1477 = vmatprep.subr.mxu0 0.0
    %1478 = vmatpush1.msra.mxu0 0.0
    %1479 = vmatprep.subr.mxu0 0.0
    %1480 = vmatpush1.msra.mxu0 0.0
    %1481 = vmatprep.subr.mxu0 0.0
    %1482 = vmatpush1.msra.mxu0 0.0
    %1483 = vmatprep.subr.mxu0 0.0
    %1484 = vmatpush1.msra.mxu0 %v1458
    %1485 = vmatprep.subr.mxu0 0.0
    %1486 = vmatpush1.msra.mxu0 %v1457
    %1487 = vmatprep.subr.mxu0 0.0
    %1488 = vmatpush1.msra.mxu0 %v1456
    %1489 = vmatprep.subr.mxu0 0.0
    %1490 = vmatpush1.msra.mxu0 %v1455
    %1491 = vmatprep.subr.mxu0 0.0
    %1492 = vmatpush2.msra.mxu0 0.0
    %1493 = vmatprep.subr.mxu0 0.0
    %1494 = vmatpush2.msra.mxu0 0.0
    %1495 = vmatprep.subr.mxu0 0.0
    %1496 = vmatpush2.msra.mxu0 0.0
    %1497 = vmatprep.subr.mxu0 0.0
    %1498 = vmatpush2.msra.mxu0 0.0
    %1499 = vmatprep.subr.mxu0 0.0
    %1500 = vmatpush2.msra.mxu0 0.0
    %1501 = vmatprep.subr.mxu0 0.0
    %1502 = vmatpush2.msra.mxu0 0.0
    %1503 = vmatprep.subr.mxu0 0.0
    %1504 = vmatpush2.msra.mxu0 0.0
    %1505 = vmatprep.subr.mxu0 0.0
    %1506 = vmatpush2.msra.mxu0 0.0
    %1507 = vmatprep.subr.mxu0 0.0
    %1508 = vmatpush2.msra.mxu0 0.0
    %1509 = vmatprep.subr.mxu0 0.0
    %1510 = vmatpush2.msra.mxu0 0.0
    %1511 = vmatprep.subr.mxu0 0.0
    %1512 = vmatpush2.msra.mxu0 0.0
    %1513 = vmatprep.subr.mxu0 0.0
    %1514 = vmatpush2.msra.mxu0 0.0
    %1515 = vmatprep.subr.mxu0 0.0
    %1516 = vmatpush2.msra.mxu0 0.0
    %1517 = vmatprep.subr.mxu0 0.0
    %1518 = vmatpush2.msra.mxu0 0.0
    %1519 = vmatprep.subr.mxu0 0.0
    %1520 = vmatpush2.msra.mxu0 0.0
    %1521 = vmatprep.subr.mxu0 0.0
    %1522 = vmatpush2.msra.mxu0 0.0
    %1523 = vmatprep.mubr.f32.mxu0 0.0
    %1524 = vmatmul.mubr.f32.gmra.mxu0 %v47
    %v1525 = vpop.f32.mrf.mxu0
    %v1526 = vadd.f32 0.0, %v1525
    %v1527 = vpop.f32.mrf.mxu0
    %1528 = vmatprep.mubr.f32.mxu0 0.0
    %1529 = vmatmul.mubr.f32.gmra.mxu0 %v50
    %v1530 = vpop.f32.mrf.mxu0
    %v1531 = vadd.f32 0.0, %v1530
    %v1532 = vpop.f32.mrf.mxu0
    %1533 = vdwg.mxu0
    %s1534 = scalar_lea.vmem %s5, 64
    %v1535 = vld [vmem:[%s1534] sm:$0xff]
    %v1536 = vld [vmem:[%s1534 + $0x8] sm:$0xff]
    %v1537 = vld [vmem:[%s1534 + $0x10] sm:$0xff]
    %v1538 = vld [vmem:[%s1534 + $0x18] sm:$0xff]
    %v1540 = vsel %vm45, %v37, 0
    %v1543 = vsel %vm45, %v38, 0
    %1545 = vmatprep.subr.mxu0 0.0
    %1546 = vmatpush1.msra.mxu0 0.0
    %1547 = vmatprep.subr.mxu0 0.0
    %1548 = vmatpush1.msra.mxu0 0.0
    %1549 = vmatprep.subr.mxu0 0.0
    %1550 = vmatpush1.msra.mxu0 0.0
    %1551 = vmatprep.subr.mxu0 0.0
    %1552 = vmatpush1.msra.mxu0 0.0
    %1553 = vmatprep.subr.mxu0 0.0
    %1554 = vmatpush1.msra.mxu0 0.0
    %1555 = vmatprep.subr.mxu0 0.0
    %1556 = vmatpush1.msra.mxu0 0.0
    %1557 = vmatprep.subr.mxu0 0.0
    %1558 = vmatpush1.msra.mxu0 0.0
    %1559 = vmatprep.subr.mxu0 0.0
    %1560 = vmatpush1.msra.mxu0 0.0
    %1561 = vmatprep.subr.mxu0 0.0
    %1562 = vmatpush1.msra.mxu0 0.0
    %1563 = vmatprep.subr.mxu0 0.0
    %1564 = vmatpush1.msra.mxu0 0.0
    %1565 = vmatprep.subr.mxu0 0.0
    %1566 = vmatpush1.msra.mxu0 0.0
    %1567 = vmatprep.subr.mxu0 0.0
    %1568 = vmatpush1.msra.mxu0 0.0
    %1569 = vmatprep.subr.mxu0 0.0
    %1570 = vmatpush1.msra.mxu0 %v1538
    %1571 = vmatprep.subr.mxu0 0.0
    %1572 = vmatpush1.msra.mxu0 %v1537
    %1573 = vmatprep.subr.mxu0 0.0
    %1574 = vmatpush1.msra.mxu0 %v1536
    %1575 = vmatprep.subr.mxu0 0.0
    %1576 = vmatpush1.msra.mxu0 %v1535
    %1577 = vmatprep.subr.mxu0 0.0
    %1578 = vmatpush2.msra.mxu0 0.0
    %1579 = vmatprep.subr.mxu0 0.0
    %1580 = vmatpush2.msra.mxu0 0.0
    %1581 = vmatprep.subr.mxu0 0.0
    %1582 = vmatpush2.msra.mxu0 0.0
    %1583 = vmatprep.subr.mxu0 0.0
    %1584 = vmatpush2.msra.mxu0 0.0
    %1585 = vmatprep.subr.mxu0 0.0
    %1586 = vmatpush2.msra.mxu0 0.0
    %1587 = vmatprep.subr.mxu0 0.0
    %1588 = vmatpush2.msra.mxu0 0.0
    %1589 = vmatprep.subr.mxu0 0.0
    %1590 = vmatpush2.msra.mxu0 0.0
    %1591 = vmatprep.subr.mxu0 0.0
    %1592 = vmatpush2.msra.mxu0 0.0
    %1593 = vmatprep.subr.mxu0 0.0
    %1594 = vmatpush2.msra.mxu0 0.0
    %1595 = vmatprep.subr.mxu0 0.0
    %1596 = vmatpush2.msra.mxu0 0.0
    %1597 = vmatprep.subr.mxu0 0.0
    %1598 = vmatpush2.msra.mxu0 0.0
    %1599 = vmatprep.subr.mxu0 0.0
    %1600 = vmatpush2.msra.mxu0 0.0
    %1601 = vmatprep.subr.mxu0 0.0
    %1602 = vmatpush2.msra.mxu0 0.0
    %1603 = vmatprep.subr.mxu0 0.0
    %1604 = vmatpush2.msra.mxu0 0.0
    %1605 = vmatprep.subr.mxu0 0.0
    %1606 = vmatpush2.msra.mxu0 0.0
    %1607 = vmatprep.subr.mxu0 0.0
    %1608 = vmatpush2.msra.mxu0 0.0
    %1609 = vmatprep.mubr.f32.mxu0 0.0
    %1610 = vmatmul.mubr.f32.gmra.mxu0 %v1540
    %v1611 = vpop.f32.mrf.mxu0
    %v1612 = vadd.f32 0.0, %v1611
    %v1613 = vpop.f32.mrf.mxu0
    %1614 = vmatprep.mubr.f32.mxu0 0.0
    %1615 = vmatmul.mubr.f32.gmra.mxu0 %v1543
    %v1616 = vpop.f32.mrf.mxu0
    %v1617 = vadd.f32 0.0, %v1616
    %v1618 = vpop.f32.mrf.mxu0
    %1619 = vdwg.mxu0
    %s1620 = scalar_lea.vmem %s6, 64
    %v1621 = vld [vmem:[%s1620] sm:$0xff]
    %v1622 = vld [vmem:[%s1620 + $0x8] sm:$0xff]
    %v1623 = vld [vmem:[%s1620 + $0x10] sm:$0xff]
    %v1624 = vld [vmem:[%s1620 + $0x18] sm:$0xff]
    %1625 = vmatprep.subr.mxu0 0.0
    %1626 = vmatpush1.msra.mxu0 0.0
    %1627 = vmatprep.subr.mxu0 0.0
    %1628 = vmatpush1.msra.mxu0 0.0
    %1629 = vmatprep.subr.mxu0 0.0
    %1630 = vmatpush1.msra.mxu0 0.0
    %1631 = vmatprep.subr.mxu0 0.0
    %1632 = vmatpush1.msra.mxu0 0.0
    %1633 = vmatprep.subr.mxu0 0.0
    %1634 = vmatpush1.msra.mxu0 0.0
    %1635 = vmatprep.subr.mxu0 0.0
    %1636 = vmatpush1.msra.mxu0 0.0
    %1637 = vmatprep.subr.mxu0 0.0
    %1638 = vmatpush1.msra.mxu0 0.0
    %1639 = vmatprep.subr.mxu0 0.0
    %1640 = vmatpush1.msra.mxu0 0.0
    %1641 = vmatprep.subr.mxu0 0.0
    %1642 = vmatpush1.msra.mxu0 0.0
    %1643 = vmatprep.subr.mxu0 0.0
    %1644 = vmatpush1.msra.mxu0 0.0
    %1645 = vmatprep.subr.mxu0 0.0
    %1646 = vmatpush1.msra.mxu0 0.0
    %1647 = vmatprep.subr.mxu0 0.0
    %1648 = vmatpush1.msra.mxu0 0.0
    %1649 = vmatprep.subr.mxu0 0.0
    %1650 = vmatpush1.msra.mxu0 %v1624
    %1651 = vmatprep.subr.mxu0 0.0
    %1652 = vmatpush1.msra.mxu0 %v1623
    %1653 = vmatprep.subr.mxu0 0.0
    %1654 = vmatpush1.msra.mxu0 %v1622
    %1655 = vmatprep.subr.mxu0 0.0
    %1656 = vmatpush1.msra.mxu0 %v1621
    %1657 = vmatprep.subr.mxu0 0.0
    %1658 = vmatpush2.msra.mxu0 0.0
    %1659 = vmatprep.subr.mxu0 0.0
    %1660 = vmatpush2.msra.mxu0 0.0
    %1661 = vmatprep.subr.mxu0 0.0
    %1662 = vmatpush2.msra.mxu0 0.0
    %1663 = vmatprep.subr.mxu0 0.0
    %1664 = vmatpush2.msra.mxu0 0.0
    %1665 = vmatprep.subr.mxu0 0.0
    %1666 = vmatpush2.msra.mxu0 0.0
    %1667 = vmatprep.subr.mxu0 0.0
    %1668 = vmatpush2.msra.mxu0 0.0
    %1669 = vmatprep.subr.mxu0 0.0
    %1670 = vmatpush2.msra.mxu0 0.0
    %1671 = vmatprep.subr.mxu0 0.0
    %1672 = vmatpush2.msra.mxu0 0.0
    %1673 = vmatprep.subr.mxu0 0.0
    %1674 = vmatpush2.msra.mxu0 0.0
    %1675 = vmatprep.subr.mxu0 0.0
    %1676 = vmatpush2.msra.mxu0 0.0
    %1677 = vmatprep.subr.mxu0 0.0
    %1678 = vmatpush2.msra.mxu0 0.0
    %1679 = vmatprep.subr.mxu0 0.0
    %1680 = vmatpush2.msra.mxu0 0.0
    %1681 = vmatprep.subr.mxu0 0.0
    %1682 = vmatpush2.msra.mxu0 0.0
    %1683 = vmatprep.subr.mxu0 0.0
    %1684 = vmatpush2.msra.mxu0 0.0
    %1685 = vmatprep.subr.mxu0 0.0
    %1686 = vmatpush2.msra.mxu0 0.0
    %1687 = vmatprep.subr.mxu0 0.0
    %1688 = vmatpush2.msra.mxu0 0.0
    %1689 = vmatprep.mubr.f32.mxu0 0.0
    %1690 = vmatmul.mubr.f32.gmra.mxu0 %v1540
    %v1691 = vpop.f32.mrf.mxu0
    %v1692 = vadd.f32 0.0, %v1691
    %v1693 = vpop.f32.mrf.mxu0
    %1694 = vmatprep.mubr.f32.mxu0 0.0
    %1695 = vmatmul.mubr.f32.gmra.mxu0 %v1543
    %v1696 = vpop.f32.mrf.mxu0
    %v1697 = vadd.f32 0.0, %v1696
    %v1698 = vpop.f32.mrf.mxu0
    %1699 = vdwg.mxu0
    %s1700 = scalar_lea.vmem %s7, 32
    %v1701 = vld [vmem:[%s1700] sm:$0xff]
    %v1702 = vld [vmem:[%s1700 + $0x8] sm:$0xff]
    %v1704 = vsel %vm293, %v1526, 0
    %v1707 = vsel %vm293, %v1612, 0
    %1709 = vmatprep.subr.mxu0 0.0
    %1710 = vmatpush1.xpose.msra.mxu0 0.0
    %1711 = vmatprep.subr.mxu0 0.0
    %1712 = vmatpush1.xpose.msra.mxu0 0.0
    %1713 = vmatprep.subr.mxu0 0.0
    %1714 = vmatpush1.xpose.msra.mxu0 0.0
    %1715 = vmatprep.subr.mxu0 0.0
    %1716 = vmatpush1.xpose.msra.mxu0 0.0
    %1717 = vmatprep.subr.mxu0 0.0
    %1718 = vmatpush1.xpose.msra.mxu0 0.0
    %1719 = vmatprep.subr.mxu0 0.0
    %1720 = vmatpush1.xpose.msra.mxu0 0.0
    %1721 = vmatprep.subr.mxu0 0.0
    %1722 = vmatpush1.xpose.msra.mxu0 0.0
    %1723 = vmatprep.subr.mxu0 0.0
    %1724 = vmatpush1.xpose.msra.mxu0 0.0
    %1725 = vmatprep.subr.mxu0 0.0
    %1726 = vmatpush1.xpose.msra.mxu0 0.0
    %1727 = vmatprep.subr.mxu0 0.0
    %1728 = vmatpush1.xpose.msra.mxu0 0.0
    %1729 = vmatprep.subr.mxu0 0.0
    %1730 = vmatpush1.xpose.msra.mxu0 0.0
    %1731 = vmatprep.subr.mxu0 0.0
    %1732 = vmatpush1.xpose.msra.mxu0 0.0
    %1733 = vmatprep.subr.mxu0 0.0
    %1734 = vmatpush1.xpose.msra.mxu0 0.0
    %1735 = vmatprep.subr.mxu0 0.0
    %1736 = vmatpush1.xpose.msra.mxu0 0.0
    %1737 = vmatprep.subr.mxu0 0.0
    %1738 = vmatpush1.xpose.msra.mxu0 0.0
    %1739 = vmatprep.subr.mxu0 0.0
    %1740 = vmatpush1.xpose.msra.mxu0 %v1707
    %1741 = vmatprep.subr.mxu0 0.0
    %1742 = vmatpush2.xpose.msra.mxu0 0.0
    %1743 = vmatprep.subr.mxu0 0.0
    %1744 = vmatpush2.xpose.msra.mxu0 0.0
    %1745 = vmatprep.subr.mxu0 0.0
    %1746 = vmatpush2.xpose.msra.mxu0 0.0
    %1747 = vmatprep.subr.mxu0 0.0
    %1748 = vmatpush2.xpose.msra.mxu0 0.0
    %1749 = vmatprep.subr.mxu0 0.0
    %1750 = vmatpush2.xpose.msra.mxu0 0.0
    %1751 = vmatprep.subr.mxu0 0.0
    %1752 = vmatpush2.xpose.msra.mxu0 0.0
    %1753 = vmatprep.subr.mxu0 0.0
    %1754 = vmatpush2.xpose.msra.mxu0 0.0
    %1755 = vmatprep.subr.mxu0 0.0
    %1756 = vmatpush2.xpose.msra.mxu0 0.0
    %1757 = vmatprep.subr.mxu0 0.0
    %1758 = vmatpush2.xpose.msra.mxu0 0.0
    %1759 = vmatprep.subr.mxu0 0.0
    %1760 = vmatpush2.xpose.msra.mxu0 0.0
    %1761 = vmatprep.subr.mxu0 0.0
    %1762 = vmatpush2.xpose.msra.mxu0 0.0
    %1763 = vmatprep.subr.mxu0 0.0
    %1764 = vmatpush2.xpose.msra.mxu0 0.0
    %1765 = vmatprep.subr.mxu0 0.0
    %1766 = vmatpush2.xpose.msra.mxu0 0.0
    %1767 = vmatprep.subr.mxu0 0.0
    %1768 = vmatpush2.xpose.msra.mxu0 0.0
    %1769 = vmatprep.subr.mxu0 0.0
    %1770 = vmatpush2.xpose.msra.mxu0 0.0
    %1771 = vmatprep.subr.mxu0 0.0
    %1772 = vmatpush2.xpose.msra.mxu0 0.0
    %1773 = vmatprep.mubr.f32.mxu0 0.0
    %1774 = vmatmul.mubr.f32.gmra.mxu0 %v1704
    %v1775 = vpop.f32.mrf.mxu0
    %v1776 = vadd.f32 0.0, %v1775
    %v1777 = vpop.f32.mrf.mxu0
    %1778 = vdwg.mxu0
    %v1779 = vmul.f32 %v1776, 1.442695
    %v1780 = vpow.pop %v1779
    %v1781 = vsel %vm372, %v1780, 0.0
    %1782 = vadd.xlane.f32.xlu0 %v1781
    %v1783 = vpop.xlane.xlu0 %1782
    %v1784 = vrcp.pop %v1783
    %v1785 = vmul.f32 %v1780, %v1784
    %v1787 = vsel %vm372, %v1785, 0
    %1789 = vmatprep.subr.mxu0 0.0
    %1790 = vmatpush1.msra.mxu0 0.0
    %1791 = vmatprep.subr.mxu0 0.0
    %1792 = vmatpush1.msra.mxu0 0.0
    %1793 = vmatprep.subr.mxu0 0.0
    %1794 = vmatpush1.msra.mxu0 0.0
    %1795 = vmatprep.subr.mxu0 0.0
    %1796 = vmatpush1.msra.mxu0 0.0
    %1797 = vmatprep.subr.mxu0 0.0
    %1798 = vmatpush1.msra.mxu0 0.0
    %1799 = vmatprep.subr.mxu0 0.0
    %1800 = vmatpush1.msra.mxu0 0.0
    %1801 = vmatprep.subr.mxu0 0.0
    %1802 = vmatpush1.msra.mxu0 0.0
    %1803 = vmatprep.subr.mxu0 0.0
    %1804 = vmatpush1.msra.mxu0 0.0
    %1805 = vmatprep.subr.mxu0 0.0
    %1806 = vmatpush1.msra.mxu0 0.0
    %1807 = vmatprep.subr.mxu0 0.0
    %1808 = vmatpush1.msra.mxu0 0.0
    %1809 = vmatprep.subr.mxu0 0.0
    %1810 = vmatpush1.msra.mxu0 0.0
    %1811 = vmatprep.subr.mxu0 0.0
    %1812 = vmatpush1.msra.mxu0 0.0
    %1813 = vmatprep.subr.mxu0 0.0
    %1814 = vmatpush1.msra.mxu0 0.0
    %1815 = vmatprep.subr.mxu0 0.0
    %1816 = vmatpush1.msra.mxu0 0.0
    %1817 = vmatprep.subr.mxu0 0.0
    %1818 = vmatpush1.msra.mxu0 0.0
    %1819 = vmatprep.subr.mxu0 0.0
    %1820 = vmatpush1.msra.mxu0 %v1692
    %1821 = vmatprep.subr.mxu0 0.0
    %1822 = vmatpush2.msra.mxu0 0.0
    %1823 = vmatprep.subr.mxu0 0.0
    %1824 = vmatpush2.msra.mxu0 0.0
    %1825 = vmatprep.subr.mxu0 0.0
    %1826 = vmatpush2.msra.mxu0 0.0
    %1827 = vmatprep.subr.mxu0 0.0
    %1828 = vmatpush2.msra.mxu0 0.0
    %1829 = vmatprep.subr.mxu0 0.0
    %1830 = vmatpush2.msra.mxu0 0.0
    %1831 = vmatprep.subr.mxu0 0.0
    %1832 = vmatpush2.msra.mxu0 0.0
    %1833 = vmatprep.subr.mxu0 0.0
    %1834 = vmatpush2.msra.mxu0 0.0
    %1835 = vmatprep.subr.mxu0 0.0
    %1836 = vmatpush2.msra.mxu0 0.0
    %1837 = vmatprep.subr.mxu0 0.0
    %1838 = vmatpush2.msra.mxu0 0.0
    %1839 = vmatprep.subr.mxu0 0.0
    %1840 = vmatpush2.msra.mxu0 0.0
    %1841 = vmatprep.subr.mxu0 0.0
    %1842 = vmatpush2.msra.mxu0 0.0
    %1843 = vmatprep.subr.mxu0 0.0
    %1844 = vmatpush2.msra.mxu0 0.0
    %1845 = vmatprep.subr.mxu0 0.0
    %1846 = vmatpush2.msra.mxu0 0.0
    %1847 = vmatprep.subr.mxu0 0.0
    %1848 = vmatpush2.msra.mxu0 0.0
    %1849 = vmatprep.subr.mxu0 0.0
    %1850 = vmatpush2.msra.mxu0 0.0
    %1851 = vmatprep.subr.mxu0 0.0
    %1852 = vmatpush2.msra.mxu0 0.0
    %1853 = vmatprep.mubr.f32.mxu0 0.0
    %1854 = vmatmul.mubr.f32.gmra.mxu0 %v1787
    %v1855 = vpop.f32.mrf.mxu0
    %v1856 = vadd.f32 0.0, %v1855
    %v1857 = vpop.f32.mrf.mxu0
    %1858 = vdwg.mxu0
    %v1860 = vsel %vm293, %v1856, 0
    %1862 = vmatprep.subr.mxu0 0.0
    %1863 = vmatpush1.msra.mxu0 0.0
    %1864 = vmatprep.subr.mxu0 0.0
    %1865 = vmatpush1.msra.mxu0 0.0
    %1866 = vmatprep.subr.mxu0 0.0
    %1867 = vmatpush1.msra.mxu0 0.0
    %1868 = vmatprep.subr.mxu0 0.0
    %1869 = vmatpush1.msra.mxu0 0.0
    %1870 = vmatprep.subr.mxu0 0.0
    %1871 = vmatpush1.msra.mxu0 0.0
    %1872 = vmatprep.subr.mxu0 0.0
    %1873 = vmatpush1.msra.mxu0 0.0
    %1874 = vmatprep.subr.mxu0 0.0
    %1875 = vmatpush1.msra.mxu0 0.0
    %1876 = vmatprep.subr.mxu0 0.0
    %1877 = vmatpush1.msra.mxu0 0.0
    %1878 = vmatprep.subr.mxu0 0.0
    %1879 = vmatpush1.msra.mxu0 0.0
    %1880 = vmatprep.subr.mxu0 0.0
    %1881 = vmatpush1.msra.mxu0 0.0
    %1882 = vmatprep.subr.mxu0 0.0
    %1883 = vmatpush1.msra.mxu0 0.0
    %1884 = vmatprep.subr.mxu0 0.0
    %1885 = vmatpush1.msra.mxu0 0.0
    %1886 = vmatprep.subr.mxu0 0.0
    %1887 = vmatpush1.msra.mxu0 0.0
    %1888 = vmatprep.subr.mxu0 0.0
    %1889 = vmatpush1.msra.mxu0 0.0
    %1890 = vmatprep.subr.mxu0 0.0
    %1891 = vmatpush1.msra.mxu0 %v1702
    %1892 = vmatprep.subr.mxu0 0.0
    %1893 = vmatpush1.msra.mxu0 %v1701
    %1894 = vmatprep.subr.mxu0 0.0
    %1895 = vmatpush2.msra.mxu0 0.0
    %1896 = vmatprep.subr.mxu0 0.0
    %1897 = vmatpush2.msra.mxu0 0.0
    %1898 = vmatprep.subr.mxu0 0.0
    %1899 = vmatpush2.msra.mxu0 0.0
    %1900 = vmatprep.subr.mxu0 0.0
    %1901 = vmatpush2.msra.mxu0 0.0
    %1902 = vmatprep.subr.mxu0 0.0
    %1903 = vmatpush2.msra.mxu0 0.0
    %1904 = vmatprep.subr.mxu0 0.0
    %1905 = vmatpush2.msra.mxu0 0.0
    %1906 = vmatprep.subr.mxu0 0.0
    %1907 = vmatpush2.msra.mxu0 0.0
    %1908 = vmatprep.subr.mxu0 0.0
    %1909 = vmatpush2.msra.mxu0 0.0
    %1910 = vmatprep.subr.mxu0 0.0
    %1911 = vmatpush2.msra.mxu0 0.0
    %1912 = vmatprep.subr.mxu0 0.0
    %1913 = vmatpush2.msra.mxu0 0.0
    %1914 = vmatprep.subr.mxu0 0.0
    %1915 = vmatpush2.msra.mxu0 0.0
    %1916 = vmatprep.subr.mxu0 0.0
    %1917 = vmatpush2.msra.mxu0 0.0
    %1918 = vmatprep.subr.mxu0 0.0
    %1919 = vmatpush2.msra.mxu0 0.0
    %1920 = vmatprep.subr.mxu0 0.0
    %1921 = vmatpush2.msra.mxu0 0.0
    %1922 = vmatprep.subr.mxu0 0.0
    %1923 = vmatpush2.msra.mxu0 0.0
    %1924 = vmatprep.subr.mxu0 0.0
    %1925 = vmatpush2.msra.mxu0 0.0
    %1926 = vmatprep.mubr.f32.mxu0 0.0
    %1927 = vmatmul.mubr.f32.gmra.mxu0 %v1860
    %v1928 = vpop.f32.mrf.mxu0
    %v1929 = vadd.f32 0.0, %v1928
    %v1930 = vpop.f32.mrf.mxu0
    %1931 = vdwg.mxu0
    %v1932 = vadd.f32 %v1149, %v1929
    %v1934 = vsel %vm293, %v1531, 0
    %v1937 = vsel %vm293, %v1617, 0
    %1939 = vmatprep.subr.mxu0 0.0
    %1940 = vmatpush1.xpose.msra.mxu0 0.0
    %1941 = vmatprep.subr.mxu0 0.0
    %1942 = vmatpush1.xpose.msra.mxu0 0.0
    %1943 = vmatprep.subr.mxu0 0.0
    %1944 = vmatpush1.xpose.msra.mxu0 0.0
    %1945 = vmatprep.subr.mxu0 0.0
    %1946 = vmatpush1.xpose.msra.mxu0 0.0
    %1947 = vmatprep.subr.mxu0 0.0
    %1948 = vmatpush1.xpose.msra.mxu0 0.0
    %1949 = vmatprep.subr.mxu0 0.0
    %1950 = vmatpush1.xpose.msra.mxu0 0.0
    %1951 = vmatprep.subr.mxu0 0.0
    %1952 = vmatpush1.xpose.msra.mxu0 0.0
    %1953 = vmatprep.subr.mxu0 0.0
    %1954 = vmatpush1.xpose.msra.mxu0 0.0
    %1955 = vmatprep.subr.mxu0 0.0
    %1956 = vmatpush1.xpose.msra.mxu0 0.0
    %1957 = vmatprep.subr.mxu0 0.0
    %1958 = vmatpush1.xpose.msra.mxu0 0.0
    %1959 = vmatprep.subr.mxu0 0.0
    %1960 = vmatpush1.xpose.msra.mxu0 0.0
    %1961 = vmatprep.subr.mxu0 0.0
    %1962 = vmatpush1.xpose.msra.mxu0 0.0
    %1963 = vmatprep.subr.mxu0 0.0
    %1964 = vmatpush1.xpose.msra.mxu0 0.0
    %1965 = vmatprep.subr.mxu0 0.0
    %1966 = vmatpush1.xpose.msra.mxu0 0.0
    %1967 = vmatprep.subr.mxu0 0.0
    %1968 = vmatpush1.xpose.msra.mxu0 0.0
    %1969 = vmatprep.subr.mxu0 0.0
    %1970 = vmatpush1.xpose.msra.mxu0 %v1937
    %1971 = vmatprep.subr.mxu0 0.0
    %1972 = vmatpush2.xpose.msra.mxu0 0.0
    %1973 = vmatprep.subr.mxu0 0.0
    %1974 = vmatpush2.xpose.msra.mxu0 0.0
    %1975 = vmatprep.subr.mxu0 0.0
    %1976 = vmatpush2.xpose.msra.mxu0 0.0
    %1977 = vmatprep.subr.mxu0 0.0
    %1978 = vmatpush2.xpose.msra.mxu0 0.0
    %1979 = vmatprep.subr.mxu0 0.0
    %1980 = vmatpush2.xpose.msra.mxu0 0.0
    %1981 = vmatprep.subr.mxu0 0.0
    %1982 = vmatpush2.xpose.msra.mxu0 0.0
    %1983 = vmatprep.subr.mxu0 0.0
    %1984 = vmatpush2.xpose.msra.mxu0 0.0
    %1985 = vmatprep.subr.mxu0 0.0
    %1986 = vmatpush2.xpose.msra.mxu0 0.0
    %1987 = vmatprep.subr.mxu0 0.0
    %1988 = vmatpush2.xpose.msra.mxu0 0.0
    %1989 = vmatprep.subr.mxu0 0.0
    %1990 = vmatpush2.xpose.msra.mxu0 0.0
    %1991 = vmatprep.subr.mxu0 0.0
    %1992 = vmatpush2.xpose.msra.mxu0 0.0
    %1993 = vmatprep.subr.mxu0 0.0
    %1994 = vmatpush2.xpose.msra.mxu0 0.0
    %1995 = vmatprep.subr.mxu0 0.0
    %1996 = vmatpush2.xpose.msra.mxu0 0.0
    %1997 = vmatprep.subr.mxu0 0.0
    %1998 = vmatpush2.xpose.msra.mxu0 0.0
    %1999 = vmatprep.subr.mxu0 0.0
    %2000 = vmatpush2.xpose.msra.mxu0 0.0
    %2001 = vmatprep.subr.mxu0 0.0
    %2002 = vmatpush2.xpose.msra.mxu0 0.0
    %2003 = vmatprep.mubr.f32.mxu0 0.0
    %2004 = vmatmul.mubr.f32.gmra.mxu0 %v1934
    %v2005 = vpop.f32.mrf.mxu0
    %v2006 = vadd.f32 0.0, %v2005
    %v2007 = vpop.f32.mrf.mxu0
    %2008 = vdwg.mxu0
    %v2009 = vmul.f32 %v2006, 1.442695
    %v2010 = vpow.pop %v2009
    %v2011 = vsel %vm372, %v2010, 0.0
    %2012 = vadd.xlane.f32.xlu0 %v2011
    %v2013 = vpop.xlane.xlu0 %2012
    %v2014 = vrcp.pop %v2013
    %v2015 = vmul.f32 %v2010, %v2014
    %v2017 = vsel %vm372, %v2015, 0
    %2019 = vmatprep.subr.mxu0 0.0
    %2020 = vmatpush1.msra.mxu0 0.0
    %2021 = vmatprep.subr.mxu0 0.0
    %2022 = vmatpush1.msra.mxu0 0.0
    %2023 = vmatprep.subr.mxu0 0.0
    %2024 = vmatpush1.msra.mxu0 0.0
    %2025 = vmatprep.subr.mxu0 0.0
    %2026 = vmatpush1.msra.mxu0 0.0
    %2027 = vmatprep.subr.mxu0 0.0
    %2028 = vmatpush1.msra.mxu0 0.0
    %2029 = vmatprep.subr.mxu0 0.0
    %2030 = vmatpush1.msra.mxu0 0.0
    %2031 = vmatprep.subr.mxu0 0.0
    %2032 = vmatpush1.msra.mxu0 0.0
    %2033 = vmatprep.subr.mxu0 0.0
    %2034 = vmatpush1.msra.mxu0 0.0
    %2035 = vmatprep.subr.mxu0 0.0
    %2036 = vmatpush1.msra.mxu0 0.0
    %2037 = vmatprep.subr.mxu0 0.0
    %2038 = vmatpush1.msra.mxu0 0.0
    %2039 = vmatprep.subr.mxu0 0.0
    %2040 = vmatpush1.msra.mxu0 0.0
    %2041 = vmatprep.subr.mxu0 0.0
    %2042 = vmatpush1.msra.mxu0 0.0
    %2043 = vmatprep.subr.mxu0 0.0
    %2044 = vmatpush1.msra.mxu0 0.0
    %2045 = vmatprep.subr.mxu0 0.0
    %2046 = vmatpush1.msra.mxu0 0.0
    %2047 = vmatprep.subr.mxu0 0.0
    %2048 = vmatpush1.msra.mxu0 0.0
    %2049 = vmatprep.subr.mxu0 0.0
    %2050 = vmatpush1.msra.mxu0 %v1697
    %2051 = vmatprep.subr.mxu0 0.0
    %2052 = vmatpush2.msra.mxu0 0.0
    %2053 = vmatprep.subr.mxu0 0.0
    %2054 = vmatpush2.msra.mxu0 0.0
    %2055 = vmatprep.subr.mxu0 0.0
    %2056 = vmatpush2.msra.mxu0 0.0
    %2057 = vmatprep.subr.mxu0 0.0
    %2058 = vmatpush2.msra.mxu0 0.0
    %2059 = vmatprep.subr.mxu0 0.0
    %2060 = vmatpush2.msra.mxu0 0.0
    %2061 = vmatprep.subr.mxu0 0.0
    %2062 = vmatpush2.msra.mxu0 0.0
    %2063 = vmatprep.subr.mxu0 0.0
    %2064 = vmatpush2.msra.mxu0 0.0
    %2065 = vmatprep.subr.mxu0 0.0
    %2066 = vmatpush2.msra.mxu0 0.0
    %2067 = vmatprep.subr.mxu0 0.0
    %2068 = vmatpush2.msra.mxu0 0.0
    %2069 = vmatprep.subr.mxu0 0.0
    %2070 = vmatpush2.msra.mxu0 0.0
    %2071 = vmatprep.subr.mxu0 0.0
    %2072 = vmatpush2.msra.mxu0 0.0
    %2073 = vmatprep.subr.mxu0 0.0
    %2074 = vmatpush2.msra.mxu0 0.0
    %2075 = vmatprep.subr.mxu0 0.0
    %2076 = vmatpush2.msra.mxu0 0.0
    %2077 = vmatprep.subr.mxu0 0.0
    %2078 = vmatpush2.msra.mxu0 0.0
    %2079 = vmatprep.subr.mxu0 0.0
    %2080 = vmatpush2.msra.mxu0 0.0
    %2081 = vmatprep.subr.mxu0 0.0
    %2082 = vmatpush2.msra.mxu0 0.0
    %2083 = vmatprep.mubr.f32.mxu0 0.0
    %2084 = vmatmul.mubr.f32.gmra.mxu0 %v2017
    %v2085 = vpop.f32.mrf.mxu0
    %v2086 = vadd.f32 0.0, %v2085
    %v2087 = vpop.f32.mrf.mxu0
    %2088 = vdwg.mxu0
    %v2090 = vsel %vm293, %v2086, 0
    %2092 = vmatprep.subr.mxu0 0.0
    %2093 = vmatpush1.msra.mxu0 0.0
    %2094 = vmatprep.subr.mxu0 0.0
    %2095 = vmatpush1.msra.mxu0 0.0
    %2096 = vmatprep.subr.mxu0 0.0
    %2097 = vmatpush1.msra.mxu0 0.0
    %2098 = vmatprep.subr.mxu0 0.0
    %2099 = vmatpush1.msra.mxu0 0.0
    %2100 = vmatprep.subr.mxu0 0.0
    %2101 = vmatpush1.msra.mxu0 0.0
    %2102 = vmatprep.subr.mxu0 0.0
    %2103 = vmatpush1.msra.mxu0 0.0
    %2104 = vmatprep.subr.mxu0 0.0
    %2105 = vmatpush1.msra.mxu0 0.0
    %2106 = vmatprep.subr.mxu0 0.0
    %2107 = vmatpush1.msra.mxu0 0.0
    %2108 = vmatprep.subr.mxu0 0.0
    %2109 = vmatpush1.msra.mxu0 0.0
    %2110 = vmatprep.subr.mxu0 0.0
    %2111 = vmatpush1.msra.mxu0 0.0
    %2112 = vmatprep.subr.mxu0 0.0
    %2113 = vmatpush1.msra.mxu0 0.0
    %2114 = vmatprep.subr.mxu0 0.0
    %2115 = vmatpush1.msra.mxu0 0.0
    %2116 = vmatprep.subr.mxu0 0.0
    %2117 = vmatpush1.msra.mxu0 0.0
    %2118 = vmatprep.subr.mxu0 0.0
    %2119 = vmatpush1.msra.mxu0 0.0
    %2120 = vmatprep.subr.mxu0 0.0
    %2121 = vmatpush1.msra.mxu0 %v1702
    %2122 = vmatprep.subr.mxu0 0.0
    %2123 = vmatpush1.msra.mxu0 %v1701
    %2124 = vmatprep.subr.mxu0 0.0
    %2125 = vmatpush2.msra.mxu0 0.0
    %2126 = vmatprep.subr.mxu0 0.0
    %2127 = vmatpush2.msra.mxu0 0.0
    %2128 = vmatprep.subr.mxu0 0.0
    %2129 = vmatpush2.msra.mxu0 0.0
    %2130 = vmatprep.subr.mxu0 0.0
    %2131 = vmatpush2.msra.mxu0 0.0
    %2132 = vmatprep.subr.mxu0 0.0
    %2133 = vmatpush2.msra.mxu0 0.0
    %2134 = vmatprep.subr.mxu0 0.0
    %2135 = vmatpush2.msra.mxu0 0.0
    %2136 = vmatprep.subr.mxu0 0.0
    %2137 = vmatpush2.msra.mxu0 0.0
    %2138 = vmatprep.subr.mxu0 0.0
    %2139 = vmatpush2.msra.mxu0 0.0
    %2140 = vmatprep.subr.mxu0 0.0
    %2141 = vmatpush2.msra.mxu0 0.0
    %2142 = vmatprep.subr.mxu0 0.0
    %2143 = vmatpush2.msra.mxu0 0.0
    %2144 = vmatprep.subr.mxu0 0.0
    %2145 = vmatpush2.msra.mxu0 0.0
    %2146 = vmatprep.subr.mxu0 0.0
    %2147 = vmatpush2.msra.mxu0 0.0
    %2148 = vmatprep.subr.mxu0 0.0
    %2149 = vmatpush2.msra.mxu0 0.0
    %2150 = vmatprep.subr.mxu0 0.0
    %2151 = vmatpush2.msra.mxu0 0.0
    %2152 = vmatprep.subr.mxu0 0.0
    %2153 = vmatpush2.msra.mxu0 0.0
    %2154 = vmatprep.subr.mxu0 0.0
    %2155 = vmatpush2.msra.mxu0 0.0
    %2156 = vmatprep.mubr.f32.mxu0 0.0
    %2157 = vmatmul.mubr.f32.gmra.mxu0 %v2090
    %v2158 = vpop.f32.mrf.mxu0
    %v2159 = vadd.f32 0.0, %v2158
    %v2160 = vpop.f32.mrf.mxu0
    %2161 = vdwg.mxu0
    %v2162 = vadd.f32 %v1451, %v2159
    %s2163 = scalar_lea.vmem %s4, 96
    %v2164 = vld [vmem:[%s2163] sm:$0xff]
    %v2165 = vld [vmem:[%s2163 + $0x8] sm:$0xff]
    %v2166 = vld [vmem:[%s2163 + $0x10] sm:$0xff]
    %v2167 = vld [vmem:[%s2163 + $0x18] sm:$0xff]
    %2168 = vmatprep.subr.mxu0 0.0
    %2169 = vmatpush1.msra.mxu0 0.0
    %2170 = vmatprep.subr.mxu0 0.0
    %2171 = vmatpush1.msra.mxu0 0.0
    %2172 = vmatprep.subr.mxu0 0.0
    %2173 = vmatpush1.msra.mxu0 0.0
    %2174 = vmatprep.subr.mxu0 0.0
    %2175 = vmatpush1.msra.mxu0 0.0
    %2176 = vmatprep.subr.mxu0 0.0
    %2177 = vmatpush1.msra.mxu0 0.0
    %2178 = vmatprep.subr.mxu0 0.0
    %2179 = vmatpush1.msra.mxu0 0.0
    %2180 = vmatprep.subr.mxu0 0.0
    %2181 = vmatpush1.msra.mxu0 0.0
    %2182 = vmatprep.subr.mxu0 0.0
    %2183 = vmatpush1.msra.mxu0 0.0
    %2184 = vmatprep.subr.mxu0 0.0
    %2185 = vmatpush1.msra.mxu0 0.0
    %2186 = vmatprep.subr.mxu0 0.0
    %2187 = vmatpush1.msra.mxu0 0.0
    %2188 = vmatprep.subr.mxu0 0.0
    %2189 = vmatpush1.msra.mxu0 0.0
    %2190 = vmatprep.subr.mxu0 0.0
    %2191 = vmatpush1.msra.mxu0 0.0
    %2192 = vmatprep.subr.mxu0 0.0
    %2193 = vmatpush1.msra.mxu0 %v2167
    %2194 = vmatprep.subr.mxu0 0.0
    %2195 = vmatpush1.msra.mxu0 %v2166
    %2196 = vmatprep.subr.mxu0 0.0
    %2197 = vmatpush1.msra.mxu0 %v2165
    %2198 = vmatprep.subr.mxu0 0.0
    %2199 = vmatpush1.msra.mxu0 %v2164
    %2200 = vmatprep.subr.mxu0 0.0
    %2201 = vmatpush2.msra.mxu0 0.0
    %2202 = vmatprep.subr.mxu0 0.0
    %2203 = vmatpush2.msra.mxu0 0.0
    %2204 = vmatprep.subr.mxu0 0.0
    %2205 = vmatpush2.msra.mxu0 0.0
    %2206 = vmatprep.subr.mxu0 0.0
    %2207 = vmatpush2.msra.mxu0 0.0
    %2208 = vmatprep.subr.mxu0 0.0
    %2209 = vmatpush2.msra.mxu0 0.0
    %2210 = vmatprep.subr.mxu0 0.0
    %2211 = vmatpush2.msra.mxu0 0.0
    %2212 = vmatprep.subr.mxu0 0.0
    %2213 = vmatpush2.msra.mxu0 0.0
    %2214 = vmatprep.subr.mxu0 0.0
    %2215 = vmatpush2.msra.mxu0 0.0
    %2216 = vmatprep.subr.mxu0 0.0
    %2217 = vmatpush2.msra.mxu0 0.0
    %2218 = vmatprep.subr.mxu0 0.0
    %2219 = vmatpush2.msra.mxu0 0.0
    %2220 = vmatprep.subr.mxu0 0.0
    %2221 = vmatpush2.msra.mxu0 0.0
    %2222 = vmatprep.subr.mxu0 0.0
    %2223 = vmatpush2.msra.mxu0 0.0
    %2224 = vmatprep.subr.mxu0 0.0
    %2225 = vmatpush2.msra.mxu0 0.0
    %2226 = vmatprep.subr.mxu0 0.0
    %2227 = vmatpush2.msra.mxu0 0.0
    %2228 = vmatprep.subr.mxu0 0.0
    %2229 = vmatpush2.msra.mxu0 0.0
    %2230 = vmatprep.subr.mxu0 0.0
    %2231 = vmatpush2.msra.mxu0 0.0
    %2232 = vmatprep.mubr.f32.mxu0 0.0
    %2233 = vmatmul.mubr.f32.gmra.mxu0 %v47
    %v2234 = vpop.f32.mrf.mxu0
    %v2235 = vadd.f32 0.0, %v2234
    %v2236 = vpop.f32.mrf.mxu0
    %2237 = vmatprep.mubr.f32.mxu0 0.0
    %2238 = vmatmul.mubr.f32.gmra.mxu0 %v50
    %v2239 = vpop.f32.mrf.mxu0
    %v2240 = vadd.f32 0.0, %v2239
    %v2241 = vpop.f32.mrf.mxu0
    %2242 = vdwg.mxu0
    %s2243 = scalar_lea.vmem %s5, 96
    %v2244 = vld [vmem:[%s2243] sm:$0xff]
    %v2245 = vld [vmem:[%s2243 + $0x8] sm:$0xff]
    %v2246 = vld [vmem:[%s2243 + $0x10] sm:$0xff]
    %v2247 = vld [vmem:[%s2243 + $0x18] sm:$0xff]
    %2248 = vmatprep.subr.mxu0 0.0
    %2249 = vmatpush1.msra.mxu0 0.0
    %2250 = vmatprep.subr.mxu0 0.0
    %2251 = vmatpush1.msra.mxu0 0.0
    %2252 = vmatprep.subr.mxu0 0.0
    %2253 = vmatpush1.msra.mxu0 0.0
    %2254 = vmatprep.subr.mxu0 0.0
    %2255 = vmatpush1.msra.mxu0 0.0
    %2256 = vmatprep.subr.mxu0 0.0
    %2257 = vmatpush1.msra.mxu0 0.0
    %2258 = vmatprep.subr.mxu0 0.0
    %2259 = vmatpush1.msra.mxu0 0.0
    %2260 = vmatprep.subr.mxu0 0.0
    %2261 = vmatpush1.msra.mxu0 0.0
    %2262 = vmatprep.subr.mxu0 0.0
    %2263 = vmatpush1.msra.mxu0 0.0
    %2264 = vmatprep.subr.mxu0 0.0
    %2265 = vmatpush1.msra.mxu0 0.0
    %2266 = vmatprep.subr.mxu0 0.0
    %2267 = vmatpush1.msra.mxu0 0.0
    %2268 = vmatprep.subr.mxu0 0.0
    %2269 = vmatpush1.msra.mxu0 0.0
    %2270 = vmatprep.subr.mxu0 0.0
    %2271 = vmatpush1.msra.mxu0 0.0
    %2272 = vmatprep.subr.mxu0 0.0
    %2273 = vmatpush1.msra.mxu0 %v2247
    %2274 = vmatprep.subr.mxu0 0.0
    %2275 = vmatpush1.msra.mxu0 %v2246
    %2276 = vmatprep.subr.mxu0 0.0
    %2277 = vmatpush1.msra.mxu0 %v2245
    %2278 = vmatprep.subr.mxu0 0.0
    %2279 = vmatpush1.msra.mxu0 %v2244
    %2280 = vmatprep.subr.mxu0 0.0
    %2281 = vmatpush2.msra.mxu0 0.0
    %2282 = vmatprep.subr.mxu0 0.0
    %2283 = vmatpush2.msra.mxu0 0.0
    %2284 = vmatprep.subr.mxu0 0.0
    %2285 = vmatpush2.msra.mxu0 0.0
    %2286 = vmatprep.subr.mxu0 0.0
    %2287 = vmatpush2.msra.mxu0 0.0
    %2288 = vmatprep.subr.mxu0 0.0
    %2289 = vmatpush2.msra.mxu0 0.0
    %2290 = vmatprep.subr.mxu0 0.0
    %2291 = vmatpush2.msra.mxu0 0.0
    %2292 = vmatprep.subr.mxu0 0.0
    %2293 = vmatpush2.msra.mxu0 0.0
    %2294 = vmatprep.subr.mxu0 0.0
    %2295 = vmatpush2.msra.mxu0 0.0
    %2296 = vmatprep.subr.mxu0 0.0
    %2297 = vmatpush2.msra.mxu0 0.0
    %2298 = vmatprep.subr.mxu0 0.0
    %2299 = vmatpush2.msra.mxu0 0.0
    %2300 = vmatprep.subr.mxu0 0.0
    %2301 = vmatpush2.msra.mxu0 0.0
    %2302 = vmatprep.subr.mxu0 0.0
    %2303 = vmatpush2.msra.mxu0 0.0
    %2304 = vmatprep.subr.mxu0 0.0
    %2305 = vmatpush2.msra.mxu0 0.0
    %2306 = vmatprep.subr.mxu0 0.0
    %2307 = vmatpush2.msra.mxu0 0.0
    %2308 = vmatprep.subr.mxu0 0.0
    %2309 = vmatpush2.msra.mxu0 0.0
    %2310 = vmatprep.subr.mxu0 0.0
    %2311 = vmatpush2.msra.mxu0 0.0
    %2312 = vmatprep.mubr.f32.mxu0 0.0
    %2313 = vmatmul.mubr.f32.gmra.mxu0 %v1540
    %v2314 = vpop.f32.mrf.mxu0
    %v2315 = vadd.f32 0.0, %v2314
    %v2316 = vpop.f32.mrf.mxu0
    %2317 = vmatprep.mubr.f32.mxu0 0.0
    %2318 = vmatmul.mubr.f32.gmra.mxu0 %v1543
    %v2319 = vpop.f32.mrf.mxu0
    %v2320 = vadd.f32 0.0, %v2319
    %v2321 = vpop.f32.mrf.mxu0
    %2322 = vdwg.mxu0
    %s2323 = scalar_lea.vmem %s6, 96
    %v2324 = vld [vmem:[%s2323] sm:$0xff]
    %v2325 = vld [vmem:[%s2323 + $0x8] sm:$0xff]
    %v2326 = vld [vmem:[%s2323 + $0x10] sm:$0xff]
    %v2327 = vld [vmem:[%s2323 + $0x18] sm:$0xff]
    %2328 = vmatprep.subr.mxu0 0.0
    %2329 = vmatpush1.msra.mxu0 0.0
    %2330 = vmatprep.subr.mxu0 0.0
    %2331 = vmatpush1.msra.mxu0 0.0
    %2332 = vmatprep.subr.mxu0 0.0
    %2333 = vmatpush1.msra.mxu0 0.0
    %2334 = vmatprep.subr.mxu0 0.0
    %2335 = vmatpush1.msra.mxu0 0.0
    %2336 = vmatprep.subr.mxu0 0.0
    %2337 = vmatpush1.msra.mxu0 0.0
    %2338 = vmatprep.subr.mxu0 0.0
    %2339 = vmatpush1.msra.mxu0 0.0
    %2340 = vmatprep.subr.mxu0 0.0
    %2341 = vmatpush1.msra.mxu0 0.0
    %2342 = vmatprep.subr.mxu0 0.0
    %2343 = vmatpush1.msra.mxu0 0.0
    %2344 = vmatprep.subr.mxu0 0.0
    %2345 = vmatpush1.msra.mxu0 0.0
    %2346 = vmatprep.subr.mxu0 0.0
    %2347 = vmatpush1.msra.mxu0 0.0
    %2348 = vmatprep.subr.mxu0 0.0
    %2349 = vmatpush1.msra.mxu0 0.0
    %2350 = vmatprep.subr.mxu0 0.0
    %2351 = vmatpush1.msra.mxu0 0.0
    %2352 = vmatprep.subr.mxu0 0.0
    %2353 = vmatpush1.msra.mxu0 %v2327
    %2354 = vmatprep.subr.mxu0 0.0
    %2355 = vmatpush1.msra.mxu0 %v2326
    %2356 = vmatprep.subr.mxu0 0.0
    %2357 = vmatpush1.msra.mxu0 %v2325
    %2358 = vmatprep.subr.mxu0 0.0
    %2359 = vmatpush1.msra.mxu0 %v2324
    %2360 = vmatprep.subr.mxu0 0.0
    %2361 = vmatpush2.msra.mxu0 0.0
    %2362 = vmatprep.subr.mxu0 0.0
    %2363 = vmatpush2.msra.mxu0 0.0
    %2364 = vmatprep.subr.mxu0 0.0
    %2365 = vmatpush2.msra.mxu0 0.0
    %2366 = vmatprep.subr.mxu0 0.0
    %2367 = vmatpush2.msra.mxu0 0.0
    %2368 = vmatprep.subr.mxu0 0.0
    %2369 = vmatpush2.msra.mxu0 0.0
    %2370 = vmatprep.subr.mxu0 0.0
    %2371 = vmatpush2.msra.mxu0 0.0
    %2372 = vmatprep.subr.mxu0 0.0
    %2373 = vmatpush2.msra.mxu0 0.0
    %2374 = vmatprep.subr.mxu0 0.0
    %2375 = vmatpush2.msra.mxu0 0.0
    %2376 = vmatprep.subr.mxu0 0.0
    %2377 = vmatpush2.msra.mxu0 0.0
    %2378 = vmatprep.subr.mxu0 0.0
    %2379 = vmatpush2.msra.mxu0 0.0
    %2380 = vmatprep.subr.mxu0 0.0
    %2381 = vmatpush2.msra.mxu0 0.0
    %2382 = vmatprep.subr.mxu0 0.0
    %2383 = vmatpush2.msra.mxu0 0.0
    %2384 = vmatprep.subr.mxu0 0.0
    %2385 = vmatpush2.msra.mxu0 0.0
    %2386 = vmatprep.subr.mxu0 0.0
    %2387 = vmatpush2.msra.mxu0 0.0
    %2388 = vmatprep.subr.mxu0 0.0
    %2389 = vmatpush2.msra.mxu0 0.0
    %2390 = vmatprep.subr.mxu0 0.0
    %2391 = vmatpush2.msra.mxu0 0.0
    %2392 = vmatprep.mubr.f32.mxu0 0.0
    %2393 = vmatmul.mubr.f32.gmra.mxu0 %v1540
    %v2394 = vpop.f32.mrf.mxu0
    %v2395 = vadd.f32 0.0, %v2394
    %v2396 = vpop.f32.mrf.mxu0
    %2397 = vmatprep.mubr.f32.mxu0 0.0
    %2398 = vmatmul.mubr.f32.gmra.mxu0 %v1543
    %v2399 = vpop.f32.mrf.mxu0
    %v2400 = vadd.f32 0.0, %v2399
    %v2401 = vpop.f32.mrf.mxu0
    %2402 = vdwg.mxu0
    %s2403 = scalar_lea.vmem %s7, 48
    %v2404 = vld [vmem:[%s2403] sm:$0xff]
    %v2405 = vld [vmem:[%s2403 + $0x8] sm:$0xff]
    %v2407 = vsel %vm293, %v2235, 0
    %v2410 = vsel %vm293, %v2315, 0
    %2412 = vmatprep.subr.mxu0 0.0
    %2413 = vmatpush1.xpose.msra.mxu0 0.0
    %2414 = vmatprep.subr.mxu0 0.0
    %2415 = vmatpush1.xpose.msra.mxu0 0.0
    %2416 = vmatprep.subr.mxu0 0.0
    %2417 = vmatpush1.xpose.msra.mxu0 0.0
    %2418 = vmatprep.subr.mxu0 0.0
    %2419 = vmatpush1.xpose.msra.mxu0 0.0
    %2420 = vmatprep.subr.mxu0 0.0
    %2421 = vmatpush1.xpose.msra.mxu0 0.0
    %2422 = vmatprep.subr.mxu0 0.0
    %2423 = vmatpush1.xpose.msra.mxu0 0.0
    %2424 = vmatprep.subr.mxu0 0.0
    %2425 = vmatpush1.xpose.msra.mxu0 0.0
    %2426 = vmatprep.subr.mxu0 0.0
    %2427 = vmatpush1.xpose.msra.mxu0 0.0
    %2428 = vmatprep.subr.mxu0 0.0
    %2429 = vmatpush1.xpose.msra.mxu0 0.0
    %2430 = vmatprep.subr.mxu0 0.0
    %2431 = vmatpush1.xpose.msra.mxu0 0.0
    %2432 = vmatprep.subr.mxu0 0.0
    %2433 = vmatpush1.xpose.msra.mxu0 0.0
    %2434 = vmatprep.subr.mxu0 0.0
    %2435 = vmatpush1.xpose.msra.mxu0 0.0
    %2436 = vmatprep.subr.mxu0 0.0
    %2437 = vmatpush1.xpose.msra.mxu0 0.0
    %2438 = vmatprep.subr.mxu0 0.0
    %2439 = vmatpush1.xpose.msra.mxu0 0.0
    %2440 = vmatprep.subr.mxu0 0.0
    %2441 = vmatpush1.xpose.msra.mxu0 0.0
    %2442 = vmatprep.subr.mxu0 0.0
    %2443 = vmatpush1.xpose.msra.mxu0 %v2410
    %2444 = vmatprep.subr.mxu0 0.0
    %2445 = vmatpush2.xpose.msra.mxu0 0.0
    %2446 = vmatprep.subr.mxu0 0.0
    %2447 = vmatpush2.xpose.msra.mxu0 0.0
    %2448 = vmatprep.subr.mxu0 0.0
    %2449 = vmatpush2.xpose.msra.mxu0 0.0
    %2450 = vmatprep.subr.mxu0 0.0
    %2451 = vmatpush2.xpose.msra.mxu0 0.0
    %2452 = vmatprep.subr.mxu0 0.0
    %2453 = vmatpush2.xpose.msra.mxu0 0.0
    %2454 = vmatprep.subr.mxu0 0.0
    %2455 = vmatpush2.xpose.msra.mxu0 0.0
    %2456 = vmatprep.subr.mxu0 0.0
    %2457 = vmatpush2.xpose.msra.mxu0 0.0
    %2458 = vmatprep.subr.mxu0 0.0
    %2459 = vmatpush2.xpose.msra.mxu0 0.0
    %2460 = vmatprep.subr.mxu0 0.0
    %2461 = vmatpush2.xpose.msra.mxu0 0.0
    %2462 = vmatprep.subr.mxu0 0.0
    %2463 = vmatpush2.xpose.msra.mxu0 0.0
    %2464 = vmatprep.subr.mxu0 0.0
    %2465 = vmatpush2.xpose.msra.mxu0 0.0
    %2466 = vmatprep.subr.mxu0 0.0
    %2467 = vmatpush2.xpose.msra.mxu0 0.0
    %2468 = vmatprep.subr.mxu0 0.0
    %2469 = vmatpush2.xpose.msra.mxu0 0.0
    %2470 = vmatprep.subr.mxu0 0.0
    %2471 = vmatpush2.xpose.msra.mxu0 0.0
    %2472 = vmatprep.subr.mxu0 0.0
    %2473 = vmatpush2.xpose.msra.mxu0 0.0
    %2474 = vmatprep.subr.mxu0 0.0
    %2475 = vmatpush2.xpose.msra.mxu0 0.0
    %2476 = vmatprep.mubr.f32.mxu0 0.0
    %2477 = vmatmul.mubr.f32.gmra.mxu0 %v2407
    %v2478 = vpop.f32.mrf.mxu0
    %v2479 = vadd.f32 0.0, %v2478
    %v2480 = vpop.f32.mrf.mxu0
    %2481 = vdwg.mxu0
    %v2482 = vmul.f32 %v2479, 1.442695
    %v2483 = vpow.pop %v2482
    %v2484 = vsel %vm372, %v2483, 0.0
    %2485 = vadd.xlane.f32.xlu0 %v2484
    %v2486 = vpop.xlane.xlu0 %2485
    %v2487 = vrcp.pop %v2486
    %v2488 = vmul.f32 %v2483, %v2487
    %v2490 = vsel %vm372, %v2488, 0
    %2492 = vmatprep.subr.mxu0 0.0
    %2493 = vmatpush1.msra.mxu0 0.0
    %2494 = vmatprep.subr.mxu0 0.0
    %2495 = vmatpush1.msra.mxu0 0.0
    %2496 = vmatprep.subr.mxu0 0.0
    %2497 = vmatpush1.msra.mxu0 0.0
    %2498 = vmatprep.subr.mxu0 0.0
    %2499 = vmatpush1.msra.mxu0 0.0
    %2500 = vmatprep.subr.mxu0 0.0
    %2501 = vmatpush1.msra.mxu0 0.0
    %2502 = vmatprep.subr.mxu0 0.0
    %2503 = vmatpush1.msra.mxu0 0.0
    %2504 = vmatprep.subr.mxu0 0.0
    %2505 = vmatpush1.msra.mxu0 0.0
    %2506 = vmatprep.subr.mxu0 0.0
    %2507 = vmatpush1.msra.mxu0 0.0
    %2508 = vmatprep.subr.mxu0 0.0
    %2509 = vmatpush1.msra.mxu0 0.0
    %2510 = vmatprep.subr.mxu0 0.0
    %2511 = vmatpush1.msra.mxu0 0.0
    %2512 = vmatprep.subr.mxu0 0.0
    %2513 = vmatpush1.msra.mxu0 0.0
    %2514 = vmatprep.subr.mxu0 0.0
    %2515 = vmatpush1.msra.mxu0 0.0
    %2516 = vmatprep.subr.mxu0 0.0
    %2517 = vmatpush1.msra.mxu0 0.0
    %2518 = vmatprep.subr.mxu0 0.0
    %2519 = vmatpush1.msra.mxu0 0.0
    %2520 = vmatprep.subr.mxu0 0.0
    %2521 = vmatpush1.msra.mxu0 0.0
    %2522 = vmatprep.subr.mxu0 0.0
    %2523 = vmatpush1.msra.mxu0 %v2395
    %2524 = vmatprep.subr.mxu0 0.0
    %2525 = vmatpush2.msra.mxu0 0.0
    %2526 = vmatprep.subr.mxu0 0.0
    %2527 = vmatpush2.msra.mxu0 0.0
    %2528 = vmatprep.subr.mxu0 0.0
    %2529 = vmatpush2.msra.mxu0 0.0
    %2530 = vmatprep.subr.mxu0 0.0
    %2531 = vmatpush2.msra.mxu0 0.0
    %2532 = vmatprep.subr.mxu0 0.0
    %2533 = vmatpush2.msra.mxu0 0.0
    %2534 = vmatprep.subr.mxu0 0.0
    %2535 = vmatpush2.msra.mxu0 0.0
    %2536 = vmatprep.subr.mxu0 0.0
    %2537 = vmatpush2.msra.mxu0 0.0
    %2538 = vmatprep.subr.mxu0 0.0
    %2539 = vmatpush2.msra.mxu0 0.0
    %2540 = vmatprep.subr.mxu0 0.0
    %2541 = vmatpush2.msra.mxu0 0.0
    %2542 = vmatprep.subr.mxu0 0.0
    %2543 = vmatpush2.msra.mxu0 0.0
    %2544 = vmatprep.subr.mxu0 0.0
    %2545 = vmatpush2.msra.mxu0 0.0
    %2546 = vmatprep.subr.mxu0 0.0
    %2547 = vmatpush2.msra.mxu0 0.0
    %2548 = vmatprep.subr.mxu0 0.0
    %2549 = vmatpush2.msra.mxu0 0.0
    %2550 = vmatprep.subr.mxu0 0.0
    %2551 = vmatpush2.msra.mxu0 0.0
    %2552 = vmatprep.subr.mxu0 0.0
    %2553 = vmatpush2.msra.mxu0 0.0
    %2554 = vmatprep.subr.mxu0 0.0
    %2555 = vmatpush2.msra.mxu0 0.0
    %2556 = vmatprep.mubr.f32.mxu0 0.0
    %2557 = vmatmul.mubr.f32.gmra.mxu0 %v2490
    %v2558 = vpop.f32.mrf.mxu0
    %v2559 = vadd.f32 0.0, %v2558
    %v2560 = vpop.f32.mrf.mxu0
    %2561 = vdwg.mxu0
    %v2563 = vsel %vm293, %v2559, 0
    %2565 = vmatprep.subr.mxu0 0.0
    %2566 = vmatpush1.msra.mxu0 0.0
    %2567 = vmatprep.subr.mxu0 0.0
    %2568 = vmatpush1.msra.mxu0 0.0
    %2569 = vmatprep.subr.mxu0 0.0
    %2570 = vmatpush1.msra.mxu0 0.0
    %2571 = vmatprep.subr.mxu0 0.0
    %2572 = vmatpush1.msra.mxu0 0.0
    %2573 = vmatprep.subr.mxu0 0.0
    %2574 = vmatpush1.msra.mxu0 0.0
    %2575 = vmatprep.subr.mxu0 0.0
    %2576 = vmatpush1.msra.mxu0 0.0
    %2577 = vmatprep.subr.mxu0 0.0
    %2578 = vmatpush1.msra.mxu0 0.0
    %2579 = vmatprep.subr.mxu0 0.0
    %2580 = vmatpush1.msra.mxu0 0.0
    %2581 = vmatprep.subr.mxu0 0.0
    %2582 = vmatpush1.msra.mxu0 0.0
    %2583 = vmatprep.subr.mxu0 0.0
    %2584 = vmatpush1.msra.mxu0 0.0
    %2585 = vmatprep.subr.mxu0 0.0
    %2586 = vmatpush1.msra.mxu0 0.0
    %2587 = vmatprep.subr.mxu0 0.0
    %2588 = vmatpush1.msra.mxu0 0.0
    %2589 = vmatprep.subr.mxu0 0.0
    %2590 = vmatpush1.msra.mxu0 0.0
    %2591 = vmatprep.subr.mxu0 0.0
    %2592 = vmatpush1.msra.mxu0 0.0
    %2593 = vmatprep.subr.mxu0 0.0
    %2594 = vmatpush1.msra.mxu0 %v2405
    %2595 = vmatprep.subr.mxu0 0.0
    %2596 = vmatpush1.msra.mxu0 %v2404
    %2597 = vmatprep.subr.mxu0 0.0
    %2598 = vmatpush2.msra.mxu0 0.0
    %2599 = vmatprep.subr.mxu0 0.0
    %2600 = vmatpush2.msra.mxu0 0.0
    %2601 = vmatprep.subr.mxu0 0.0
    %2602 = vmatpush2.msra.mxu0 0.0
    %2603 = vmatprep.subr.mxu0 0.0
    %2604 = vmatpush2.msra.mxu0 0.0
    %2605 = vmatprep.subr.mxu0 0.0
    %2606 = vmatpush2.msra.mxu0 0.0
    %2607 = vmatprep.subr.mxu0 0.0
    %2608 = vmatpush2.msra.mxu0 0.0
    %2609 = vmatprep.subr.mxu0 0.0
    %2610 = vmatpush2.msra.mxu0 0.0
    %2611 = vmatprep.subr.mxu0 0.0
    %2612 = vmatpush2.msra.mxu0 0.0
    %2613 = vmatprep.subr.mxu0 0.0
    %2614 = vmatpush2.msra.mxu0 0.0
    %2615 = vmatprep.subr.mxu0 0.0
    %2616 = vmatpush2.msra.mxu0 0.0
    %2617 = vmatprep.subr.mxu0 0.0
    %2618 = vmatpush2.msra.mxu0 0.0
    %2619 = vmatprep.subr.mxu0 0.0
    %2620 = vmatpush2.msra.mxu0 0.0
    %2621 = vmatprep.subr.mxu0 0.0
    %2622 = vmatpush2.msra.mxu0 0.0
    %2623 = vmatprep.subr.mxu0 0.0
    %2624 = vmatpush2.msra.mxu0 0.0
    %2625 = vmatprep.subr.mxu0 0.0
    %2626 = vmatpush2.msra.mxu0 0.0
    %2627 = vmatprep.subr.mxu0 0.0
    %2628 = vmatpush2.msra.mxu0 0.0
    %2629 = vmatprep.mubr.f32.mxu0 0.0
    %2630 = vmatmul.mubr.f32.gmra.mxu0 %v2563
    %v2631 = vpop.f32.mrf.mxu0
    %v2632 = vadd.f32 0.0, %v2631
    %v2633 = vpop.f32.mrf.mxu0
    %2634 = vdwg.mxu0
    %v2635 = vadd.f32 %v1932, %v2632
    %v2637 = vsel %vm293, %v2240, 0
    %v2640 = vsel %vm293, %v2320, 0
    %2642 = vmatprep.subr.mxu0 0.0
    %2643 = vmatpush1.xpose.msra.mxu0 0.0
    %2644 = vmatprep.subr.mxu0 0.0
    %2645 = vmatpush1.xpose.msra.mxu0 0.0
    %2646 = vmatprep.subr.mxu0 0.0
    %2647 = vmatpush1.xpose.msra.mxu0 0.0
    %2648 = vmatprep.subr.mxu0 0.0
    %2649 = vmatpush1.xpose.msra.mxu0 0.0
    %2650 = vmatprep.subr.mxu0 0.0
    %2651 = vmatpush1.xpose.msra.mxu0 0.0
    %2652 = vmatprep.subr.mxu0 0.0
    %2653 = vmatpush1.xpose.msra.mxu0 0.0
    %2654 = vmatprep.subr.mxu0 0.0
    %2655 = vmatpush1.xpose.msra.mxu0 0.0
    %2656 = vmatprep.subr.mxu0 0.0
    %2657 = vmatpush1.xpose.msra.mxu0 0.0
    %2658 = vmatprep.subr.mxu0 0.0
    %2659 = vmatpush1.xpose.msra.mxu0 0.0
    %2660 = vmatprep.subr.mxu0 0.0
    %2661 = vmatpush1.xpose.msra.mxu0 0.0
    %2662 = vmatprep.subr.mxu0 0.0
    %2663 = vmatpush1.xpose.msra.mxu0 0.0
    %2664 = vmatprep.subr.mxu0 0.0
    %2665 = vmatpush1.xpose.msra.mxu0 0.0
    %2666 = vmatprep.subr.mxu0 0.0
    %2667 = vmatpush1.xpose.msra.mxu0 0.0
    %2668 = vmatprep.subr.mxu0 0.0
    %2669 = vmatpush1.xpose.msra.mxu0 0.0
    %2670 = vmatprep.subr.mxu0 0.0
    %2671 = vmatpush1.xpose.msra.mxu0 0.0
    %2672 = vmatprep.subr.mxu0 0.0
    %2673 = vmatpush1.xpose.msra.mxu0 %v2640
    %2674 = vmatprep.subr.mxu0 0.0
    %2675 = vmatpush2.xpose.msra.mxu0 0.0
    %2676 = vmatprep.subr.mxu0 0.0
    %2677 = vmatpush2.xpose.msra.mxu0 0.0
    %2678 = vmatprep.subr.mxu0 0.0
    %2679 = vmatpush2.xpose.msra.mxu0 0.0
    %2680 = vmatprep.subr.mxu0 0.0
    %2681 = vmatpush2.xpose.msra.mxu0 0.0
    %2682 = vmatprep.subr.mxu0 0.0
    %2683 = vmatpush2.xpose.msra.mxu0 0.0
    %2684 = vmatprep.subr.mxu0 0.0
    %2685 = vmatpush2.xpose.msra.mxu0 0.0
    %2686 = vmatprep.subr.mxu0 0.0
    %2687 = vmatpush2.xpose.msra.mxu0 0.0
    %2688 = vmatprep.subr.mxu0 0.0
    %2689 = vmatpush2.xpose.msra.mxu0 0.0
    %2690 = vmatprep.subr.mxu0 0.0
    %2691 = vmatpush2.xpose.msra.mxu0 0.0
    %2692 = vmatprep.subr.mxu0 0.0
    %2693 = vmatpush2.xpose.msra.mxu0 0.0
    %2694 = vmatprep.subr.mxu0 0.0
    %2695 = vmatpush2.xpose.msra.mxu0 0.0
    %2696 = vmatprep.subr.mxu0 0.0
    %2697 = vmatpush2.xpose.msra.mxu0 0.0
    %2698 = vmatprep.subr.mxu0 0.0
    %2699 = vmatpush2.xpose.msra.mxu0 0.0
    %2700 = vmatprep.subr.mxu0 0.0
    %2701 = vmatpush2.xpose.msra.mxu0 0.0
    %2702 = vmatprep.subr.mxu0 0.0
    %2703 = vmatpush2.xpose.msra.mxu0 0.0
    %2704 = vmatprep.subr.mxu0 0.0
    %2705 = vmatpush2.xpose.msra.mxu0 0.0
    %2706 = vmatprep.mubr.f32.mxu0 0.0
    %2707 = vmatmul.mubr.f32.gmra.mxu0 %v2637
    %v2708 = vpop.f32.mrf.mxu0
    %v2709 = vadd.f32 0.0, %v2708
    %v2710 = vpop.f32.mrf.mxu0
    %2711 = vdwg.mxu0
    %v2712 = vmul.f32 %v2709, 1.442695
    %v2713 = vpow.pop %v2712
    %v2714 = vsel %vm372, %v2713, 0.0
    %2715 = vadd.xlane.f32.xlu0 %v2714
    %v2716 = vpop.xlane.xlu0 %2715
    %v2717 = vrcp.pop %v2716
    %v2718 = vmul.f32 %v2713, %v2717
    %v2720 = vsel %vm372, %v2718, 0
    %2722 = vmatprep.subr.mxu0 0.0
    %2723 = vmatpush1.msra.mxu0 0.0
    %2724 = vmatprep.subr.mxu0 0.0
    %2725 = vmatpush1.msra.mxu0 0.0
    %2726 = vmatprep.subr.mxu0 0.0
    %2727 = vmatpush1.msra.mxu0 0.0
    %2728 = vmatprep.subr.mxu0 0.0
    %2729 = vmatpush1.msra.mxu0 0.0
    %2730 = vmatprep.subr.mxu0 0.0
    %2731 = vmatpush1.msra.mxu0 0.0
    %2732 = vmatprep.subr.mxu0 0.0
    %2733 = vmatpush1.msra.mxu0 0.0
    %2734 = vmatprep.subr.mxu0 0.0
    %2735 = vmatpush1.msra.mxu0 0.0
    %2736 = vmatprep.subr.mxu0 0.0
    %2737 = vmatpush1.msra.mxu0 0.0
    %2738 = vmatprep.subr.mxu0 0.0
    %2739 = vmatpush1.msra.mxu0 0.0
    %2740 = vmatprep.subr.mxu0 0.0
    %2741 = vmatpush1.msra.mxu0 0.0
    %2742 = vmatprep.subr.mxu0 0.0
    %2743 = vmatpush1.msra.mxu0 0.0
    %2744 = vmatprep.subr.mxu0 0.0
    %2745 = vmatpush1.msra.mxu0 0.0
    %2746 = vmatprep.subr.mxu0 0.0
    %2747 = vmatpush1.msra.mxu0 0.0
    %2748 = vmatprep.subr.mxu0 0.0
    %2749 = vmatpush1.msra.mxu0 0.0
    %2750 = vmatprep.subr.mxu0 0.0
    %2751 = vmatpush1.msra.mxu0 0.0
    %2752 = vmatprep.subr.mxu0 0.0
    %2753 = vmatpush1.msra.mxu0 %v2400
    %2754 = vmatprep.subr.mxu0 0.0
    %2755 = vmatpush2.msra.mxu0 0.0
    %2756 = vmatprep.subr.mxu0 0.0
    %2757 = vmatpush2.msra.mxu0 0.0
    %2758 = vmatprep.subr.mxu0 0.0
    %2759 = vmatpush2.msra.mxu0 0.0
    %2760 = vmatprep.subr.mxu0 0.0
    %2761 = vmatpush2.msra.mxu0 0.0
    %2762 = vmatprep.subr.mxu0 0.0
    %2763 = vmatpush2.msra.mxu0 0.0
    %2764 = vmatprep.subr.mxu0 0.0
    %2765 = vmatpush2.msra.mxu0 0.0
    %2766 = vmatprep.subr.mxu0 0.0
    %2767 = vmatpush2.msra.mxu0 0.0
    %2768 = vmatprep.subr.mxu0 0.0
    %2769 = vmatpush2.msra.mxu0 0.0
    %2770 = vmatprep.subr.mxu0 0.0
    %2771 = vmatpush2.msra.mxu0 0.0
    %2772 = vmatprep.subr.mxu0 0.0
    %2773 = vmatpush2.msra.mxu0 0.0
    %2774 = vmatprep.subr.mxu0 0.0
    %2775 = vmatpush2.msra.mxu0 0.0
    %2776 = vmatprep.subr.mxu0 0.0
    %2777 = vmatpush2.msra.mxu0 0.0
    %2778 = vmatprep.subr.mxu0 0.0
    %2779 = vmatpush2.msra.mxu0 0.0
    %2780 = vmatprep.subr.mxu0 0.0
    %2781 = vmatpush2.msra.mxu0 0.0
    %2782 = vmatprep.subr.mxu0 0.0
    %2783 = vmatpush2.msra.mxu0 0.0
    %2784 = vmatprep.subr.mxu0 0.0
    %2785 = vmatpush2.msra.mxu0 0.0
    %2786 = vmatprep.mubr.f32.mxu0 0.0
    %2787 = vmatmul.mubr.f32.gmra.mxu0 %v2720
    %v2788 = vpop.f32.mrf.mxu0
    %v2789 = vadd.f32 0.0, %v2788
    %v2790 = vpop.f32.mrf.mxu0
    %2791 = vdwg.mxu0
    %v2793 = vsel %vm293, %v2789, 0
    %2795 = vmatprep.subr.mxu0 0.0
    %2796 = vmatpush1.msra.mxu0 0.0
    %2797 = vmatprep.subr.mxu0 0.0
    %2798 = vmatpush1.msra.mxu0 0.0
    %2799 = vmatprep.subr.mxu0 0.0
    %2800 = vmatpush1.msra.mxu0 0.0
    %2801 = vmatprep.subr.mxu0 0.0
    %2802 = vmatpush1.msra.mxu0 0.0
    %2803 = vmatprep.subr.mxu0 0.0
    %2804 = vmatpush1.msra.mxu0 0.0
    %2805 = vmatprep.subr.mxu0 0.0
    %2806 = vmatpush1.msra.mxu0 0.0
    %2807 = vmatprep.subr.mxu0 0.0
    %2808 = vmatpush1.msra.mxu0 0.0
    %2809 = vmatprep.subr.mxu0 0.0
    %2810 = vmatpush1.msra.mxu0 0.0
    %2811 = vmatprep.subr.mxu0 0.0
    %2812 = vmatpush1.msra.mxu0 0.0
    %2813 = vmatprep.subr.mxu0 0.0
    %2814 = vmatpush1.msra.mxu0 0.0
    %2815 = vmatprep.subr.mxu0 0.0
    %2816 = vmatpush1.msra.mxu0 0.0
    %2817 = vmatprep.subr.mxu0 0.0
    %2818 = vmatpush1.msra.mxu0 0.0
    %2819 = vmatprep.subr.mxu0 0.0
    %2820 = vmatpush1.msra.mxu0 0.0
    %2821 = vmatprep.subr.mxu0 0.0
    %2822 = vmatpush1.msra.mxu0 0.0
    %2823 = vmatprep.subr.mxu0 0.0
    %2824 = vmatpush1.msra.mxu0 %v2405
    %2825 = vmatprep.subr.mxu0 0.0
    %2826 = vmatpush1.msra.mxu0 %v2404
    %2827 = vmatprep.subr.mxu0 0.0
    %2828 = vmatpush2.msra.mxu0 0.0
    %2829 = vmatprep.subr.mxu0 0.0
    %2830 = vmatpush2.msra.mxu0 0.0
    %2831 = vmatprep.subr.mxu0 0.0
    %2832 = vmatpush2.msra.mxu0 0.0
    %2833 = vmatprep.subr.mxu0 0.0
    %2834 = vmatpush2.msra.mxu0 0.0
    %2835 = vmatprep.subr.mxu0 0.0
    %2836 = vmatpush2.msra.mxu0 0.0
    %2837 = vmatprep.subr.mxu0 0.0
    %2838 = vmatpush2.msra.mxu0 0.0
    %2839 = vmatprep.subr.mxu0 0.0
    %2840 = vmatpush2.msra.mxu0 0.0
    %2841 = vmatprep.subr.mxu0 0.0
    %2842 = vmatpush2.msra.mxu0 0.0
    %2843 = vmatprep.subr.mxu0 0.0
    %2844 = vmatpush2.msra.mxu0 0.0
    %2845 = vmatprep.subr.mxu0 0.0
    %2846 = vmatpush2.msra.mxu0 0.0
    %2847 = vmatprep.subr.mxu0 0.0
    %2848 = vmatpush2.msra.mxu0 0.0
    %2849 = vmatprep.subr.mxu0 0.0
    %2850 = vmatpush2.msra.mxu0 0.0
    %2851 = vmatprep.subr.mxu0 0.0
    %2852 = vmatpush2.msra.mxu0 0.0
    %2853 = vmatprep.subr.mxu0 0.0
    %2854 = vmatpush2.msra.mxu0 0.0
    %2855 = vmatprep.subr.mxu0 0.0
    %2856 = vmatpush2.msra.mxu0 0.0
    %2857 = vmatprep.subr.mxu0 0.0
    %2858 = vmatpush2.msra.mxu0 0.0
    %2859 = vmatprep.mubr.f32.mxu0 0.0
    %2860 = vmatmul.mubr.f32.gmra.mxu0 %v2793
    %v2861 = vpop.f32.mrf.mxu0
    %v2862 = vadd.f32 0.0, %v2861
    %v2863 = vpop.f32.mrf.mxu0
    %2864 = vdwg.mxu0
    %v2865 = vadd.f32 %v2162, %v2862
    %s2866 = scalar_lea.vmem %s4, 128
    %v2867 = vld [vmem:[%s2866] sm:$0xff]
    %v2868 = vld [vmem:[%s2866 + $0x8] sm:$0xff]
    %v2869 = vld [vmem:[%s2866 + $0x10] sm:$0xff]
    %v2870 = vld [vmem:[%s2866 + $0x18] sm:$0xff]
    %2871 = vmatprep.subr.mxu0 0.0
    %2872 = vmatpush1.msra.mxu0 0.0
    %2873 = vmatprep.subr.mxu0 0.0
    %2874 = vmatpush1.msra.mxu0 0.0
    %2875 = vmatprep.subr.mxu0 0.0
    %2876 = vmatpush1.msra.mxu0 0.0
    %2877 = vmatprep.subr.mxu0 0.0
    %2878 = vmatpush1.msra.mxu0 0.0
    %2879 = vmatprep.subr.mxu0 0.0
    %2880 = vmatpush1.msra.mxu0 0.0
    %2881 = vmatprep.subr.mxu0 0.0
    %2882 = vmatpush1.msra.mxu0 0.0
    %2883 = vmatprep.subr.mxu0 0.0
    %2884 = vmatpush1.msra.mxu0 0.0
    %2885 = vmatprep.subr.mxu0 0.0
    %2886 = vmatpush1.msra.mxu0 0.0
    %2887 = vmatprep.subr.mxu0 0.0
    %2888 = vmatpush1.msra.mxu0 0.0
    %2889 = vmatprep.subr.mxu0 0.0
    %2890 = vmatpush1.msra.mxu0 0.0
    %2891 = vmatprep.subr.mxu0 0.0
    %2892 = vmatpush1.msra.mxu0 0.0
    %2893 = vmatprep.subr.mxu0 0.0
    %2894 = vmatpush1.msra.mxu0 0.0
    %2895 = vmatprep.subr.mxu0 0.0
    %2896 = vmatpush1.msra.mxu0 %v2870
    %2897 = vmatprep.subr.mxu0 0.0
    %2898 = vmatpush1.msra.mxu0 %v2869
    %2899 = vmatprep.subr.mxu0 0.0
    %2900 = vmatpush1.msra.mxu0 %v2868
    %2901 = vmatprep.subr.mxu0 0.0
    %2902 = vmatpush1.msra.mxu0 %v2867
    %2903 = vmatprep.subr.mxu0 0.0
    %2904 = vmatpush2.msra.mxu0 0.0
    %2905 = vmatprep.subr.mxu0 0.0
    %2906 = vmatpush2.msra.mxu0 0.0
    %2907 = vmatprep.subr.mxu0 0.0
    %2908 = vmatpush2.msra.mxu0 0.0
    %2909 = vmatprep.subr.mxu0 0.0
    %2910 = vmatpush2.msra.mxu0 0.0
    %2911 = vmatprep.subr.mxu0 0.0
    %2912 = vmatpush2.msra.mxu0 0.0
    %2913 = vmatprep.subr.mxu0 0.0
    %2914 = vmatpush2.msra.mxu0 0.0
    %2915 = vmatprep.subr.mxu0 0.0
    %2916 = vmatpush2.msra.mxu0 0.0
    %2917 = vmatprep.subr.mxu0 0.0
    %2918 = vmatpush2.msra.mxu0 0.0
    %2919 = vmatprep.subr.mxu0 0.0
    %2920 = vmatpush2.msra.mxu0 0.0
    %2921 = vmatprep.subr.mxu0 0.0
    %2922 = vmatpush2.msra.mxu0 0.0
    %2923 = vmatprep.subr.mxu0 0.0
    %2924 = vmatpush2.msra.mxu0 0.0
    %2925 = vmatprep.subr.mxu0 0.0
    %2926 = vmatpush2.msra.mxu0 0.0
    %2927 = vmatprep.subr.mxu0 0.0
    %2928 = vmatpush2.msra.mxu0 0.0
    %2929 = vmatprep.subr.mxu0 0.0
    %2930 = vmatpush2.msra.mxu0 0.0
    %2931 = vmatprep.subr.mxu0 0.0
    %2932 = vmatpush2.msra.mxu0 0.0
    %2933 = vmatprep.subr.mxu0 0.0
    %2934 = vmatpush2.msra.mxu0 0.0
    %2935 = vmatprep.mubr.f32.mxu0 0.0
    %2936 = vmatmul.mubr.f32.gmra.mxu0 %v47
    %v2937 = vpop.f32.mrf.mxu0
    %v2938 = vadd.f32 0.0, %v2937
    %v2939 = vpop.f32.mrf.mxu0
    %2940 = vmatprep.mubr.f32.mxu0 0.0
    %2941 = vmatmul.mubr.f32.gmra.mxu0 %v50
    %v2942 = vpop.f32.mrf.mxu0
    %v2943 = vadd.f32 0.0, %v2942
    %v2944 = vpop.f32.mrf.mxu0
    %2945 = vdwg.mxu0
    %s2946 = scalar_lea.vmem %s5, 128
    %v2947 = vld [vmem:[%s2946] sm:$0xff]
    %v2948 = vld [vmem:[%s2946 + $0x8] sm:$0xff]
    %v2949 = vld [vmem:[%s2946 + $0x10] sm:$0xff]
    %v2950 = vld [vmem:[%s2946 + $0x18] sm:$0xff]
    %v2952 = vsel %vm45, %v39, 0
    %v2955 = vsel %vm45, %v40, 0
    %2957 = vmatprep.subr.mxu0 0.0
    %2958 = vmatpush1.msra.mxu0 0.0
    %2959 = vmatprep.subr.mxu0 0.0
    %2960 = vmatpush1.msra.mxu0 0.0
    %2961 = vmatprep.subr.mxu0 0.0
    %2962 = vmatpush1.msra.mxu0 0.0
    %2963 = vmatprep.subr.mxu0 0.0
    %2964 = vmatpush1.msra.mxu0 0.0
    %2965 = vmatprep.subr.mxu0 0.0
    %2966 = vmatpush1.msra.mxu0 0.0
    %2967 = vmatprep.subr.mxu0 0.0
    %2968 = vmatpush1.msra.mxu0 0.0
    %2969 = vmatprep.subr.mxu0 0.0
    %2970 = vmatpush1.msra.mxu0 0.0
    %2971 = vmatprep.subr.mxu0 0.0
    %2972 = vmatpush1.msra.mxu0 0.0
    %2973 = vmatprep.subr.mxu0 0.0
    %2974 = vmatpush1.msra.mxu0 0.0
    %2975 = vmatprep.subr.mxu0 0.0
    %2976 = vmatpush1.msra.mxu0 0.0
    %2977 = vmatprep.subr.mxu0 0.0
    %2978 = vmatpush1.msra.mxu0 0.0
    %2979 = vmatprep.subr.mxu0 0.0
    %2980 = vmatpush1.msra.mxu0 0.0
    %2981 = vmatprep.subr.mxu0 0.0
    %2982 = vmatpush1.msra.mxu0 %v2950
    %2983 = vmatprep.subr.mxu0 0.0
    %2984 = vmatpush1.msra.mxu0 %v2949
    %2985 = vmatprep.subr.mxu0 0.0
    %2986 = vmatpush1.msra.mxu0 %v2948
    %2987 = vmatprep.subr.mxu0 0.0
    %2988 = vmatpush1.msra.mxu0 %v2947
    %2989 = vmatprep.subr.mxu0 0.0
    %2990 = vmatpush2.msra.mxu0 0.0
    %2991 = vmatprep.subr.mxu0 0.0
    %2992 = vmatpush2.msra.mxu0 0.0
    %2993 = vmatprep.subr.mxu0 0.0
    %2994 = vmatpush2.msra.mxu0 0.0
    %2995 = vmatprep.subr.mxu0 0.0
    %2996 = vmatpush2.msra.mxu0 0.0
    %2997 = vmatprep.subr.mxu0 0.0
    %2998 = vmatpush2.msra.mxu0 0.0
    %2999 = vmatprep.subr.mxu0 0.0
    %3000 = vmatpush2.msra.mxu0 0.0
    %3001 = vmatprep.subr.mxu0 0.0
    %3002 = vmatpush2.msra.mxu0 0.0
    %3003 = vmatprep.subr.mxu0 0.0
    %3004 = vmatpush2.msra.mxu0 0.0
    %3005 = vmatprep.subr.mxu0 0.0
    %3006 = vmatpush2.msra.mxu0 0.0
    %3007 = vmatprep.subr.mxu0 0.0
    %3008 = vmatpush2.msra.mxu0 0.0
    %3009 = vmatprep.subr.mxu0 0.0
    %3010 = vmatpush2.msra.mxu0 0.0
    %3011 = vmatprep.subr.mxu0 0.0
    %3012 = vmatpush2.msra.mxu0 0.0
    %3013 = vmatprep.subr.mxu0 0.0
    %3014 = vmatpush2.msra.mxu0 0.0
    %3015 = vmatprep.subr.mxu0 0.0
    %3016 = vmatpush2.msra.mxu0 0.0
    %3017 = vmatprep.subr.mxu0 0.0
    %3018 = vmatpush2.msra.mxu0 0.0
    %3019 = vmatprep.subr.mxu0 0.0
    %3020 = vmatpush2.msra.mxu0 0.0
    %3021 = vmatprep.mubr.f32.mxu0 0.0
    %3022 = vmatmul.mubr.f32.gmra.mxu0 %v2952
    %v3023 = vpop.f32.mrf.mxu0
    %v3024 = vadd.f32 0.0, %v3023
    %v3025 = vpop.f32.mrf.mxu0
    %3026 = vmatprep.mubr.f32.mxu0 0.0
    %3027 = vmatmul.mubr.f32.gmra.mxu0 %v2955
    %v3028 = vpop.f32.mrf.mxu0
    %v3029 = vadd.f32 0.0, %v3028
    %v3030 = vpop.f32.mrf.mxu0
    %3031 = vdwg.mxu0
    %s3032 = scalar_lea.vmem %s6, 128
    %v3033 = vld [vmem:[%s3032] sm:$0xff]
    %v3034 = vld [vmem:[%s3032 + $0x8] sm:$0xff]
    %v3035 = vld [vmem:[%s3032 + $0x10] sm:$0xff]
    %v3036 = vld [vmem:[%s3032 + $0x18] sm:$0xff]
    %3037 = vmatprep.subr.mxu0 0.0
    %3038 = vmatpush1.msra.mxu0 0.0
    %3039 = vmatprep.subr.mxu0 0.0
    %3040 = vmatpush1.msra.mxu0 0.0
    %3041 = vmatprep.subr.mxu0 0.0
    %3042 = vmatpush1.msra.mxu0 0.0
    %3043 = vmatprep.subr.mxu0 0.0
    %3044 = vmatpush1.msra.mxu0 0.0
    %3045 = vmatprep.subr.mxu0 0.0
    %3046 = vmatpush1.msra.mxu0 0.0
    %3047 = vmatprep.subr.mxu0 0.0
    %3048 = vmatpush1.msra.mxu0 0.0
    %3049 = vmatprep.subr.mxu0 0.0
    %3050 = vmatpush1.msra.mxu0 0.0
    %3051 = vmatprep.subr.mxu0 0.0
    %3052 = vmatpush1.msra.mxu0 0.0
    %3053 = vmatprep.subr.mxu0 0.0
    %3054 = vmatpush1.msra.mxu0 0.0
    %3055 = vmatprep.subr.mxu0 0.0
    %3056 = vmatpush1.msra.mxu0 0.0
    %3057 = vmatprep.subr.mxu0 0.0
    %3058 = vmatpush1.msra.mxu0 0.0
    %3059 = vmatprep.subr.mxu0 0.0
    %3060 = vmatpush1.msra.mxu0 0.0
    %3061 = vmatprep.subr.mxu0 0.0
    %3062 = vmatpush1.msra.mxu0 %v3036
    %3063 = vmatprep.subr.mxu0 0.0
    %3064 = vmatpush1.msra.mxu0 %v3035
    %3065 = vmatprep.subr.mxu0 0.0
    %3066 = vmatpush1.msra.mxu0 %v3034
    %3067 = vmatprep.subr.mxu0 0.0
    %3068 = vmatpush1.msra.mxu0 %v3033
    %3069 = vmatprep.subr.mxu0 0.0
    %3070 = vmatpush2.msra.mxu0 0.0
    %3071 = vmatprep.subr.mxu0 0.0
    %3072 = vmatpush2.msra.mxu0 0.0
    %3073 = vmatprep.subr.mxu0 0.0
    %3074 = vmatpush2.msra.mxu0 0.0
    %3075 = vmatprep.subr.mxu0 0.0
    %3076 = vmatpush2.msra.mxu0 0.0
    %3077 = vmatprep.subr.mxu0 0.0
    %3078 = vmatpush2.msra.mxu0 0.0
    %3079 = vmatprep.subr.mxu0 0.0
    %3080 = vmatpush2.msra.mxu0 0.0
    %3081 = vmatprep.subr.mxu0 0.0
    %3082 = vmatpush2.msra.mxu0 0.0
    %3083 = vmatprep.subr.mxu0 0.0
    %3084 = vmatpush2.msra.mxu0 0.0
    %3085 = vmatprep.subr.mxu0 0.0
    %3086 = vmatpush2.msra.mxu0 0.0
    %3087 = vmatprep.subr.mxu0 0.0
    %3088 = vmatpush2.msra.mxu0 0.0
    %3089 = vmatprep.subr.mxu0 0.0
    %3090 = vmatpush2.msra.mxu0 0.0
    %3091 = vmatprep.subr.mxu0 0.0
    %3092 = vmatpush2.msra.mxu0 0.0
    %3093 = vmatprep.subr.mxu0 0.0
    %3094 = vmatpush2.msra.mxu0 0.0
    %3095 = vmatprep.subr.mxu0 0.0
    %3096 = vmatpush2.msra.mxu0 0.0
    %3097 = vmatprep.subr.mxu0 0.0
    %3098 = vmatpush2.msra.mxu0 0.0
    %3099 = vmatprep.subr.mxu0 0.0
    %3100 = vmatpush2.msra.mxu0 0.0
    %3101 = vmatprep.mubr.f32.mxu0 0.0
    %3102 = vmatmul.mubr.f32.gmra.mxu0 %v2952
    %v3103 = vpop.f32.mrf.mxu0
    %v3104 = vadd.f32 0.0, %v3103
    %v3105 = vpop.f32.mrf.mxu0
    %3106 = vmatprep.mubr.f32.mxu0 0.0
    %3107 = vmatmul.mubr.f32.gmra.mxu0 %v2955
    %v3108 = vpop.f32.mrf.mxu0
    %v3109 = vadd.f32 0.0, %v3108
    %v3110 = vpop.f32.mrf.mxu0
    %3111 = vdwg.mxu0
    %s3112 = scalar_lea.vmem %s7, 64
    %v3113 = vld [vmem:[%s3112] sm:$0xff]
    %v3114 = vld [vmem:[%s3112 + $0x8] sm:$0xff]
    %v3116 = vsel %vm293, %v2938, 0
    %v3119 = vsel %vm293, %v3024, 0
    %3121 = vmatprep.subr.mxu0 0.0
    %3122 = vmatpush1.xpose.msra.mxu0 0.0
    %3123 = vmatprep.subr.mxu0 0.0
    %3124 = vmatpush1.xpose.msra.mxu0 0.0
    %3125 = vmatprep.subr.mxu0 0.0
    %3126 = vmatpush1.xpose.msra.mxu0 0.0
    %3127 = vmatprep.subr.mxu0 0.0
    %3128 = vmatpush1.xpose.msra.mxu0 0.0
    %3129 = vmatprep.subr.mxu0 0.0
    %3130 = vmatpush1.xpose.msra.mxu0 0.0
    %3131 = vmatprep.subr.mxu0 0.0
    %3132 = vmatpush1.xpose.msra.mxu0 0.0
    %3133 = vmatprep.subr.mxu0 0.0
    %3134 = vmatpush1.xpose.msra.mxu0 0.0
    %3135 = vmatprep.subr.mxu0 0.0
    %3136 = vmatpush1.xpose.msra.mxu0 0.0
    %3137 = vmatprep.subr.mxu0 0.0
    %3138 = vmatpush1.xpose.msra.mxu0 0.0
    %3139 = vmatprep.subr.mxu0 0.0
    %3140 = vmatpush1.xpose.msra.mxu0 0.0
    %3141 = vmatprep.subr.mxu0 0.0
    %3142 = vmatpush1.xpose.msra.mxu0 0.0
    %3143 = vmatprep.subr.mxu0 0.0
    %3144 = vmatpush1.xpose.msra.mxu0 0.0
    %3145 = vmatprep.subr.mxu0 0.0
    %3146 = vmatpush1.xpose.msra.mxu0 0.0
    %3147 = vmatprep.subr.mxu0 0.0
    %3148 = vmatpush1.xpose.msra.mxu0 0.0
    %3149 = vmatprep.subr.mxu0 0.0
    %3150 = vmatpush1.xpose.msra.mxu0 0.0
    %3151 = vmatprep.subr.mxu0 0.0
    %3152 = vmatpush1.xpose.msra.mxu0 %v3119
    %3153 = vmatprep.subr.mxu0 0.0
    %3154 = vmatpush2.xpose.msra.mxu0 0.0
    %3155 = vmatprep.subr.mxu0 0.0
    %3156 = vmatpush2.xpose.msra.mxu0 0.0
    %3157 = vmatprep.subr.mxu0 0.0
    %3158 = vmatpush2.xpose.msra.mxu0 0.0
    %3159 = vmatprep.subr.mxu0 0.0
    %3160 = vmatpush2.xpose.msra.mxu0 0.0
    %3161 = vmatprep.subr.mxu0 0.0
    %3162 = vmatpush2.xpose.msra.mxu0 0.0
    %3163 = vmatprep.subr.mxu0 0.0
    %3164 = vmatpush2.xpose.msra.mxu0 0.0
    %3165 = vmatprep.subr.mxu0 0.0
    %3166 = vmatpush2.xpose.msra.mxu0 0.0
    %3167 = vmatprep.subr.mxu0 0.0
    %3168 = vmatpush2.xpose.msra.mxu0 0.0
    %3169 = vmatprep.subr.mxu0 0.0
    %3170 = vmatpush2.xpose.msra.mxu0 0.0
    %3171 = vmatprep.subr.mxu0 0.0
    %3172 = vmatpush2.xpose.msra.mxu0 0.0
    %3173 = vmatprep.subr.mxu0 0.0
    %3174 = vmatpush2.xpose.msra.mxu0 0.0
    %3175 = vmatprep.subr.mxu0 0.0
    %3176 = vmatpush2.xpose.msra.mxu0 0.0
    %3177 = vmatprep.subr.mxu0 0.0
    %3178 = vmatpush2.xpose.msra.mxu0 0.0
    %3179 = vmatprep.subr.mxu0 0.0
    %3180 = vmatpush2.xpose.msra.mxu0 0.0
    %3181 = vmatprep.subr.mxu0 0.0
    %3182 = vmatpush2.xpose.msra.mxu0 0.0
    %3183 = vmatprep.subr.mxu0 0.0
    %3184 = vmatpush2.xpose.msra.mxu0 0.0
    %3185 = vmatprep.mubr.f32.mxu0 0.0
    %3186 = vmatmul.mubr.f32.gmra.mxu0 %v3116
    %v3187 = vpop.f32.mrf.mxu0
    %v3188 = vadd.f32 0.0, %v3187
    %v3189 = vpop.f32.mrf.mxu0
    %3190 = vdwg.mxu0
    %v3191 = vmul.f32 %v3188, 1.442695
    %v3192 = vpow.pop %v3191
    %v3193 = vsel %vm372, %v3192, 0.0
    %3194 = vadd.xlane.f32.xlu0 %v3193
    %v3195 = vpop.xlane.xlu0 %3194
    %v3196 = vrcp.pop %v3195
    %v3197 = vmul.f32 %v3192, %v3196
    %v3199 = vsel %vm372, %v3197, 0
    %3201 = vmatprep.subr.mxu0 0.0
    %3202 = vmatpush1.msra.mxu0 0.0
    %3203 = vmatprep.subr.mxu0 0.0
    %3204 = vmatpush1.msra.mxu0 0.0
    %3205 = vmatprep.subr.mxu0 0.0
    %3206 = vmatpush1.msra.mxu0 0.0
    %3207 = vmatprep.subr.mxu0 0.0
    %3208 = vmatpush1.msra.mxu0 0.0
    %3209 = vmatprep.subr.mxu0 0.0
    %3210 = vmatpush1.msra.mxu0 0.0
    %3211 = vmatprep.subr.mxu0 0.0
    %3212 = vmatpush1.msra.mxu0 0.0
    %3213 = vmatprep.subr.mxu0 0.0
    %3214 = vmatpush1.msra.mxu0 0.0
    %3215 = vmatprep.subr.mxu0 0.0
    %3216 = vmatpush1.msra.mxu0 0.0
    %3217 = vmatprep.subr.mxu0 0.0
    %3218 = vmatpush1.msra.mxu0 0.0
    %3219 = vmatprep.subr.mxu0 0.0
    %3220 = vmatpush1.msra.mxu0 0.0
    %3221 = vmatprep.subr.mxu0 0.0
    %3222 = vmatpush1.msra.mxu0 0.0
    %3223 = vmatprep.subr.mxu0 0.0
    %3224 = vmatpush1.msra.mxu0 0.0
    %3225 = vmatprep.subr.mxu0 0.0
    %3226 = vmatpush1.msra.mxu0 0.0
    %3227 = vmatprep.subr.mxu0 0.0
    %3228 = vmatpush1.msra.mxu0 0.0
    %3229 = vmatprep.subr.mxu0 0.0
    %3230 = vmatpush1.msra.mxu0 0.0
    %3231 = vmatprep.subr.mxu0 0.0
    %3232 = vmatpush1.msra.mxu0 %v3104
    %3233 = vmatprep.subr.mxu0 0.0
    %3234 = vmatpush2.msra.mxu0 0.0
    %3235 = vmatprep.subr.mxu0 0.0
    %3236 = vmatpush2.msra.mxu0 0.0
    %3237 = vmatprep.subr.mxu0 0.0
    %3238 = vmatpush2.msra.mxu0 0.0
    %3239 = vmatprep.subr.mxu0 0.0
    %3240 = vmatpush2.msra.mxu0 0.0
    %3241 = vmatprep.subr.mxu0 0.0
    %3242 = vmatpush2.msra.mxu0 0.0
    %3243 = vmatprep.subr.mxu0 0.0
    %3244 = vmatpush2.msra.mxu0 0.0
    %3245 = vmatprep.subr.mxu0 0.0
    %3246 = vmatpush2.msra.mxu0 0.0
    %3247 = vmatprep.subr.mxu0 0.0
    %3248 = vmatpush2.msra.mxu0 0.0
    %3249 = vmatprep.subr.mxu0 0.0
    %3250 = vmatpush2.msra.mxu0 0.0
    %3251 = vmatprep.subr.mxu0 0.0
    %3252 = vmatpush2.msra.mxu0 0.0
    %3253 = vmatprep.subr.mxu0 0.0
    %3254 = vmatpush2.msra.mxu0 0.0
    %3255 = vmatprep.subr.mxu0 0.0
    %3256 = vmatpush2.msra.mxu0 0.0
    %3257 = vmatprep.subr.mxu0 0.0
    %3258 = vmatpush2.msra.mxu0 0.0
    %3259 = vmatprep.subr.mxu0 0.0
    %3260 = vmatpush2.msra.mxu0 0.0
    %3261 = vmatprep.subr.mxu0 0.0
    %3262 = vmatpush2.msra.mxu0 0.0
    %3263 = vmatprep.subr.mxu0 0.0
    %3264 = vmatpush2.msra.mxu0 0.0
    %3265 = vmatprep.mubr.f32.mxu0 0.0
    %3266 = vmatmul.mubr.f32.gmra.mxu0 %v3199
    %v3267 = vpop.f32.mrf.mxu0
    %v3268 = vadd.f32 0.0, %v3267
    %v3269 = vpop.f32.mrf.mxu0
    %3270 = vdwg.mxu0
    %v3272 = vsel %vm293, %v3268, 0
    %3274 = vmatprep.subr.mxu0 0.0
    %3275 = vmatpush1.msra.mxu0 0.0
    %3276 = vmatprep.subr.mxu0 0.0
    %3277 = vmatpush1.msra.mxu0 0.0
    %3278 = vmatprep.subr.mxu0 0.0
    %3279 = vmatpush1.msra.mxu0 0.0
    %3280 = vmatprep.subr.mxu0 0.0
    %3281 = vmatpush1.msra.mxu0 0.0
    %3282 = vmatprep.subr.mxu0 0.0
    %3283 = vmatpush1.msra.mxu0 0.0
    %3284 = vmatprep.subr.mxu0 0.0
    %3285 = vmatpush1.msra.mxu0 0.0
    %3286 = vmatprep.subr.mxu0 0.0
    %3287 = vmatpush1.msra.mxu0 0.0
    %3288 = vmatprep.subr.mxu0 0.0
    %3289 = vmatpush1.msra.mxu0 0.0
    %3290 = vmatprep.subr.mxu0 0.0
    %3291 = vmatpush1.msra.mxu0 0.0
    %3292 = vmatprep.subr.mxu0 0.0
    %3293 = vmatpush1.msra.mxu0 0.0
    %3294 = vmatprep.subr.mxu0 0.0
    %3295 = vmatpush1.msra.mxu0 0.0
    %3296 = vmatprep.subr.mxu0 0.0
    %3297 = vmatpush1.msra.mxu0 0.0
    %3298 = vmatprep.subr.mxu0 0.0
    %3299 = vmatpush1.msra.mxu0 0.0
    %3300 = vmatprep.subr.mxu0 0.0
    %3301 = vmatpush1.msra.mxu0 0.0
    %3302 = vmatprep.subr.mxu0 0.0
    %3303 = vmatpush1.msra.mxu0 %v3114
    %3304 = vmatprep.subr.mxu0 0.0
    %3305 = vmatpush1.msra.mxu0 %v3113
    %3306 = vmatprep.subr.mxu0 0.0
    %3307 = vmatpush2.msra.mxu0 0.0
    %3308 = vmatprep.subr.mxu0 0.0
    %3309 = vmatpush2.msra.mxu0 0.0
    %3310 = vmatprep.subr.mxu0 0.0
    %3311 = vmatpush2.msra.mxu0 0.0
    %3312 = vmatprep.subr.mxu0 0.0
    %3313 = vmatpush2.msra.mxu0 0.0
    %3314 = vmatprep.subr.mxu0 0.0
    %3315 = vmatpush2.msra.mxu0 0.0
    %3316 = vmatprep.subr.mxu0 0.0
    %3317 = vmatpush2.msra.mxu0 0.0
    %3318 = vmatprep.subr.mxu0 0.0
    %3319 = vmatpush2.msra.mxu0 0.0
    %3320 = vmatprep.subr.mxu0 0.0
    %3321 = vmatpush2.msra.mxu0 0.0
    %3322 = vmatprep.subr.mxu0 0.0
    %3323 = vmatpush2.msra.mxu0 0.0
    %3324 = vmatprep.subr.mxu0 0.0
    %3325 = vmatpush2.msra.mxu0 0.0
    %3326 = vmatprep.subr.mxu0 0.0
    %3327 = vmatpush2.msra.mxu0 0.0
    %3328 = vmatprep.subr.mxu0 0.0
    %3329 = vmatpush2.msra.mxu0 0.0
    %3330 = vmatprep.subr.mxu0 0.0
    %3331 = vmatpush2.msra.mxu0 0.0
    %3332 = vmatprep.subr.mxu0 0.0
    %3333 = vmatpush2.msra.mxu0 0.0
    %3334 = vmatprep.subr.mxu0 0.0
    %3335 = vmatpush2.msra.mxu0 0.0
    %3336 = vmatprep.subr.mxu0 0.0
    %3337 = vmatpush2.msra.mxu0 0.0
    %3338 = vmatprep.mubr.f32.mxu0 0.0
    %3339 = vmatmul.mubr.f32.gmra.mxu0 %v3272
    %v3340 = vpop.f32.mrf.mxu0
    %v3341 = vadd.f32 0.0, %v3340
    %v3342 = vpop.f32.mrf.mxu0
    %3343 = vdwg.mxu0
    %v3344 = vadd.f32 %v2635, %v3341
    %v3346 = vsel %vm293, %v2943, 0
    %v3349 = vsel %vm293, %v3029, 0
    %3351 = vmatprep.subr.mxu0 0.0
    %3352 = vmatpush1.xpose.msra.mxu0 0.0
    %3353 = vmatprep.subr.mxu0 0.0
    %3354 = vmatpush1.xpose.msra.mxu0 0.0
    %3355 = vmatprep.subr.mxu0 0.0
    %3356 = vmatpush1.xpose.msra.mxu0 0.0
    %3357 = vmatprep.subr.mxu0 0.0
    %3358 = vmatpush1.xpose.msra.mxu0 0.0
    %3359 = vmatprep.subr.mxu0 0.0
    %3360 = vmatpush1.xpose.msra.mxu0 0.0
    %3361 = vmatprep.subr.mxu0 0.0
    %3362 = vmatpush1.xpose.msra.mxu0 0.0
    %3363 = vmatprep.subr.mxu0 0.0
    %3364 = vmatpush1.xpose.msra.mxu0 0.0
    %3365 = vmatprep.subr.mxu0 0.0
    %3366 = vmatpush1.xpose.msra.mxu0 0.0
    %3367 = vmatprep.subr.mxu0 0.0
    %3368 = vmatpush1.xpose.msra.mxu0 0.0
    %3369 = vmatprep.subr.mxu0 0.0
    %3370 = vmatpush1.xpose.msra.mxu0 0.0
    %3371 = vmatprep.subr.mxu0 0.0
    %3372 = vmatpush1.xpose.msra.mxu0 0.0
    %3373 = vmatprep.subr.mxu0 0.0
    %3374 = vmatpush1.xpose.msra.mxu0 0.0
    %3375 = vmatprep.subr.mxu0 0.0
    %3376 = vmatpush1.xpose.msra.mxu0 0.0
    %3377 = vmatprep.subr.mxu0 0.0
    %3378 = vmatpush1.xpose.msra.mxu0 0.0
    %3379 = vmatprep.subr.mxu0 0.0
    %3380 = vmatpush1.xpose.msra.mxu0 0.0
    %3381 = vmatprep.subr.mxu0 0.0
    %3382 = vmatpush1.xpose.msra.mxu0 %v3349
    %3383 = vmatprep.subr.mxu0 0.0
    %3384 = vmatpush2.xpose.msra.mxu0 0.0
    %3385 = vmatprep.subr.mxu0 0.0
    %3386 = vmatpush2.xpose.msra.mxu0 0.0
    %3387 = vmatprep.subr.mxu0 0.0
    %3388 = vmatpush2.xpose.msra.mxu0 0.0
    %3389 = vmatprep.subr.mxu0 0.0
    %3390 = vmatpush2.xpose.msra.mxu0 0.0
    %3391 = vmatprep.subr.mxu0 0.0
    %3392 = vmatpush2.xpose.msra.mxu0 0.0
    %3393 = vmatprep.subr.mxu0 0.0
    %3394 = vmatpush2.xpose.msra.mxu0 0.0
    %3395 = vmatprep.subr.mxu0 0.0
    %3396 = vmatpush2.xpose.msra.mxu0 0.0
    %3397 = vmatprep.subr.mxu0 0.0
    %3398 = vmatpush2.xpose.msra.mxu0 0.0
    %3399 = vmatprep.subr.mxu0 0.0
    %3400 = vmatpush2.xpose.msra.mxu0 0.0
    %3401 = vmatprep.subr.mxu0 0.0
    %3402 = vmatpush2.xpose.msra.mxu0 0.0
    %3403 = vmatprep.subr.mxu0 0.0
    %3404 = vmatpush2.xpose.msra.mxu0 0.0
    %3405 = vmatprep.subr.mxu0 0.0
    %3406 = vmatpush2.xpose.msra.mxu0 0.0
    %3407 = vmatprep.subr.mxu0 0.0
    %3408 = vmatpush2.xpose.msra.mxu0 0.0
    %3409 = vmatprep.subr.mxu0 0.0
    %3410 = vmatpush2.xpose.msra.mxu0 0.0
    %3411 = vmatprep.subr.mxu0 0.0
    %3412 = vmatpush2.xpose.msra.mxu0 0.0
    %3413 = vmatprep.subr.mxu0 0.0
    %3414 = vmatpush2.xpose.msra.mxu0 0.0
    %3415 = vmatprep.mubr.f32.mxu0 0.0
    %3416 = vmatmul.mubr.f32.gmra.mxu0 %v3346
    %v3417 = vpop.f32.mrf.mxu0
    %v3418 = vadd.f32 0.0, %v3417
    %v3419 = vpop.f32.mrf.mxu0
    %3420 = vdwg.mxu0
    %v3421 = vmul.f32 %v3418, 1.442695
    %v3422 = vpow.pop %v3421
    %v3423 = vsel %vm372, %v3422, 0.0
    %3424 = vadd.xlane.f32.xlu0 %v3423
    %v3425 = vpop.xlane.xlu0 %3424
    %v3426 = vrcp.pop %v3425
    %v3427 = vmul.f32 %v3422, %v3426
    %v3429 = vsel %vm372, %v3427, 0
    %3431 = vmatprep.subr.mxu0 0.0
    %3432 = vmatpush1.msra.mxu0 0.0
    %3433 = vmatprep.subr.mxu0 0.0
    %3434 = vmatpush1.msra.mxu0 0.0
    %3435 = vmatprep.subr.mxu0 0.0
    %3436 = vmatpush1.msra.mxu0 0.0
    %3437 = vmatprep.subr.mxu0 0.0
    %3438 = vmatpush1.msra.mxu0 0.0
    %3439 = vmatprep.subr.mxu0 0.0
    %3440 = vmatpush1.msra.mxu0 0.0
    %3441 = vmatprep.subr.mxu0 0.0
    %3442 = vmatpush1.msra.mxu0 0.0
    %3443 = vmatprep.subr.mxu0 0.0
    %3444 = vmatpush1.msra.mxu0 0.0
    %3445 = vmatprep.subr.mxu0 0.0
    %3446 = vmatpush1.msra.mxu0 0.0
    %3447 = vmatprep.subr.mxu0 0.0
    %3448 = vmatpush1.msra.mxu0 0.0
    %3449 = vmatprep.subr.mxu0 0.0
    %3450 = vmatpush1.msra.mxu0 0.0
    %3451 = vmatprep.subr.mxu0 0.0
    %3452 = vmatpush1.msra.mxu0 0.0
    %3453 = vmatprep.subr.mxu0 0.0
    %3454 = vmatpush1.msra.mxu0 0.0
    %3455 = vmatprep.subr.mxu0 0.0
    %3456 = vmatpush1.msra.mxu0 0.0
    %3457 = vmatprep.subr.mxu0 0.0
    %3458 = vmatpush1.msra.mxu0 0.0
    %3459 = vmatprep.subr.mxu0 0.0
    %3460 = vmatpush1.msra.mxu0 0.0
    %3461 = vmatprep.subr.mxu0 0.0
    %3462 = vmatpush1.msra.mxu0 %v3109
    %3463 = vmatprep.subr.mxu0 0.0
    %3464 = vmatpush2.msra.mxu0 0.0
    %3465 = vmatprep.subr.mxu0 0.0
    %3466 = vmatpush2.msra.mxu0 0.0
    %3467 = vmatprep.subr.mxu0 0.0
    %3468 = vmatpush2.msra.mxu0 0.0
    %3469 = vmatprep.subr.mxu0 0.0
    %3470 = vmatpush2.msra.mxu0 0.0
    %3471 = vmatprep.subr.mxu0 0.0
    %3472 = vmatpush2.msra.mxu0 0.0
    %3473 = vmatprep.subr.mxu0 0.0
    %3474 = vmatpush2.msra.mxu0 0.0
    %3475 = vmatprep.subr.mxu0 0.0
    %3476 = vmatpush2.msra.mxu0 0.0
    %3477 = vmatprep.subr.mxu0 0.0
    %3478 = vmatpush2.msra.mxu0 0.0
    %3479 = vmatprep.subr.mxu0 0.0
    %3480 = vmatpush2.msra.mxu0 0.0
    %3481 = vmatprep.subr.mxu0 0.0
    %3482 = vmatpush2.msra.mxu0 0.0
    %3483 = vmatprep.subr.mxu0 0.0
    %3484 = vmatpush2.msra.mxu0 0.0
    %3485 = vmatprep.subr.mxu0 0.0
    %3486 = vmatpush2.msra.mxu0 0.0
    %3487 = vmatprep.subr.mxu0 0.0
    %3488 = vmatpush2.msra.mxu0 0.0
    %3489 = vmatprep.subr.mxu0 0.0
    %3490 = vmatpush2.msra.mxu0 0.0
    %3491 = vmatprep.subr.mxu0 0.0
    %3492 = vmatpush2.msra.mxu0 0.0
    %3493 = vmatprep.subr.mxu0 0.0
    %3494 = vmatpush2.msra.mxu0 0.0
    %3495 = vmatprep.mubr.f32.mxu0 0.0
    %3496 = vmatmul.mubr.f32.gmra.mxu0 %v3429
    %v3497 = vpop.f32.mrf.mxu0
    %v3498 = vadd.f32 0.0, %v3497
    %v3499 = vpop.f32.mrf.mxu0
    %3500 = vdwg.mxu0
    %v3502 = vsel %vm293, %v3498, 0
    %3504 = vmatprep.subr.mxu0 0.0
    %3505 = vmatpush1.msra.mxu0 0.0
    %3506 = vmatprep.subr.mxu0 0.0
    %3507 = vmatpush1.msra.mxu0 0.0
    %3508 = vmatprep.subr.mxu0 0.0
    %3509 = vmatpush1.msra.mxu0 0.0
    %3510 = vmatprep.subr.mxu0 0.0
    %3511 = vmatpush1.msra.mxu0 0.0
    %3512 = vmatprep.subr.mxu0 0.0
    %3513 = vmatpush1.msra.mxu0 0.0
    %3514 = vmatprep.subr.mxu0 0.0
    %3515 = vmatpush1.msra.mxu0 0.0
    %3516 = vmatprep.subr.mxu0 0.0
    %3517 = vmatpush1.msra.mxu0 0.0
    %3518 = vmatprep.subr.mxu0 0.0
    %3519 = vmatpush1.msra.mxu0 0.0
    %3520 = vmatprep.subr.mxu0 0.0
    %3521 = vmatpush1.msra.mxu0 0.0
    %3522 = vmatprep.subr.mxu0 0.0
    %3523 = vmatpush1.msra.mxu0 0.0
    %3524 = vmatprep.subr.mxu0 0.0
    %3525 = vmatpush1.msra.mxu0 0.0
    %3526 = vmatprep.subr.mxu0 0.0
    %3527 = vmatpush1.msra.mxu0 0.0
    %3528 = vmatprep.subr.mxu0 0.0
    %3529 = vmatpush1.msra.mxu0 0.0
    %3530 = vmatprep.subr.mxu0 0.0
    %3531 = vmatpush1.msra.mxu0 0.0
    %3532 = vmatprep.subr.mxu0 0.0
    %3533 = vmatpush1.msra.mxu0 %v3114
    %3534 = vmatprep.subr.mxu0 0.0
    %3535 = vmatpush1.msra.mxu0 %v3113
    %3536 = vmatprep.subr.mxu0 0.0
    %3537 = vmatpush2.msra.mxu0 0.0
    %3538 = vmatprep.subr.mxu0 0.0
    %3539 = vmatpush2.msra.mxu0 0.0
    %3540 = vmatprep.subr.mxu0 0.0
    %3541 = vmatpush2.msra.mxu0 0.0
    %3542 = vmatprep.subr.mxu0 0.0
    %3543 = vmatpush2.msra.mxu0 0.0
    %3544 = vmatprep.subr.mxu0 0.0
    %3545 = vmatpush2.msra.mxu0 0.0
    %3546 = vmatprep.subr.mxu0 0.0
    %3547 = vmatpush2.msra.mxu0 0.0
    %3548 = vmatprep.subr.mxu0 0.0
    %3549 = vmatpush2.msra.mxu0 0.0
    %3550 = vmatprep.subr.mxu0 0.0
    %3551 = vmatpush2.msra.mxu0 0.0
    %3552 = vmatprep.subr.mxu0 0.0
    %3553 = vmatpush2.msra.mxu0 0.0
    %3554 = vmatprep.subr.mxu0 0.0
    %3555 = vmatpush2.msra.mxu0 0.0
    %3556 = vmatprep.subr.mxu0 0.0
    %3557 = vmatpush2.msra.mxu0 0.0
    %3558 = vmatprep.subr.mxu0 0.0
    %3559 = vmatpush2.msra.mxu0 0.0
    %3560 = vmatprep.subr.mxu0 0.0
    %3561 = vmatpush2.msra.mxu0 0.0
    %3562 = vmatprep.subr.mxu0 0.0
    %3563 = vmatpush2.msra.mxu0 0.0
    %3564 = vmatprep.subr.mxu0 0.0
    %3565 = vmatpush2.msra.mxu0 0.0
    %3566 = vmatprep.subr.mxu0 0.0
    %3567 = vmatpush2.msra.mxu0 0.0
    %3568 = vmatprep.mubr.f32.mxu0 0.0
    %3569 = vmatmul.mubr.f32.gmra.mxu0 %v3502
    %v3570 = vpop.f32.mrf.mxu0
    %v3571 = vadd.f32 0.0, %v3570
    %v3572 = vpop.f32.mrf.mxu0
    %3573 = vdwg.mxu0
    %v3574 = vadd.f32 %v2865, %v3571
    %s3575 = scalar_lea.vmem %s4, 160
    %v3576 = vld [vmem:[%s3575] sm:$0xff]
    %v3577 = vld [vmem:[%s3575 + $0x8] sm:$0xff]
    %v3578 = vld [vmem:[%s3575 + $0x10] sm:$0xff]
    %v3579 = vld [vmem:[%s3575 + $0x18] sm:$0xff]
    %3580 = vmatprep.subr.mxu0 0.0
    %3581 = vmatpush1.msra.mxu0 0.0
    %3582 = vmatprep.subr.mxu0 0.0
    %3583 = vmatpush1.msra.mxu0 0.0
    %3584 = vmatprep.subr.mxu0 0.0
    %3585 = vmatpush1.msra.mxu0 0.0
    %3586 = vmatprep.subr.mxu0 0.0
    %3587 = vmatpush1.msra.mxu0 0.0
    %3588 = vmatprep.subr.mxu0 0.0
    %3589 = vmatpush1.msra.mxu0 0.0
    %3590 = vmatprep.subr.mxu0 0.0
    %3591 = vmatpush1.msra.mxu0 0.0
    %3592 = vmatprep.subr.mxu0 0.0
    %3593 = vmatpush1.msra.mxu0 0.0
    %3594 = vmatprep.subr.mxu0 0.0
    %3595 = vmatpush1.msra.mxu0 0.0
    %3596 = vmatprep.subr.mxu0 0.0
    %3597 = vmatpush1.msra.mxu0 0.0
    %3598 = vmatprep.subr.mxu0 0.0
    %3599 = vmatpush1.msra.mxu0 0.0
    %3600 = vmatprep.subr.mxu0 0.0
    %3601 = vmatpush1.msra.mxu0 0.0
    %3602 = vmatprep.subr.mxu0 0.0
    %3603 = vmatpush1.msra.mxu0 0.0
    %3604 = vmatprep.subr.mxu0 0.0
    %3605 = vmatpush1.msra.mxu0 %v3579
    %3606 = vmatprep.subr.mxu0 0.0
    %3607 = vmatpush1.msra.mxu0 %v3578
    %3608 = vmatprep.subr.mxu0 0.0
    %3609 = vmatpush1.msra.mxu0 %v3577
    %3610 = vmatprep.subr.mxu0 0.0
    %3611 = vmatpush1.msra.mxu0 %v3576
    %3612 = vmatprep.subr.mxu0 0.0
    %3613 = vmatpush2.msra.mxu0 0.0
    %3614 = vmatprep.subr.mxu0 0.0
    %3615 = vmatpush2.msra.mxu0 0.0
    %3616 = vmatprep.subr.mxu0 0.0
    %3617 = vmatpush2.msra.mxu0 0.0
    %3618 = vmatprep.subr.mxu0 0.0
    %3619 = vmatpush2.msra.mxu0 0.0
    %3620 = vmatprep.subr.mxu0 0.0
    %3621 = vmatpush2.msra.mxu0 0.0
    %3622 = vmatprep.subr.mxu0 0.0
    %3623 = vmatpush2.msra.mxu0 0.0
    %3624 = vmatprep.subr.mxu0 0.0
    %3625 = vmatpush2.msra.mxu0 0.0
    %3626 = vmatprep.subr.mxu0 0.0
    %3627 = vmatpush2.msra.mxu0 0.0
    %3628 = vmatprep.subr.mxu0 0.0
    %3629 = vmatpush2.msra.mxu0 0.0
    %3630 = vmatprep.subr.mxu0 0.0
    %3631 = vmatpush2.msra.mxu0 0.0
    %3632 = vmatprep.subr.mxu0 0.0
    %3633 = vmatpush2.msra.mxu0 0.0
    %3634 = vmatprep.subr.mxu0 0.0
    %3635 = vmatpush2.msra.mxu0 0.0
    %3636 = vmatprep.subr.mxu0 0.0
    %3637 = vmatpush2.msra.mxu0 0.0
    %3638 = vmatprep.subr.mxu0 0.0
    %3639 = vmatpush2.msra.mxu0 0.0
    %3640 = vmatprep.subr.mxu0 0.0
    %3641 = vmatpush2.msra.mxu0 0.0
    %3642 = vmatprep.subr.mxu0 0.0
    %3643 = vmatpush2.msra.mxu0 0.0
    %3644 = vmatprep.mubr.f32.mxu0 0.0
    %3645 = vmatmul.mubr.f32.gmra.mxu0 %v47
    %v3646 = vpop.f32.mrf.mxu0
    %v3647 = vadd.f32 0.0, %v3646
    %v3648 = vpop.f32.mrf.mxu0
    %3649 = vmatprep.mubr.f32.mxu0 0.0
    %3650 = vmatmul.mubr.f32.gmra.mxu0 %v50
    %v3651 = vpop.f32.mrf.mxu0
    %v3652 = vadd.f32 0.0, %v3651
    %v3653 = vpop.f32.mrf.mxu0
    %3654 = vdwg.mxu0
    %s3655 = scalar_lea.vmem %s5, 160
    %v3656 = vld [vmem:[%s3655] sm:$0xff]
    %v3657 = vld [vmem:[%s3655 + $0x8] sm:$0xff]
    %v3658 = vld [vmem:[%s3655 + $0x10] sm:$0xff]
    %v3659 = vld [vmem:[%s3655 + $0x18] sm:$0xff]
    %3660 = vmatprep.subr.mxu0 0.0
    %3661 = vmatpush1.msra.mxu0 0.0
    %3662 = vmatprep.subr.mxu0 0.0
    %3663 = vmatpush1.msra.mxu0 0.0
    %3664 = vmatprep.subr.mxu0 0.0
    %3665 = vmatpush1.msra.mxu0 0.0
    %3666 = vmatprep.subr.mxu0 0.0
    %3667 = vmatpush1.msra.mxu0 0.0
    %3668 = vmatprep.subr.mxu0 0.0
    %3669 = vmatpush1.msra.mxu0 0.0
    %3670 = vmatprep.subr.mxu0 0.0
    %3671 = vmatpush1.msra.mxu0 0.0
    %3672 = vmatprep.subr.mxu0 0.0
    %3673 = vmatpush1.msra.mxu0 0.0
    %3674 = vmatprep.subr.mxu0 0.0
    %3675 = vmatpush1.msra.mxu0 0.0
    %3676 = vmatprep.subr.mxu0 0.0
    %3677 = vmatpush1.msra.mxu0 0.0
    %3678 = vmatprep.subr.mxu0 0.0
    %3679 = vmatpush1.msra.mxu0 0.0
    %3680 = vmatprep.subr.mxu0 0.0
    %3681 = vmatpush1.msra.mxu0 0.0
    %3682 = vmatprep.subr.mxu0 0.0
    %3683 = vmatpush1.msra.mxu0 0.0
    %3684 = vmatprep.subr.mxu0 0.0
    %3685 = vmatpush1.msra.mxu0 %v3659
    %3686 = vmatprep.subr.mxu0 0.0
    %3687 = vmatpush1.msra.mxu0 %v3658
    %3688 = vmatprep.subr.mxu0 0.0
    %3689 = vmatpush1.msra.mxu0 %v3657
    %3690 = vmatprep.subr.mxu0 0.0
    %3691 = vmatpush1.msra.mxu0 %v3656
    %3692 = vmatprep.subr.mxu0 0.0
    %3693 = vmatpush2.msra.mxu0 0.0
    %3694 = vmatprep.subr.mxu0 0.0
    %3695 = vmatpush2.msra.mxu0 0.0
    %3696 = vmatprep.subr.mxu0 0.0
    %3697 = vmatpush2.msra.mxu0 0.0
    %3698 = vmatprep.subr.mxu0 0.0
    %3699 = vmatpush2.msra.mxu0 0.0
    %3700 = vmatprep.subr.mxu0 0.0
    %3701 = vmatpush2.msra.mxu0 0.0
    %3702 = vmatprep.subr.mxu0 0.0
    %3703 = vmatpush2.msra.mxu0 0.0
    %3704 = vmatprep.subr.mxu0 0.0
    %3705 = vmatpush2.msra.mxu0 0.0
    %3706 = vmatprep.subr.mxu0 0.0
    %3707 = vmatpush2.msra.mxu0 0.0
    %3708 = vmatprep.subr.mxu0 0.0
    %3709 = vmatpush2.msra.mxu0 0.0
    %3710 = vmatprep.subr.mxu0 0.0
    %3711 = vmatpush2.msra.mxu0 0.0
    %3712 = vmatprep.subr.mxu0 0.0
    %3713 = vmatpush2.msra.mxu0 0.0
    %3714 = vmatprep.subr.mxu0 0.0
    %3715 = vmatpush2.msra.mxu0 0.0
    %3716 = vmatprep.subr.mxu0 0.0
    %3717 = vmatpush2.msra.mxu0 0.0
    %3718 = vmatprep.subr.mxu0 0.0
    %3719 = vmatpush2.msra.mxu0 0.0
    %3720 = vmatprep.subr.mxu0 0.0
    %3721 = vmatpush2.msra.mxu0 0.0
    %3722 = vmatprep.subr.mxu0 0.0
    %3723 = vmatpush2.msra.mxu0 0.0
    %3724 = vmatprep.mubr.f32.mxu0 0.0
    %3725 = vmatmul.mubr.f32.gmra.mxu0 %v2952
    %v3726 = vpop.f32.mrf.mxu0
    %v3727 = vadd.f32 0.0, %v3726
    %v3728 = vpop.f32.mrf.mxu0
    %3729 = vmatprep.mubr.f32.mxu0 0.0
    %3730 = vmatmul.mubr.f32.gmra.mxu0 %v2955
    %v3731 = vpop.f32.mrf.mxu0
    %v3732 = vadd.f32 0.0, %v3731
    %v3733 = vpop.f32.mrf.mxu0
    %3734 = vdwg.mxu0
    %s3735 = scalar_lea.vmem %s6, 160
    %v3736 = vld [vmem:[%s3735] sm:$0xff]
    %v3737 = vld [vmem:[%s3735 + $0x8] sm:$0xff]
    %v3738 = vld [vmem:[%s3735 + $0x10] sm:$0xff]
    %v3739 = vld [vmem:[%s3735 + $0x18] sm:$0xff]
    %3740 = vmatprep.subr.mxu0 0.0
    %3741 = vmatpush1.msra.mxu0 0.0
    %3742 = vmatprep.subr.mxu0 0.0
    %3743 = vmatpush1.msra.mxu0 0.0
    %3744 = vmatprep.subr.mxu0 0.0
    %3745 = vmatpush1.msra.mxu0 0.0
    %3746 = vmatprep.subr.mxu0 0.0
    %3747 = vmatpush1.msra.mxu0 0.0
    %3748 = vmatprep.subr.mxu0 0.0
    %3749 = vmatpush1.msra.mxu0 0.0
    %3750 = vmatprep.subr.mxu0 0.0
    %3751 = vmatpush1.msra.mxu0 0.0
    %3752 = vmatprep.subr.mxu0 0.0
    %3753 = vmatpush1.msra.mxu0 0.0
    %3754 = vmatprep.subr.mxu0 0.0
    %3755 = vmatpush1.msra.mxu0 0.0
    %3756 = vmatprep.subr.mxu0 0.0
    %3757 = vmatpush1.msra.mxu0 0.0
    %3758 = vmatprep.subr.mxu0 0.0
    %3759 = vmatpush1.msra.mxu0 0.0
    %3760 = vmatprep.subr.mxu0 0.0
    %3761 = vmatpush1.msra.mxu0 0.0
    %3762 = vmatprep.subr.mxu0 0.0
    %3763 = vmatpush1.msra.mxu0 0.0
    %3764 = vmatprep.subr.mxu0 0.0
    %3765 = vmatpush1.msra.mxu0 %v3739
    %3766 = vmatprep.subr.mxu0 0.0
    %3767 = vmatpush1.msra.mxu0 %v3738
    %3768 = vmatprep.subr.mxu0 0.0
    %3769 = vmatpush1.msra.mxu0 %v3737
    %3770 = vmatprep.subr.mxu0 0.0
    %3771 = vmatpush1.msra.mxu0 %v3736
    %3772 = vmatprep.subr.mxu0 0.0
    %3773 = vmatpush2.msra.mxu0 0.0
    %3774 = vmatprep.subr.mxu0 0.0
    %3775 = vmatpush2.msra.mxu0 0.0
    %3776 = vmatprep.subr.mxu0 0.0
    %3777 = vmatpush2.msra.mxu0 0.0
    %3778 = vmatprep.subr.mxu0 0.0
    %3779 = vmatpush2.msra.mxu0 0.0
    %3780 = vmatprep.subr.mxu0 0.0
    %3781 = vmatpush2.msra.mxu0 0.0
    %3782 = vmatprep.subr.mxu0 0.0
    %3783 = vmatpush2.msra.mxu0 0.0
    %3784 = vmatprep.subr.mxu0 0.0
    %3785 = vmatpush2.msra.mxu0 0.0
    %3786 = vmatprep.subr.mxu0 0.0
    %3787 = vmatpush2.msra.mxu0 0.0
    %3788 = vmatprep.subr.mxu0 0.0
    %3789 = vmatpush2.msra.mxu0 0.0
    %3790 = vmatprep.subr.mxu0 0.0
    %3791 = vmatpush2.msra.mxu0 0.0
    %3792 = vmatprep.subr.mxu0 0.0
    %3793 = vmatpush2.msra.mxu0 0.0
    %3794 = vmatprep.subr.mxu0 0.0
    %3795 = vmatpush2.msra.mxu0 0.0
    %3796 = vmatprep.subr.mxu0 0.0
    %3797 = vmatpush2.msra.mxu0 0.0
    %3798 = vmatprep.subr.mxu0 0.0
    %3799 = vmatpush2.msra.mxu0 0.0
    %3800 = vmatprep.subr.mxu0 0.0
    %3801 = vmatpush2.msra.mxu0 0.0
    %3802 = vmatprep.subr.mxu0 0.0
    %3803 = vmatpush2.msra.mxu0 0.0
    %3804 = vmatprep.mubr.f32.mxu0 0.0
    %3805 = vmatmul.mubr.f32.gmra.mxu0 %v2952
    %v3806 = vpop.f32.mrf.mxu0
    %v3807 = vadd.f32 0.0, %v3806
    %v3808 = vpop.f32.mrf.mxu0
    %3809 = vmatprep.mubr.f32.mxu0 0.0
    %3810 = vmatmul.mubr.f32.gmra.mxu0 %v2955
    %v3811 = vpop.f32.mrf.mxu0
    %v3812 = vadd.f32 0.0, %v3811
    %v3813 = vpop.f32.mrf.mxu0
    %3814 = vdwg.mxu0
    %s3815 = scalar_lea.vmem %s7, 80
    %v3816 = vld [vmem:[%s3815] sm:$0xff]
    %v3817 = vld [vmem:[%s3815 + $0x8] sm:$0xff]
    %v3819 = vsel %vm293, %v3647, 0
    %v3822 = vsel %vm293, %v3727, 0
    %3824 = vmatprep.subr.mxu0 0.0
    %3825 = vmatpush1.xpose.msra.mxu0 0.0
    %3826 = vmatprep.subr.mxu0 0.0
    %3827 = vmatpush1.xpose.msra.mxu0 0.0
    %3828 = vmatprep.subr.mxu0 0.0
    %3829 = vmatpush1.xpose.msra.mxu0 0.0
    %3830 = vmatprep.subr.mxu0 0.0
    %3831 = vmatpush1.xpose.msra.mxu0 0.0
    %3832 = vmatprep.subr.mxu0 0.0
    %3833 = vmatpush1.xpose.msra.mxu0 0.0
    %3834 = vmatprep.subr.mxu0 0.0
    %3835 = vmatpush1.xpose.msra.mxu0 0.0
    %3836 = vmatprep.subr.mxu0 0.0
    %3837 = vmatpush1.xpose.msra.mxu0 0.0
    %3838 = vmatprep.subr.mxu0 0.0
    %3839 = vmatpush1.xpose.msra.mxu0 0.0
    %3840 = vmatprep.subr.mxu0 0.0
    %3841 = vmatpush1.xpose.msra.mxu0 0.0
    %3842 = vmatprep.subr.mxu0 0.0
    %3843 = vmatpush1.xpose.msra.mxu0 0.0
    %3844 = vmatprep.subr.mxu0 0.0
    %3845 = vmatpush1.xpose.msra.mxu0 0.0
    %3846 = vmatprep.subr.mxu0 0.0
    %3847 = vmatpush1.xpose.msra.mxu0 0.0
    %3848 = vmatprep.subr.mxu0 0.0
    %3849 = vmatpush1.xpose.msra.mxu0 0.0
    %3850 = vmatprep.subr.mxu0 0.0
    %3851 = vmatpush1.xpose.msra.mxu0 0.0
    %3852 = vmatprep.subr.mxu0 0.0
    %3853 = vmatpush1.xpose.msra.mxu0 0.0
    %3854 = vmatprep.subr.mxu0 0.0
    %3855 = vmatpush1.xpose.msra.mxu0 %v3822
    %3856 = vmatprep.subr.mxu0 0.0
    %3857 = vmatpush2.xpose.msra.mxu0 0.0
    %3858 = vmatprep.subr.mxu0 0.0
    %3859 = vmatpush2.xpose.msra.mxu0 0.0
    %3860 = vmatprep.subr.mxu0 0.0
    %3861 = vmatpush2.xpose.msra.mxu0 0.0
    %3862 = vmatprep.subr.mxu0 0.0
    %3863 = vmatpush2.xpose.msra.mxu0 0.0
    %3864 = vmatprep.subr.mxu0 0.0
    %3865 = vmatpush2.xpose.msra.mxu0 0.0
    %3866 = vmatprep.subr.mxu0 0.0
    %3867 = vmatpush2.xpose.msra.mxu0 0.0
    %3868 = vmatprep.subr.mxu0 0.0
    %3869 = vmatpush2.xpose.msra.mxu0 0.0
    %3870 = vmatprep.subr.mxu0 0.0
    %3871 = vmatpush2.xpose.msra.mxu0 0.0
    %3872 = vmatprep.subr.mxu0 0.0
    %3873 = vmatpush2.xpose.msra.mxu0 0.0
    %3874 = vmatprep.subr.mxu0 0.0
    %3875 = vmatpush2.xpose.msra.mxu0 0.0
    %3876 = vmatprep.subr.mxu0 0.0
    %3877 = vmatpush2.xpose.msra.mxu0 0.0
    %3878 = vmatprep.subr.mxu0 0.0
    %3879 = vmatpush2.xpose.msra.mxu0 0.0
    %3880 = vmatprep.subr.mxu0 0.0
    %3881 = vmatpush2.xpose.msra.mxu0 0.0
    %3882 = vmatprep.subr.mxu0 0.0
    %3883 = vmatpush2.xpose.msra.mxu0 0.0
    %3884 = vmatprep.subr.mxu0 0.0
    %3885 = vmatpush2.xpose.msra.mxu0 0.0
    %3886 = vmatprep.subr.mxu0 0.0
    %3887 = vmatpush2.xpose.msra.mxu0 0.0
    %3888 = vmatprep.mubr.f32.mxu0 0.0
    %3889 = vmatmul.mubr.f32.gmra.mxu0 %v3819
    %v3890 = vpop.f32.mrf.mxu0
    %v3891 = vadd.f32 0.0, %v3890
    %v3892 = vpop.f32.mrf.mxu0
    %3893 = vdwg.mxu0
    %v3894 = vmul.f32 %v3891, 1.442695
    %v3895 = vpow.pop %v3894
    %v3896 = vsel %vm372, %v3895, 0.0
    %3897 = vadd.xlane.f32.xlu0 %v3896
    %v3898 = vpop.xlane.xlu0 %3897
    %v3899 = vrcp.pop %v3898
    %v3900 = vmul.f32 %v3895, %v3899
    %v3902 = vsel %vm372, %v3900, 0
    %3904 = vmatprep.subr.mxu0 0.0
    %3905 = vmatpush1.msra.mxu0 0.0
    %3906 = vmatprep.subr.mxu0 0.0
    %3907 = vmatpush1.msra.mxu0 0.0
    %3908 = vmatprep.subr.mxu0 0.0
    %3909 = vmatpush1.msra.mxu0 0.0
    %3910 = vmatprep.subr.mxu0 0.0
    %3911 = vmatpush1.msra.mxu0 0.0
    %3912 = vmatprep.subr.mxu0 0.0
    %3913 = vmatpush1.msra.mxu0 0.0
    %3914 = vmatprep.subr.mxu0 0.0
    %3915 = vmatpush1.msra.mxu0 0.0
    %3916 = vmatprep.subr.mxu0 0.0
    %3917 = vmatpush1.msra.mxu0 0.0
    %3918 = vmatprep.subr.mxu0 0.0
    %3919 = vmatpush1.msra.mxu0 0.0
    %3920 = vmatprep.subr.mxu0 0.0
    %3921 = vmatpush1.msra.mxu0 0.0
    %3922 = vmatprep.subr.mxu0 0.0
    %3923 = vmatpush1.msra.mxu0 0.0
    %3924 = vmatprep.subr.mxu0 0.0
    %3925 = vmatpush1.msra.mxu0 0.0
    %3926 = vmatprep.subr.mxu0 0.0
    %3927 = vmatpush1.msra.mxu0 0.0
    %3928 = vmatprep.subr.mxu0 0.0
    %3929 = vmatpush1.msra.mxu0 0.0
    %3930 = vmatprep.subr.mxu0 0.0
    %3931 = vmatpush1.msra.mxu0 0.0
    %3932 = vmatprep.subr.mxu0 0.0
    %3933 = vmatpush1.msra.mxu0 0.0
    %3934 = vmatprep.subr.mxu0 0.0
    %3935 = vmatpush1.msra.mxu0 %v3807
    %3936 = vmatprep.subr.mxu0 0.0
    %3937 = vmatpush2.msra.mxu0 0.0
    %3938 = vmatprep.subr.mxu0 0.0
    %3939 = vmatpush2.msra.mxu0 0.0
    %3940 = vmatprep.subr.mxu0 0.0
    %3941 = vmatpush2.msra.mxu0 0.0
    %3942 = vmatprep.subr.mxu0 0.0
    %3943 = vmatpush2.msra.mxu0 0.0
    %3944 = vmatprep.subr.mxu0 0.0
    %3945 = vmatpush2.msra.mxu0 0.0
    %3946 = vmatprep.subr.mxu0 0.0
    %3947 = vmatpush2.msra.mxu0 0.0
    %3948 = vmatprep.subr.mxu0 0.0
    %3949 = vmatpush2.msra.mxu0 0.0
    %3950 = vmatprep.subr.mxu0 0.0
    %3951 = vmatpush2.msra.mxu0 0.0
    %3952 = vmatprep.subr.mxu0 0.0
    %3953 = vmatpush2.msra.mxu0 0.0
    %3954 = vmatprep.subr.mxu0 0.0
    %3955 = vmatpush2.msra.mxu0 0.0
    %3956 = vmatprep.subr.mxu0 0.0
    %3957 = vmatpush2.msra.mxu0 0.0
    %3958 = vmatprep.subr.mxu0 0.0
    %3959 = vmatpush2.msra.mxu0 0.0
    %3960 = vmatprep.subr.mxu0 0.0
    %3961 = vmatpush2.msra.mxu0 0.0
    %3962 = vmatprep.subr.mxu0 0.0
    %3963 = vmatpush2.msra.mxu0 0.0
    %3964 = vmatprep.subr.mxu0 0.0
    %3965 = vmatpush2.msra.mxu0 0.0
    %3966 = vmatprep.subr.mxu0 0.0
    %3967 = vmatpush2.msra.mxu0 0.0
    %3968 = vmatprep.mubr.f32.mxu0 0.0
    %3969 = vmatmul.mubr.f32.gmra.mxu0 %v3902
    %v3970 = vpop.f32.mrf.mxu0
    %v3971 = vadd.f32 0.0, %v3970
    %v3972 = vpop.f32.mrf.mxu0
    %3973 = vdwg.mxu0
    %v3975 = vsel %vm293, %v3971, 0
    %3977 = vmatprep.subr.mxu0 0.0
    %3978 = vmatpush1.msra.mxu0 0.0
    %3979 = vmatprep.subr.mxu0 0.0
    %3980 = vmatpush1.msra.mxu0 0.0
    %3981 = vmatprep.subr.mxu0 0.0
    %3982 = vmatpush1.msra.mxu0 0.0
    %3983 = vmatprep.subr.mxu0 0.0
    %3984 = vmatpush1.msra.mxu0 0.0
    %3985 = vmatprep.subr.mxu0 0.0
    %3986 = vmatpush1.msra.mxu0 0.0
    %3987 = vmatprep.subr.mxu0 0.0
    %3988 = vmatpush1.msra.mxu0 0.0
    %3989 = vmatprep.subr.mxu0 0.0
    %3990 = vmatpush1.msra.mxu0 0.0
    %3991 = vmatprep.subr.mxu0 0.0
    %3992 = vmatpush1.msra.mxu0 0.0
    %3993 = vmatprep.subr.mxu0 0.0
    %3994 = vmatpush1.msra.mxu0 0.0
    %3995 = vmatprep.subr.mxu0 0.0
    %3996 = vmatpush1.msra.mxu0 0.0
    %3997 = vmatprep.subr.mxu0 0.0
    %3998 = vmatpush1.msra.mxu0 0.0
    %3999 = vmatprep.subr.mxu0 0.0
    %4000 = vmatpush1.msra.mxu0 0.0
    %4001 = vmatprep.subr.mxu0 0.0
    %4002 = vmatpush1.msra.mxu0 0.0
    %4003 = vmatprep.subr.mxu0 0.0
    %4004 = vmatpush1.msra.mxu0 0.0
    %4005 = vmatprep.subr.mxu0 0.0
    %4006 = vmatpush1.msra.mxu0 %v3817
    %4007 = vmatprep.subr.mxu0 0.0
    %4008 = vmatpush1.msra.mxu0 %v3816
    %4009 = vmatprep.subr.mxu0 0.0
    %4010 = vmatpush2.msra.mxu0 0.0
    %4011 = vmatprep.subr.mxu0 0.0
    %4012 = vmatpush2.msra.mxu0 0.0
    %4013 = vmatprep.subr.mxu0 0.0
    %4014 = vmatpush2.msra.mxu0 0.0
    %4015 = vmatprep.subr.mxu0 0.0
    %4016 = vmatpush2.msra.mxu0 0.0
    %4017 = vmatprep.subr.mxu0 0.0
    %4018 = vmatpush2.msra.mxu0 0.0
    %4019 = vmatprep.subr.mxu0 0.0
    %4020 = vmatpush2.msra.mxu0 0.0
    %4021 = vmatprep.subr.mxu0 0.0
    %4022 = vmatpush2.msra.mxu0 0.0
    %4023 = vmatprep.subr.mxu0 0.0
    %4024 = vmatpush2.msra.mxu0 0.0
    %4025 = vmatprep.subr.mxu0 0.0
    %4026 = vmatpush2.msra.mxu0 0.0
    %4027 = vmatprep.subr.mxu0 0.0
    %4028 = vmatpush2.msra.mxu0 0.0
    %4029 = vmatprep.subr.mxu0 0.0
    %4030 = vmatpush2.msra.mxu0 0.0
    %4031 = vmatprep.subr.mxu0 0.0
    %4032 = vmatpush2.msra.mxu0 0.0
    %4033 = vmatprep.subr.mxu0 0.0
    %4034 = vmatpush2.msra.mxu0 0.0
    %4035 = vmatprep.subr.mxu0 0.0
    %4036 = vmatpush2.msra.mxu0 0.0
    %4037 = vmatprep.subr.mxu0 0.0
    %4038 = vmatpush2.msra.mxu0 0.0
    %4039 = vmatprep.subr.mxu0 0.0
    %4040 = vmatpush2.msra.mxu0 0.0
    %4041 = vmatprep.mubr.f32.mxu0 0.0
    %4042 = vmatmul.mubr.f32.gmra.mxu0 %v3975
    %v4043 = vpop.f32.mrf.mxu0
    %v4044 = vadd.f32 0.0, %v4043
    %v4045 = vpop.f32.mrf.mxu0
    %4046 = vdwg.mxu0
    %v4047 = vadd.f32 %v3344, %v4044
    %v4049 = vsel %vm293, %v3652, 0
    %v4052 = vsel %vm293, %v3732, 0
    %4054 = vmatprep.subr.mxu0 0.0
    %4055 = vmatpush1.xpose.msra.mxu0 0.0
    %4056 = vmatprep.subr.mxu0 0.0
    %4057 = vmatpush1.xpose.msra.mxu0 0.0
    %4058 = vmatprep.subr.mxu0 0.0
    %4059 = vmatpush1.xpose.msra.mxu0 0.0
    %4060 = vmatprep.subr.mxu0 0.0
    %4061 = vmatpush1.xpose.msra.mxu0 0.0
    %4062 = vmatprep.subr.mxu0 0.0
    %4063 = vmatpush1.xpose.msra.mxu0 0.0
    %4064 = vmatprep.subr.mxu0 0.0
    %4065 = vmatpush1.xpose.msra.mxu0 0.0
    %4066 = vmatprep.subr.mxu0 0.0
    %4067 = vmatpush1.xpose.msra.mxu0 0.0
    %4068 = vmatprep.subr.mxu0 0.0
    %4069 = vmatpush1.xpose.msra.mxu0 0.0
    %4070 = vmatprep.subr.mxu0 0.0
    %4071 = vmatpush1.xpose.msra.mxu0 0.0
    %4072 = vmatprep.subr.mxu0 0.0
    %4073 = vmatpush1.xpose.msra.mxu0 0.0
    %4074 = vmatprep.subr.mxu0 0.0
    %4075 = vmatpush1.xpose.msra.mxu0 0.0
    %4076 = vmatprep.subr.mxu0 0.0
    %4077 = vmatpush1.xpose.msra.mxu0 0.0
    %4078 = vmatprep.subr.mxu0 0.0
    %4079 = vmatpush1.xpose.msra.mxu0 0.0
    %4080 = vmatprep.subr.mxu0 0.0
    %4081 = vmatpush1.xpose.msra.mxu0 0.0
    %4082 = vmatprep.subr.mxu0 0.0
    %4083 = vmatpush1.xpose.msra.mxu0 0.0
    %4084 = vmatprep.subr.mxu0 0.0
    %4085 = vmatpush1.xpose.msra.mxu0 %v4052
    %4086 = vmatprep.subr.mxu0 0.0
    %4087 = vmatpush2.xpose.msra.mxu0 0.0
    %4088 = vmatprep.subr.mxu0 0.0
    %4089 = vmatpush2.xpose.msra.mxu0 0.0
    %4090 = vmatprep.subr.mxu0 0.0
    %4091 = vmatpush2.xpose.msra.mxu0 0.0
    %4092 = vmatprep.subr.mxu0 0.0
    %4093 = vmatpush2.xpose.msra.mxu0 0.0
    %4094 = vmatprep.subr.mxu0 0.0
    %4095 = vmatpush2.xpose.msra.mxu0 0.0
    %4096 = vmatprep.subr.mxu0 0.0
    %4097 = vmatpush2.xpose.msra.mxu0 0.0
    %4098 = vmatprep.subr.mxu0 0.0
    %4099 = vmatpush2.xpose.msra.mxu0 0.0
    %4100 = vmatprep.subr.mxu0 0.0
    %4101 = vmatpush2.xpose.msra.mxu0 0.0
    %4102 = vmatprep.subr.mxu0 0.0
    %4103 = vmatpush2.xpose.msra.mxu0 0.0
    %4104 = vmatprep.subr.mxu0 0.0
    %4105 = vmatpush2.xpose.msra.mxu0 0.0
    %4106 = vmatprep.subr.mxu0 0.0
    %4107 = vmatpush2.xpose.msra.mxu0 0.0
    %4108 = vmatprep.subr.mxu0 0.0
    %4109 = vmatpush2.xpose.msra.mxu0 0.0
    %4110 = vmatprep.subr.mxu0 0.0
    %4111 = vmatpush2.xpose.msra.mxu0 0.0
    %4112 = vmatprep.subr.mxu0 0.0
    %4113 = vmatpush2.xpose.msra.mxu0 0.0
    %4114 = vmatprep.subr.mxu0 0.0
    %4115 = vmatpush2.xpose.msra.mxu0 0.0
    %4116 = vmatprep.subr.mxu0 0.0
    %4117 = vmatpush2.xpose.msra.mxu0 0.0
    %4118 = vmatprep.mubr.f32.mxu0 0.0
    %4119 = vmatmul.mubr.f32.gmra.mxu0 %v4049
    %v4120 = vpop.f32.mrf.mxu0
    %v4121 = vadd.f32 0.0, %v4120
    %v4122 = vpop.f32.mrf.mxu0
    %4123 = vdwg.mxu0
    %v4124 = vmul.f32 %v4121, 1.442695
    %v4125 = vpow.pop %v4124
    %v4126 = vsel %vm372, %v4125, 0.0
    %4127 = vadd.xlane.f32.xlu0 %v4126
    %v4128 = vpop.xlane.xlu0 %4127
    %v4129 = vrcp.pop %v4128
    %v4130 = vmul.f32 %v4125, %v4129
    %v4132 = vsel %vm372, %v4130, 0
    %4134 = vmatprep.subr.mxu0 0.0
    %4135 = vmatpush1.msra.mxu0 0.0
    %4136 = vmatprep.subr.mxu0 0.0
    %4137 = vmatpush1.msra.mxu0 0.0
    %4138 = vmatprep.subr.mxu0 0.0
    %4139 = vmatpush1.msra.mxu0 0.0
    %4140 = vmatprep.subr.mxu0 0.0
    %4141 = vmatpush1.msra.mxu0 0.0
    %4142 = vmatprep.subr.mxu0 0.0
    %4143 = vmatpush1.msra.mxu0 0.0
    %4144 = vmatprep.subr.mxu0 0.0
    %4145 = vmatpush1.msra.mxu0 0.0
    %4146 = vmatprep.subr.mxu0 0.0
    %4147 = vmatpush1.msra.mxu0 0.0
    %4148 = vmatprep.subr.mxu0 0.0
    %4149 = vmatpush1.msra.mxu0 0.0
    %4150 = vmatprep.subr.mxu0 0.0
    %4151 = vmatpush1.msra.mxu0 0.0
    %4152 = vmatprep.subr.mxu0 0.0
    %4153 = vmatpush1.msra.mxu0 0.0
    %4154 = vmatprep.subr.mxu0 0.0
    %4155 = vmatpush1.msra.mxu0 0.0
    %4156 = vmatprep.subr.mxu0 0.0
    %4157 = vmatpush1.msra.mxu0 0.0
    %4158 = vmatprep.subr.mxu0 0.0
    %4159 = vmatpush1.msra.mxu0 0.0
    %4160 = vmatprep.subr.mxu0 0.0
    %4161 = vmatpush1.msra.mxu0 0.0
    %4162 = vmatprep.subr.mxu0 0.0
    %4163 = vmatpush1.msra.mxu0 0.0
    %4164 = vmatprep.subr.mxu0 0.0
    %4165 = vmatpush1.msra.mxu0 %v3812
    %4166 = vmatprep.subr.mxu0 0.0
    %4167 = vmatpush2.msra.mxu0 0.0
    %4168 = vmatprep.subr.mxu0 0.0
    %4169 = vmatpush2.msra.mxu0 0.0
    %4170 = vmatprep.subr.mxu0 0.0
    %4171 = vmatpush2.msra.mxu0 0.0
    %4172 = vmatprep.subr.mxu0 0.0
    %4173 = vmatpush2.msra.mxu0 0.0
    %4174 = vmatprep.subr.mxu0 0.0
    %4175 = vmatpush2.msra.mxu0 0.0
    %4176 = vmatprep.subr.mxu0 0.0
    %4177 = vmatpush2.msra.mxu0 0.0
    %4178 = vmatprep.subr.mxu0 0.0
    %4179 = vmatpush2.msra.mxu0 0.0
    %4180 = vmatprep.subr.mxu0 0.0
    %4181 = vmatpush2.msra.mxu0 0.0
    %4182 = vmatprep.subr.mxu0 0.0
    %4183 = vmatpush2.msra.mxu0 0.0
    %4184 = vmatprep.subr.mxu0 0.0
    %4185 = vmatpush2.msra.mxu0 0.0
    %4186 = vmatprep.subr.mxu0 0.0
    %4187 = vmatpush2.msra.mxu0 0.0
    %4188 = vmatprep.subr.mxu0 0.0
    %4189 = vmatpush2.msra.mxu0 0.0
    %4190 = vmatprep.subr.mxu0 0.0
    %4191 = vmatpush2.msra.mxu0 0.0
    %4192 = vmatprep.subr.mxu0 0.0
    %4193 = vmatpush2.msra.mxu0 0.0
    %4194 = vmatprep.subr.mxu0 0.0
    %4195 = vmatpush2.msra.mxu0 0.0
    %4196 = vmatprep.subr.mxu0 0.0
    %4197 = vmatpush2.msra.mxu0 0.0
    %4198 = vmatprep.mubr.f32.mxu0 0.0
    %4199 = vmatmul.mubr.f32.gmra.mxu0 %v4132
    %v4200 = vpop.f32.mrf.mxu0
    %v4201 = vadd.f32 0.0, %v4200
    %v4202 = vpop.f32.mrf.mxu0
    %4203 = vdwg.mxu0
    %v4205 = vsel %vm293, %v4201, 0
    %4207 = vmatprep.subr.mxu0 0.0
    %4208 = vmatpush1.msra.mxu0 0.0
    %4209 = vmatprep.subr.mxu0 0.0
    %4210 = vmatpush1.msra.mxu0 0.0
    %4211 = vmatprep.subr.mxu0 0.0
    %4212 = vmatpush1.msra.mxu0 0.0
    %4213 = vmatprep.subr.mxu0 0.0
    %4214 = vmatpush1.msra.mxu0 0.0
    %4215 = vmatprep.subr.mxu0 0.0
    %4216 = vmatpush1.msra.mxu0 0.0
    %4217 = vmatprep.subr.mxu0 0.0
    %4218 = vmatpush1.msra.mxu0 0.0
    %4219 = vmatprep.subr.mxu0 0.0
    %4220 = vmatpush1.msra.mxu0 0.0
    %4221 = vmatprep.subr.mxu0 0.0
    %4222 = vmatpush1.msra.mxu0 0.0
    %4223 = vmatprep.subr.mxu0 0.0
    %4224 = vmatpush1.msra.mxu0 0.0
    %4225 = vmatprep.subr.mxu0 0.0
    %4226 = vmatpush1.msra.mxu0 0.0
    %4227 = vmatprep.subr.mxu0 0.0
    %4228 = vmatpush1.msra.mxu0 0.0
    %4229 = vmatprep.subr.mxu0 0.0
    %4230 = vmatpush1.msra.mxu0 0.0
    %4231 = vmatprep.subr.mxu0 0.0
    %4232 = vmatpush1.msra.mxu0 0.0
    %4233 = vmatprep.subr.mxu0 0.0
    %4234 = vmatpush1.msra.mxu0 0.0
    %4235 = vmatprep.subr.mxu0 0.0
    %4236 = vmatpush1.msra.mxu0 %v3817
    %4237 = vmatprep.subr.mxu0 0.0
    %4238 = vmatpush1.msra.mxu0 %v3816
    %4239 = vmatprep.subr.mxu0 0.0
    %4240 = vmatpush2.msra.mxu0 0.0
    %4241 = vmatprep.subr.mxu0 0.0
    %4242 = vmatpush2.msra.mxu0 0.0
    %4243 = vmatprep.subr.mxu0 0.0
    %4244 = vmatpush2.msra.mxu0 0.0
    %4245 = vmatprep.subr.mxu0 0.0
    %4246 = vmatpush2.msra.mxu0 0.0
    %4247 = vmatprep.subr.mxu0 0.0
    %4248 = vmatpush2.msra.mxu0 0.0
    %4249 = vmatprep.subr.mxu0 0.0
    %4250 = vmatpush2.msra.mxu0 0.0
    %4251 = vmatprep.subr.mxu0 0.0
    %4252 = vmatpush2.msra.mxu0 0.0
    %4253 = vmatprep.subr.mxu0 0.0
    %4254 = vmatpush2.msra.mxu0 0.0
    %4255 = vmatprep.subr.mxu0 0.0
    %4256 = vmatpush2.msra.mxu0 0.0
    %4257 = vmatprep.subr.mxu0 0.0
    %4258 = vmatpush2.msra.mxu0 0.0
    %4259 = vmatprep.subr.mxu0 0.0
    %4260 = vmatpush2.msra.mxu0 0.0
    %4261 = vmatprep.subr.mxu0 0.0
    %4262 = vmatpush2.msra.mxu0 0.0
    %4263 = vmatprep.subr.mxu0 0.0
    %4264 = vmatpush2.msra.mxu0 0.0
    %4265 = vmatprep.subr.mxu0 0.0
    %4266 = vmatpush2.msra.mxu0 0.0
    %4267 = vmatprep.subr.mxu0 0.0
    %4268 = vmatpush2.msra.mxu0 0.0
    %4269 = vmatprep.subr.mxu0 0.0
    %4270 = vmatpush2.msra.mxu0 0.0
    %4271 = vmatprep.mubr.f32.mxu0 0.0
    %4272 = vmatmul.mubr.f32.gmra.mxu0 %v4205
    %v4273 = vpop.f32.mrf.mxu0
    %v4274 = vadd.f32 0.0, %v4273
    %v4275 = vpop.f32.mrf.mxu0
    %4276 = vdwg.mxu0
    %v4277 = vadd.f32 %v3574, %v4274
    %v4278 = vld [vmem:[%s8] sm:$0x1]
    %v4280 = vlaneseq
    %v4281 = vshrl.u32 %v4280, 7
    %v4282 = vsub.s32 0, %v4281
    %v4283 = vrot.slane %v4278, %v4282
    %v4285 = vadd.f32 %v4047, %v4283
    %4286 = vst.msk [vmem:[#allocation2] sm:$0xff] %vm45, %v4285
    %v4287 = vadd.f32 %v4277, %v4283
    %4288 = vst.msk [vmem:[#allocation2 + $0x8] sm:$0xff] %vm45, %v4287
    // Predicated region
    $region38: #{attention_global2_pallas.1} parent=1 // pred_check
      _
    $region39: #{attention_global2_pallas.1} parent=1 // pred_check_branch
      %4290 = sbr.rel (0) target = $region41
    $region40: #{attention_global2_pallas.1} parent=1 // pred_region
      %s4292 = ssub.s32 256, 256
      %4293 = vsyncadd [#allocation3], %s4292
      %s4294 = sshll.u32 [#allocation2], 4
      %s4295 = int_to_ptr.vmem [resolvable:$true] %s4294
      %4300 = dma.vmem_to_hbm [thread:$0]  %s4295, 256, %s9, [#allocation3], 128, 128, 8
    $region41: #{attention_global2_pallas.1} parent=1 // pred_fallthru
      _
    // Predicated region
    $region42: #{attention_global2_pallas.1} parent=1 // pred_check
      _
    $region43: #{attention_global2_pallas.1} parent=1 // pred_check_branch
      %4302 = sbr.rel (0) target = $region45
    $region44: #{attention_global2_pallas.1} parent=1 // pred_region
      %4303 = dma.done [#allocation3], 256
    $region45: #{attention_global2_pallas.1} parent=1 // pred_fallthru
      _
    %4304 = vsyncpa [#allocation3], 1

</llo_original>
